<compile_context>
chip_gen: v7x
topology: tpu7x:2x2x1
jax: 0.10.0
libtpu: 0.0.40
codegen_flags: <defaults>
</compile_context>

<pallas_src>
import functools

import jax
import jax.numpy as jnp
from jax.experimental import pallas as pl
from jax.experimental.pallas import tpu as pltpu

HID = 128  # hidden width fixed by the module


def _round_up(a, m):
    return ((a + m - 1) // m) * m


def encoder_kernel(xin_ref, cond_ref,
                   w_in_ref,
                   w1_ref, b1_ref,
                   w2a_ref, w2b_ref, b2_ref,
                   w3a_ref, w3b_ref, b3_ref,
                   w_head_ref, b_head_ref,
                   out_ref,
                   *, bb, t_pad, compute_dtype):
    f32 = jnp.float32

    # ---- first layer: fused fc_0(x) + fc_pos(p), kept in f32 (K=8, cheap) ----
    # xin_ref is already a flat 2-D (bb*Tp, feat_pad) tile: no input reshape.
    h = jnp.dot(xin_ref[...], w_in_ref[...], preferred_element_type=f32)
    h = h.reshape(bb, t_pad, HID) + cond_ref[...][:, None, :]   # + fc_c(c)+biases

    # T rows were EDGE-padded in the wrapper (duplicates of a valid row), so a
    # plain max is exact: no -inf masking / where-selects on the VPU path.
    def pool(v):
        return jnp.max(v, axis=1, keepdims=True)                # (bb, 1, 128)

    # ---- fc_1(relu(.)) ----
    a = jax.nn.relu(h).astype(compute_dtype).reshape(bb * t_pad, HID)
    h = (jnp.dot(a, w1_ref[...], preferred_element_type=f32)
         + b1_ref[...]).reshape(bb, t_pad, HID)

    # ---- block 2: cat with max-pool over T, fc_2 split into two matmuls ----
    pooled = pool(h)
    a = jax.nn.relu(h).astype(compute_dtype).reshape(bb * t_pad, HID)
    ap = jax.nn.relu(pooled).astype(compute_dtype).reshape(bb, HID)
    h = (jnp.dot(a, w2a_ref[...], preferred_element_type=f32).reshape(bb, t_pad, HID)
         + jnp.dot(ap, w2b_ref[...], preferred_element_type=f32)[:, None, :]
         + b2_ref[...])

    # ---- block 3 ----
    pooled = pool(h)
    a = jax.nn.relu(h).astype(compute_dtype).reshape(bb * t_pad, HID)
    ap = jax.nn.relu(pooled).astype(compute_dtype).reshape(bb, HID)
    h = (jnp.dot(a, w3a_ref[...], preferred_element_type=f32).reshape(bb, t_pad, HID)
         + jnp.dot(ap, w3b_ref[...], preferred_element_type=f32)[:, None, :]
         + b3_ref[...])

    # ---- final pool over T (no activation, as in PyTorch) + fused heads ----
    net = pool(h).reshape(bb, HID).astype(compute_dtype)        # (bb, 128)
    out_ref[...] = (jnp.dot(net, w_head_ref[...], preferred_element_type=f32)
                    + b_head_ref[...])                          # (bb, head_pad)


def _choose_block_b(B, t_pad, compute_dtype):
    # Target enough rows per grid step to fill the MXU M dimension and
    # amortize per-step overhead, but cap the f32 activation footprint
    # (~6 x rows x 128 x 4 B) so a step fits comfortably in v7x's 64 MiB VMEM,
    # and keep >= 2 grid steps when possible so both v7x TensorCores work.
    max_rows = 8192 if compute_dtype == jnp.bfloat16 else 4096
    bb_rows = max(8, (max_rows // t_pad) // 8 * 8)
    bb_grid = max(8, _round_up((B + 1) // 2, 8))
    return max(8, min(bb_rows, bb_grid))


def encoder_forward(p, x, c, P, *, block_b=None, compute_dtype=jnp.bfloat16):
    """p: (B,T,D) f32, x: (B,T) f32, c: (B,c_dim) f32 or None."""
    B, T, D = p.shape
    z_dim = P["wm"].shape[-1]
    f32 = jnp.float32

    t_mult = 16 if compute_dtype == jnp.bfloat16 else 8
    Tp = _round_up(T, t_mult)                       # T padded (edge rows)
    feat = 1 + D
    feat_pad = _round_up(feat, 8)                   # narrow sublane-aligned input

    bb = _round_up(block_b, 8) if block_b is not None else _choose_block_b(
        B, Tp, compute_dtype)
    Bp = _round_up(B, bb)                           # batch padded to block multiple
    grid = Bp // bb

    head = 2 * z_dim
    head_pad = _round_up(head, 128)                 # lane-dense fused head output

    # ---- pack [x, p]; EDGE-pad T (duplicate rows never change the max) ----
    xin = jnp.concatenate([x[..., None], p], axis=-1).astype(f32)      # (B,T,feat)
    if Tp != T:
        xin = jnp.pad(xin, ((0, 0), (0, Tp - T), (0, 0)), mode="edge")
    xin = jnp.pad(xin, ((0, Bp - B), (0, 0), (0, feat_pad - feat)))    # zeros ok
    xin = xin.reshape(Bp * Tp, feat_pad)            # pre-flattened 2-D input

    # packed first-layer weight (kept f32): row 0 = fc_0, rows 1..D = fc_pos
    w_in = jnp.zeros((feat_pad, HID), f32)
    w_in = w_in.at[0:1, :].set(P["w0"])
    w_in = w_in.at[1:1 + D, :].set(P["wpos"])

    # conditioning + all first-layer biases, precomputed once (f32)
    bias0 = P["b0"] + P["bpos"]
    if c is None:
        cond = jnp.broadcast_to(bias0[None, :], (B, HID)).astype(f32)
    else:
        cond = (c @ P["wc"] + P["bc"] + bias0).astype(f32)             # (B, 128)
    cond = jnp.pad(cond, ((0, Bp - B), (0, 0)))

    # fused (and lane-padded) mean/logstd head
    w_head = jnp.concatenate([P["wm"], P["wl"]], axis=1)               # (128, 2z)
    w_head = jnp.pad(w_head, ((0, 0), (0, head_pad - head))).astype(compute_dtype)
    b_head = jnp.pad(jnp.concatenate([P["bm"], P["bl"]]),
                     (0, head_pad - head)).reshape(1, head_pad).astype(f32)

    cast = lambda w: w.astype(compute_dtype)
    w1, w2a, w2b = cast(P["w1"]), cast(P["w2"][:HID]), cast(P["w2"][HID:])
    w3a, w3b = cast(P["w3"][:HID]), cast(P["w3"][HID:])
    b1, b2, b3 = (P["b1"].reshape(1, HID), P["b2"].reshape(1, HID),
                  P["b3"].reshape(1, HID))

    full = lambda a: pl.BlockSpec(a.shape, lambda b: (0,) * a.ndim)    # resident

    in_specs = [
        pl.BlockSpec((bb * Tp, feat_pad), lambda b: (b, 0)),   # packed, flat x/p
        pl.BlockSpec((bb, HID), lambda b: (b, 0)),             # precomputed cond
        full(w_in),
        full(w1), full(b1),
        full(w2a), full(w2b), full(b2),
        full(w3a), full(w3b), full(b3),
        full(w_head), full(b_head),
    ]
    out_specs = pl.BlockSpec((bb, head_pad), lambda b: (b, 0))
    out_shape = jax.ShapeDtypeStruct((Bp, head_pad), f32)

    # ---- VMEM budget (per grid step) -> explicit scoped-VMEM limit ----
    itemsize = jnp.dtype(compute_dtype).itemsize
    act_bytes = 6 * bb * Tp * HID * 4                          # live f32 activations
    io_bytes = 2 * (bb * Tp * feat_pad * 4 + bb * HID * 4 + bb * head_pad * 4)
    w_bytes = 2 * (feat_pad * HID * 4
                   + (5 * HID * HID + HID * head_pad) * itemsize
                   + 4 * HID * 4 + head_pad * 4)
    vmem_limit = int(min(56 * 2**20,
                         max(32 * 2**20, int(1.5 * (act_bytes + io_bytes + w_bytes)))))

    flops = (2 * Bp * Tp * feat_pad * HID
             + 3 * 2 * Bp * Tp * HID * HID
             + 2 * 2 * Bp * HID * HID
             + 2 * Bp * HID * head_pad)
    bytes_accessed = (Bp * Tp * feat_pad * 4 + Bp * HID * 4 + Bp * head_pad * 4
                      + feat_pad * HID * 4
                      + (5 * HID * HID + HID * head_pad) * itemsize
                      + (4 * HID + head_pad) * 4)
    cost = pl.CostEstimate(flops=int(flops), transcendentals=0,
                           bytes_accessed=int(bytes_accessed))

    out = pl.pallas_call(
        functools.partial(encoder_kernel, bb=bb, t_pad=Tp,
                          compute_dtype=compute_dtype),
        grid=(grid,),
        in_specs=in_specs,
        out_specs=out_specs,
        out_shape=out_shape,
        compiler_params=pltpu.CompilerParams(
            dimension_semantics=("parallel",),
            vmem_limit_bytes=vmem_limit),
        cost_estimate=cost,
    )(xin, cond, w_in, w1, b1, w2a, w2b, b2, w3a, w3b, b3, w_head, b_head)

    mean = out[:B, :z_dim]
    logstd = out[:B, z_dim:2 * z_dim]
    return mean, logstd


def ref_forward(p, x, c, P):
    """Pure-JAX reference mirroring the PyTorch forward (leaky=False)."""
    net = x[..., None] @ P["w0"] + P["b0"] + p @ P["wpos"] + P["bpos"]
    net = net + (c @ P["wc"] + P["bc"])[:, None, :]
    net = jax.nn.relu(net) @ P["w1"] + P["b1"]
    pooled = jnp.broadcast_to(jnp.max(net, axis=1, keepdims=True), net.shape)
    net = jnp.concatenate([net, pooled], axis=2)
    net = jax.nn.relu(net) @ P["w2"] + P["b2"]
    pooled = jnp.broadcast_to(jnp.max(net, axis=1, keepdims=True), net.shape)
    net = jnp.concatenate([net, pooled], axis=2)
    net = jax.nn.relu(net) @ P["w3"] + P["b3"]
    net = jnp.max(net, axis=1)
    return net @ P["wm"] + P["bm"], net @ P["wl"] + P["bl"]


def init_params(key, dim=3, c_dim=128, z_dim=128):
    # weights stored as (in, out); deterministic synthetic init.
    names_shapes = [
        ("w0", (1, HID)), ("b0", (HID,)),
        ("wpos", (dim, HID)), ("bpos", (HID,)),
        ("wc", (c_dim, HID)), ("bc", (HID,)),
        ("w1", (HID, HID)), ("b1", (HID,)),
        ("w2", (2 * HID, HID)), ("b2", (HID,)),
        ("w3", (2 * HID, HID)), ("b3", (HID,)),
        ("wm", (HID, z_dim)), ("bm", (z_dim,)),
        ("wl", (HID, z_dim)), ("bl", (z_dim,)),
    ]
    keys = jax.random.split(key, len(names_shapes))
    return {n: 0.05 * jax.random.normal(k, s, jnp.float32)
            for (n, s), k in zip(names_shapes, keys)}


if __name__ == "__main__":
    # B and T deliberately not multiples of the tile sizes: exercises batch
    # padding, T edge-padding, and a >=2-step grid (for v7x's two TCs).
    B, T, D, C_DIM, Z_DIM = 20, 12, 3, 128, 128
    key = jax.random.PRNGKey(0)
    kp, kx, kc, kw = jax.random.split(key, 4)
    p = jax.random.normal(kp, (B, T, D), jnp.float32)
    x = jax.random.normal(kx, (B, T), jnp.float32)
    c = jax.random.normal(kc, (B, C_DIM), jnp.float32)
    params = init_params(kw, dim=D, c_dim=C_DIM, z_dim=Z_DIM)

    mean_r, logstd_r = ref_forward(p, x, c, params)

    # exact-path check (f32 operands throughout)
    mean, logstd = jax.block_until_ready(
        encoder_forward(p, x, c, params, compute_dtype=jnp.float32))
    assert mean.shape == (B, Z_DIM) and logstd.shape == (B, Z_DIM)
    assert jnp.allclose(mean, mean_r, atol=1e-4, rtol=1e-4)
    assert jnp.allclose(logstd, logstd_r, atol=1e-4, rtol=1e-4)

    # default production path: bf16 matmuls (f32 first layer + accumulation)
    mean_b, logstd_b = jax.block_until_ready(
        encoder_forward(p, x, c, params))
    assert jnp.allclose(mean_b, mean_r, atol=3e-2, rtol=3e-2)
    assert jnp.allclose(logstd_b, logstd_r, atol=3e-2, rtol=3e-2)

    print("KERNEL_OK")
</pallas_src>

<mosaic_0001>
module attributes {stable_mosaic.version = 11 : i64} {
  func.func @encoder_kernel(%arg0: i32, %arg1: memref<256x8xf32, #tpu.memory_space<vmem>>, %arg2: memref<16x128xf32, #tpu.memory_space<vmem>>, %arg3: memref<8x128xf32, #tpu.memory_space<vmem>>, %arg4: memref<128x128xf32, #tpu.memory_space<vmem>>, %arg5: memref<1x128xf32, #tpu.memory_space<vmem>>, %arg6: memref<128x128xf32, #tpu.memory_space<vmem>>, %arg7: memref<128x128xf32, #tpu.memory_space<vmem>>, %arg8: memref<1x128xf32, #tpu.memory_space<vmem>>, %arg9: memref<128x128xf32, #tpu.memory_space<vmem>>, %arg10: memref<128x128xf32, #tpu.memory_space<vmem>>, %arg11: memref<1x128xf32, #tpu.memory_space<vmem>>, %arg12: memref<128x256xf32, #tpu.memory_space<vmem>>, %arg13: memref<1x256xf32, #tpu.memory_space<vmem>>, %arg14: memref<16x256xf32, #tpu.memory_space<vmem>>) attributes {dimension_semantics = [#tpu.dimension_semantics<parallel>], iteration_bounds = array<i64: 2>, scalar_prefetch = 0 : i64, scratch_operands = 0 : i64, tpu.core_type = #tpu.core_type<tc>, window_params = [{transform_indices = @transform_0, window_bounds = array<i64: 256, 8>}, {transform_indices = @transform_1, window_bounds = array<i64: 16, 128>}, {pipeline_mode = #tpu.pipeline_mode<synchronous>, transform_indices = @transform_2, window_bounds = array<i64: 8, 128>}, {pipeline_mode = #tpu.pipeline_mode<synchronous>, transform_indices = @transform_3, window_bounds = array<i64: 128, 128>}, {pipeline_mode = #tpu.pipeline_mode<synchronous>, transform_indices = @transform_4, window_bounds = array<i64: 1, 128>}, {pipeline_mode = #tpu.pipeline_mode<synchronous>, transform_indices = @transform_5, window_bounds = array<i64: 128, 128>}, {pipeline_mode = #tpu.pipeline_mode<synchronous>, transform_indices = @transform_6, window_bounds = array<i64: 128, 128>}, {pipeline_mode = #tpu.pipeline_mode<synchronous>, transform_indices = @transform_7, window_bounds = array<i64: 1, 128>}, {pipeline_mode = #tpu.pipeline_mode<synchronous>, transform_indices = @transform_8, window_bounds = array<i64: 128, 128>}, {pipeline_mode = #tpu.pipeline_mode<synchronous>, transform_indices = @transform_9, window_bounds = array<i64: 128, 128>}, {pipeline_mode = #tpu.pipeline_mode<synchronous>, transform_indices = @transform_10, window_bounds = array<i64: 1, 128>}, {pipeline_mode = #tpu.pipeline_mode<synchronous>, transform_indices = @transform_11, window_bounds = array<i64: 128, 256>}, {pipeline_mode = #tpu.pipeline_mode<synchronous>, transform_indices = @transform_12, window_bounds = array<i64: 1, 256>}, {transform_indices = @transform_13, window_bounds = array<i64: 16, 256>}]} {
    %c0 = arith.constant 0 : index
    %c0_0 = arith.constant 0 : index
    %0 = vector.load %arg1[%c0, %c0_0] : memref<256x8xf32, #tpu.memory_space<vmem>>, vector<256x8xf32>
    %c0_1 = arith.constant 0 : index
    %c0_2 = arith.constant 0 : index
    %1 = vector.load %arg3[%c0_1, %c0_2] : memref<8x128xf32, #tpu.memory_space<vmem>>, vector<8x128xf32>
    %cst = arith.constant dense<0.000000e+00> : vector<256x128xf32>
    %2 = tpu.matmul %0, %1, %cst {dimension_numbers = #tpu.dot_dimension_numbers<[1], [0], [0], [1], [0, 0, 1, 1], [], []>} : vector<256x8xf32>, vector<8x128xf32>, vector<256x128xf32> -> vector<256x128xf32>
    %3 = vector.shape_cast %2 : vector<256x128xf32> to vector<16x16x128xf32>
    %c0_3 = arith.constant 0 : index
    %c0_4 = arith.constant 0 : index
    %4 = vector.load %arg2[%c0_3, %c0_4] : memref<16x128xf32, #tpu.memory_space<vmem>>, vector<16x128xf32>
    %5 = vector.shape_cast %4 : vector<16x128xf32> to vector<16x1x128xf32>
    %6 = vector.broadcast %5 : vector<16x1x128xf32> to vector<16x16x128xf32>
    %7 = arith.addf %3, %6 : vector<16x16x128xf32>
    %cst_5 = arith.constant 0.000000e+00 : f32
    %8 = vector.broadcast %cst_5 : f32 to vector<16x16x128xf32>
    %9 = arith.maximumf %7, %8 : vector<16x16x128xf32>
    %10 = vector.shape_cast %9 : vector<16x16x128xf32> to vector<256x128xf32>
    %c0_6 = arith.constant 0 : index
    %c0_7 = arith.constant 0 : index
    %11 = vector.load %arg4[%c0_6, %c0_7] : memref<128x128xf32, #tpu.memory_space<vmem>>, vector<128x128xf32>
    %cst_8 = arith.constant dense<0.000000e+00> : vector<256x128xf32>
    %12 = tpu.matmul %10, %11, %cst_8 {dimension_numbers = #tpu.dot_dimension_numbers<[1], [0], [0], [1], [0, 0, 1, 1], [], []>} : vector<256x128xf32>, vector<128x128xf32>, vector<256x128xf32> -> vector<256x128xf32>
    %c0_9 = arith.constant 0 : index
    %c0_10 = arith.constant 0 : index
    %13 = vector.load %arg5[%c0_9, %c0_10] : memref<1x128xf32, #tpu.memory_space<vmem>>, vector<1x128xf32>
    %14 = vector.broadcast %13 : vector<1x128xf32> to vector<256x128xf32>
    %15 = arith.addf %12, %14 : vector<256x128xf32>
    %16 = vector.shape_cast %15 : vector<256x128xf32> to vector<16x16x128xf32>
    %cst_11 = arith.constant dense<0xFF800000> : vector<16x128xf32>
    %17 = vector.multi_reduction <maximumf>, %16, %cst_11 [1] : vector<16x16x128xf32> to vector<16x128xf32>
    %18 = vector.shape_cast %17 : vector<16x128xf32> to vector<16x1x128xf32>
    %cst_12 = arith.constant 0.000000e+00 : f32
    %19 = vector.broadcast %cst_12 : f32 to vector<16x16x128xf32>
    %20 = arith.maximumf %16, %19 : vector<16x16x128xf32>
    %21 = vector.shape_cast %20 : vector<16x16x128xf32> to vector<256x128xf32>
    %cst_13 = arith.constant 0.000000e+00 : f32
    %22 = vector.broadcast %cst_13 : f32 to vector<16x1x128xf32>
    %23 = arith.maximumf %18, %22 : vector<16x1x128xf32>
    %24 = vector.shape_cast %23 : vector<16x1x128xf32> to vector<16x128xf32>
    %c0_14 = arith.constant 0 : index
    %c0_15 = arith.constant 0 : index
    %25 = vector.load %arg6[%c0_14, %c0_15] : memref<128x128xf32, #tpu.memory_space<vmem>>, vector<128x128xf32>
    %cst_16 = arith.constant dense<0.000000e+00> : vector<256x128xf32>
    %26 = tpu.matmul %21, %25, %cst_16 {dimension_numbers = #tpu.dot_dimension_numbers<[1], [0], [0], [1], [0, 0, 1, 1], [], []>} : vector<256x128xf32>, vector<128x128xf32>, vector<256x128xf32> -> vector<256x128xf32>
    %27 = vector.shape_cast %26 : vector<256x128xf32> to vector<16x16x128xf32>
    %c0_17 = arith.constant 0 : index
    %c0_18 = arith.constant 0 : index
    %28 = vector.load %arg7[%c0_17, %c0_18] : memref<128x128xf32, #tpu.memory_space<vmem>>, vector<128x128xf32>
    %cst_19 = arith.constant dense<0.000000e+00> : vector<16x128xf32>
    %29 = tpu.matmul %24, %28, %cst_19 {dimension_numbers = #tpu.dot_dimension_numbers<[1], [0], [0], [1], [0, 0, 1, 1], [], []>} : vector<16x128xf32>, vector<128x128xf32>, vector<16x128xf32> -> vector<16x128xf32>
    %30 = vector.shape_cast %29 : vector<16x128xf32> to vector<16x1x128xf32>
    %31 = vector.broadcast %30 : vector<16x1x128xf32> to vector<16x16x128xf32>
    %32 = arith.addf %27, %31 : vector<16x16x128xf32>
    %c0_20 = arith.constant 0 : index
    %c0_21 = arith.constant 0 : index
    %33 = vector.load %arg8[%c0_20, %c0_21] : memref<1x128xf32, #tpu.memory_space<vmem>>, vector<1x128xf32>
    %34 = vector.shape_cast %33 : vector<1x128xf32> to vector<1x1x128xf32>
    %35 = vector.broadcast %34 : vector<1x1x128xf32> to vector<16x16x128xf32>
    %36 = arith.addf %32, %35 : vector<16x16x128xf32>
    %cst_22 = arith.constant dense<0xFF800000> : vector<16x128xf32>
    %37 = vector.multi_reduction <maximumf>, %36, %cst_22 [1] : vector<16x16x128xf32> to vector<16x128xf32>
    %38 = vector.shape_cast %37 : vector<16x128xf32> to vector<16x1x128xf32>
    %cst_23 = arith.constant 0.000000e+00 : f32
    %39 = vector.broadcast %cst_23 : f32 to vector<16x16x128xf32>
    %40 = arith.maximumf %36, %39 : vector<16x16x128xf32>
    %41 = vector.shape_cast %40 : vector<16x16x128xf32> to vector<256x128xf32>
    %cst_24 = arith.constant 0.000000e+00 : f32
    %42 = vector.broadcast %cst_24 : f32 to vector<16x1x128xf32>
    %43 = arith.maximumf %38, %42 : vector<16x1x128xf32>
    %44 = vector.shape_cast %43 : vector<16x1x128xf32> to vector<16x128xf32>
    %c0_25 = arith.constant 0 : index
    %c0_26 = arith.constant 0 : index
    %45 = vector.load %arg9[%c0_25, %c0_26] : memref<128x128xf32, #tpu.memory_space<vmem>>, vector<128x128xf32>
    %cst_27 = arith.constant dense<0.000000e+00> : vector<256x128xf32>
    %46 = tpu.matmul %41, %45, %cst_27 {dimension_numbers = #tpu.dot_dimension_numbers<[1], [0], [0], [1], [0, 0, 1, 1], [], []>} : vector<256x128xf32>, vector<128x128xf32>, vector<256x128xf32> -> vector<256x128xf32>
    %47 = vector.shape_cast %46 : vector<256x128xf32> to vector<16x16x128xf32>
    %c0_28 = arith.constant 0 : index
    %c0_29 = arith.constant 0 : index
    %48 = vector.load %arg10[%c0_28, %c0_29] : memref<128x128xf32, #tpu.memory_space<vmem>>, vector<128x128xf32>
    %cst_30 = arith.constant dense<0.000000e+00> : vector<16x128xf32>
    %49 = tpu.matmul %44, %48, %cst_30 {dimension_numbers = #tpu.dot_dimension_numbers<[1], [0], [0], [1], [0, 0, 1, 1], [], []>} : vector<16x128xf32>, vector<128x128xf32>, vector<16x128xf32> -> vector<16x128xf32>
    %50 = vector.shape_cast %49 : vector<16x128xf32> to vector<16x1x128xf32>
    %51 = vector.broadcast %50 : vector<16x1x128xf32> to vector<16x16x128xf32>
    %52 = arith.addf %47, %51 : vector<16x16x128xf32>
    %c0_31 = arith.constant 0 : index
    %c0_32 = arith.constant 0 : index
    %53 = vector.load %arg11[%c0_31, %c0_32] : memref<1x128xf32, #tpu.memory_space<vmem>>, vector<1x128xf32>
    %54 = vector.shape_cast %53 : vector<1x128xf32> to vector<1x1x128xf32>
    %55 = vector.broadcast %54 : vector<1x1x128xf32> to vector<16x16x128xf32>
    %56 = arith.addf %52, %55 : vector<16x16x128xf32>
    %cst_33 = arith.constant dense<0xFF800000> : vector<16x128xf32>
    %57 = vector.multi_reduction <maximumf>, %56, %cst_33 [1] : vector<16x16x128xf32> to vector<16x128xf32>
    %58 = vector.shape_cast %57 : vector<16x128xf32> to vector<16x1x128xf32>
    %59 = vector.shape_cast %58 : vector<16x1x128xf32> to vector<16x128xf32>
    %c0_34 = arith.constant 0 : index
    %c0_35 = arith.constant 0 : index
    %60 = vector.load %arg12[%c0_34, %c0_35] : memref<128x256xf32, #tpu.memory_space<vmem>>, vector<128x256xf32>
    %cst_36 = arith.constant dense<0.000000e+00> : vector<16x256xf32>
    %61 = tpu.matmul %59, %60, %cst_36 {dimension_numbers = #tpu.dot_dimension_numbers<[1], [0], [0], [1], [0, 0, 1, 1], [], []>} : vector<16x128xf32>, vector<128x256xf32>, vector<16x256xf32> -> vector<16x256xf32>
    %c0_37 = arith.constant 0 : index
    %c0_38 = arith.constant 0 : index
    %62 = vector.load %arg13[%c0_37, %c0_38] : memref<1x256xf32, #tpu.memory_space<vmem>>, vector<1x256xf32>
    %63 = vector.broadcast %62 : vector<1x256xf32> to vector<16x256xf32>
    %64 = arith.addf %61, %63 : vector<16x256xf32>
    %c0_39 = arith.constant 0 : index
    %c0_40 = arith.constant 0 : index
    %65 = vector.load %arg14[%c0_39, %c0_40] : memref<16x256xf32, #tpu.memory_space<vmem>>, vector<16x256xf32>
    tpu.vector_store %arg14[%c0_39, %c0_40], %64 {strides = array<i32>} : memref<16x256xf32, #tpu.memory_space<vmem>>, vector<16x256xf32>,
    return
  }
  func.func @transform_0(%arg0: i32) -> (i32, i32) {
    %c0_i32 = arith.constant 0 : i32
    %c0_i32_0 = arith.constant 0 : i32
    return %arg0, %c0_i32 : i32, i32
  }
  func.func @transform_1(%arg0: i32) -> (i32, i32) {
    %c0_i32 = arith.constant 0 : i32
    %c0_i32_0 = arith.constant 0 : i32
    return %arg0, %c0_i32 : i32, i32
  }
  func.func @transform_2(%arg0: i32) -> (i32, i32) {
    %c0_i32 = arith.constant 0 : i32
    %c0_i32_0 = arith.constant 0 : i32
    %c0_i32_1 = arith.constant 0 : i32
    return %c0_i32, %c0_i32_0 : i32, i32
  }
  func.func @transform_3(%arg0: i32) -> (i32, i32) {
    %c0_i32 = arith.constant 0 : i32
    %c0_i32_0 = arith.constant 0 : i32
    %c0_i32_1 = arith.constant 0 : i32
    return %c0_i32, %c0_i32_0 : i32, i32
  }
  func.func @transform_4(%arg0: i32) -> (i32, i32) {
    %c0_i32 = arith.constant 0 : i32
    %c0_i32_0 = arith.constant 0 : i32
    %c0_i32_1 = arith.constant 0 : i32
    return %c0_i32, %c0_i32_0 : i32, i32
  }
  func.func @transform_5(%arg0: i32) -> (i32, i32) {
    %c0_i32 = arith.constant 0 : i32
    %c0_i32_0 = arith.constant 0 : i32
    %c0_i32_1 = arith.constant 0 : i32
    return %c0_i32, %c0_i32_0 : i32, i32
  }
  func.func @transform_6(%arg0: i32) -> (i32, i32) {
    %c0_i32 = arith.constant 0 : i32
    %c0_i32_0 = arith.constant 0 : i32
    %c0_i32_1 = arith.constant 0 : i32
    return %c0_i32, %c0_i32_0 : i32, i32
  }
  func.func @transform_7(%arg0: i32) -> (i32, i32) {
    %c0_i32 = arith.constant 0 : i32
    %c0_i32_0 = arith.constant 0 : i32
    %c0_i32_1 = arith.constant 0 : i32
    return %c0_i32, %c0_i32_0 : i32, i32
  }
  func.func @transform_8(%arg0: i32) -> (i32, i32) {
    %c0_i32 = arith.constant 0 : i32
    %c0_i32_0 = arith.constant 0 : i32
    %c0_i32_1 = arith.constant 0 : i32
    return %c0_i32, %c0_i32_0 : i32, i32
  }
  func.func @transform_9(%arg0: i32) -> (i32, i32) {
    %c0_i32 = arith.constant 0 : i32
    %c0_i32_0 = arith.constant 0 : i32
    %c0_i32_1 = arith.constant 0 : i32
    return %c0_i32, %c0_i32_0 : i32, i32
  }
  func.func @transform_10(%arg0: i32) -> (i32, i32) {
    %c0_i32 = arith.constant 0 : i32
    %c0_i32_0 = arith.constant 0 : i32
    %c0_i32_1 = arith.constant 0 : i32
    return %c0_i32, %c0_i32_0 : i32, i32
  }
  func.func @transform_11(%arg0: i32) -> (i32, i32) {
    %c0_i32 = arith.constant 0 : i32
    %c0_i32_0 = arith.constant 0 : i32
    %c0_i32_1 = arith.constant 0 : i32
    return %c0_i32, %c0_i32_0 : i32, i32
  }
  func.func @transform_12(%arg0: i32) -> (i32, i32) {
    %c0_i32 = arith.constant 0 : i32
    %c0_i32_0 = arith.constant 0 : i32
    %c0_i32_1 = arith.constant 0 : i32
    return %c0_i32, %c0_i32_0 : i32, i32
  }
  func.func @transform_13(%arg0: i32) -> (i32, i32) {
    %c0_i32 = arith.constant 0 : i32
    %c0_i32_0 = arith.constant 0 : i32
    return %arg0, %c0_i32 : i32, i32
  }
}

</mosaic_0001>

<llo_original>
// kernel: tpu_custom_call.1
$region0: #{tpu_custom_call.1}
  #allocation0 [shape = 'u32[]', space=smem, size = 0x4, offset = 0x4, fixed_abs, tag = 'smem constant byte address 0x4 - core index']
  #allocation1 [shape = 'u32[144,128]{1,0:T(1,128)}', space=vmem, size = 0x12000, scoped, tag = 'internal scratch']
  %s0 = inlined_call_operand.vmem [shape: f32[512,8], index: 0, kind: input, shape index: {}]
  %s1 = inlined_call_operand.vmem [shape: f32[32,128], index: 1, kind: input, shape index: {}]
  %s2 = inlined_call_operand.hbm [shape: f32[8,128], index: 2, kind: input, shape index: {}]
  %s3 = inlined_call_operand.vmem [shape: f32[128,128], index: 3, kind: input, shape index: {}]
  %s4 = inlined_call_operand.vmem [shape: f32[1,128], index: 4, kind: input, shape index: {}]
  %s5 = inlined_call_operand.vmem [shape: f32[128,128], index: 5, kind: input, shape index: {}]
  %s6 = inlined_call_operand.hbm [shape: f32[128,128], index: 6, kind: input, shape index: {}]
  %s7 = inlined_call_operand.vmem [shape: f32[1,128], index: 7, kind: input, shape index: {}]
  %s8 = inlined_call_operand.hbm [shape: f32[128,128], index: 8, kind: input, shape index: {}]
  %s9 = inlined_call_operand.hbm [shape: f32[128,128], index: 9, kind: input, shape index: {}]
  %s10 = inlined_call_operand.vmem [shape: f32[1,128], index: 10, kind: input, shape index: {}]
  %s11 = inlined_call_operand.vmem [shape: f32[128,256], index: 11, kind: input, shape index: {}]
  %s12 = inlined_call_operand.vmem [shape: f32[1,256], index: 12, kind: input, shape index: {}]
  %s13 = inlined_call_operand.hbm [shape: f32[32,256], index: 13, kind: output, shape index: {}]
  %s14 = sld [smem:[#allocation0]]
  $region101: #{tpu_custom_call.1} parent=0
    _
  %s16 = ssub.s32 1, %s14
  %s17 = scalar_select 0, %s16, %s14
  $region1: #{tpu_custom_call.1} parent=0
    #allocation2 [shape = 'u8[4096]{0}', space=vmem, size = 0x1000, scoped, tag = 'input window, operand 2, single buffered']
    #allocation3 [shape = 's32[2]{0}', space=sflag, size = 0x8, scoped, tag = 'scoped memory for tpu_custom_call.1']
    #allocation4 [shape = 's32[2]{0}', space=sflag, size = 0x8, scoped, tag = 'scoped memory for tpu_custom_call.1']
    #allocation5 [shape = 'u8[65536]{0}', space=vmem, size = 0x10000, scoped, tag = 'input window, operand 6, single buffered']
    #allocation6 [shape = 's32[1]{0}', space=sflag, size = 0x4, scoped, tag = 'scoped memory for tpu_custom_call.1']
    #allocation7 [shape = 'u8[65536]{0}', space=vmem, size = 0x10000, scoped, tag = 'input window, operand 8, single buffered']
    #allocation8 [shape = 'u8[65536]{0}', space=vmem, size = 0x10000, scoped, tag = 'input window, operand 9, single buffered']
    #allocation9 [shape = 's32[1]{0}', space=sflag, size = 0x4, scoped, tag = 'scoped memory for tpu_custom_call.1']
    #allocation10 [shape = 'u8[32768]{0}', space=vmem, size = 0x8000, scoped, tag = 'output window, operand 0']
    %18 = vsyncpa [#allocation3], 0
    %19 = vsyncpa [#allocation6], 0
    %20 = vsyncpa [#allocation9], 0
    %21 = vsyncpa [#allocation4], 0
    %s22 = scalar_lea.sflag [#allocation4], 1
    %23 = vsyncpa %s22, 0
    loop: start=0, step=1, limit=4
    $region2: #{tpu_custom_call.1} parent=1 // loop_pre_header
      _
    $region3: #{tpu_custom_call.1} parent=1 // loop_header
      %s25 = sphi 0, %s29
      %p26 = scmp.ge.s32.totalorder %s25, 4
      %s35 = sphi 0, %s37
      %s38 = sphi 0, %s35
      %s39 = sphi 0, %s38
      %s55 = sphi 0, %s39
      %s61 = sphi 0, %s63
      %s64 = sphi 0, %s61
      %s65 = sphi 0, %s64
      %s81 = sphi 0, %s65
      %s85 = sphi 0, %s85
      %s87 = sphi 0, %s85
      %s88 = sphi 0, %s87
      %s102 = sphi 0, %s88
      %s106 = sphi 0, %s106
      %s108 = sphi 0, %s106
      %s109 = sphi 0, %s108
      %s123 = sphi 0, %s109
      %s127 = sphi 0, %s127
      %s129 = sphi 0, %s127
      %s130 = sphi 0, %s129
      %s144 = sphi 0, %s130
      %s148 = sphi 0, %s148
      %s150 = sphi 0, %s148
      %s151 = sphi 0, %s150
      %s165 = sphi 0, %s151
      %s169 = sphi 0, %s169
      %s171 = sphi 0, %s169
      %s172 = sphi 0, %s171
      %s186 = sphi 0, %s172
      %s190 = sphi 0, %s190
      %s192 = sphi 0, %s190
      %s193 = sphi 0, %s192
      %s207 = sphi 0, %s193
      %s211 = sphi 0, %s211
      %s213 = sphi 0, %s211
      %s214 = sphi 0, %s213
      %s228 = sphi 0, %s214
      %s232 = sphi 0, %s232
      %s234 = sphi 0, %s232
      %s235 = sphi 0, %s234
      %s249 = sphi 0, %s235
      %s253 = sphi 0, %s253
      %s255 = sphi 0, %s253
      %s256 = sphi 0, %s255
      %s270 = sphi 0, %s256
      %s274 = sphi 0, %s274
      %s276 = sphi 0, %s274
      %s277 = sphi 0, %s276
      %s291 = sphi 0, %s277
      %s295 = sphi 0, %s295
      %s297 = sphi 0, %s295
      %s298 = sphi 0, %s297
      %s312 = sphi 0, %s298
      %s318 = sphi 0, %s320
      %s321 = sphi 0, %s318
      %s322 = sphi 0, %s321
      %s338 = sphi 0, %s322
    $region4: #{tpu_custom_call.1} parent=1 // loop_header_branch
      %28 = sbr.rel (%p26) target = $region8
    $region5: #{tpu_custom_call.1} parent=1 // loop_body
      %s30 = ssub.s32 %s25, 1
      %s31 = ssub.s32 %s25, 2
      %s32 = sadd.s32 %s25, 1
      %s33 = ssub.s32 %s25, %s32
      %p34 = scmp.eq.s32.totalorder %s33, 0
      %s36 = sadd.s32 %s35, 1
      %s37 = scalar_select %p34, %s35, %s36
      %p40 = pneg %p34
      %p41 = scmp.eq.s32.totalorder %s25, 1
      %p42 = por %p40, %p41
      %p43 = scmp.ne.s32.totalorder %s35, %s38
      %p44 = scmp.eq.s32.totalorder %s25, 0
      %p45 = por %p43, %p44
      %p46 = scmp.ne.s32.totalorder %s35, %s38
      %p47 = scmp.eq.s32.totalorder %s30, 1
      %p48 = por %p46, %p47
      %p49 = scmp.ne.s32.totalorder %s38, %s39
      %p50 = scmp.eq.s32.totalorder %s30, 0
      %p51 = por %p49, %p50
      %p52 = scmp.ne.s32.totalorder %s38, %s39
      %p53 = scmp.eq.s32.totalorder %s31, 1
      %p54 = por %p52, %p53
      %p56 = scmp.ne.s32.totalorder %s39, %s55
      %p57 = scmp.eq.s32.totalorder %s31, 0
      %p58 = por %p56, %p57
      %s59 = ssub.s32 %s25, %s32
      %p60 = scmp.eq.s32.totalorder %s59, 0
      %s62 = sadd.s32 %s61, 1
      %s63 = scalar_select %p60, %s61, %s62
      %p66 = pneg %p60
      %p67 = scmp.eq.s32.totalorder %s25, 1
      %p68 = por %p66, %p67
      %p69 = scmp.ne.s32.totalorder %s61, %s64
      %p70 = scmp.eq.s32.totalorder %s25, 0
      %p71 = por %p69, %p70
      %p72 = scmp.ne.s32.totalorder %s61, %s64
      %p73 = scmp.eq.s32.totalorder %s30, 1
      %p74 = por %p72, %p73
      %p75 = scmp.ne.s32.totalorder %s64, %s65
      %p76 = scmp.eq.s32.totalorder %s30, 0
      %p77 = por %p75, %p76
      %p78 = scmp.ne.s32.totalorder %s64, %s65
      %p79 = scmp.eq.s32.totalorder %s31, 1
      %p80 = por %p78, %p79
      %p82 = scmp.ne.s32.totalorder %s65, %s81
      %p83 = scmp.eq.s32.totalorder %s31, 0
      %p84 = por %p82, %p83
      %s86 = sadd.s32 %s85, 1
      %p89 = scmp.eq.s32.totalorder %s25, 1
      %p90 = scmp.ne.s32.totalorder %s85, %s87
      %p91 = scmp.eq.s32.totalorder %s25, 0
      %p92 = por %p90, %p91
      %p93 = scmp.ne.s32.totalorder %s85, %s87
      %p94 = scmp.eq.s32.totalorder %s30, 1
      %p95 = por %p93, %p94
      %p96 = scmp.ne.s32.totalorder %s87, %s88
      %p97 = scmp.eq.s32.totalorder %s30, 0
      %p98 = por %p96, %p97
      %p99 = scmp.ne.s32.totalorder %s87, %s88
      %p100 = scmp.eq.s32.totalorder %s31, 1
      %p101 = por %p99, %p100
      %p103 = scmp.ne.s32.totalorder %s88, %s102
      %p104 = scmp.eq.s32.totalorder %s31, 0
      %p105 = por %p103, %p104
      %s107 = sadd.s32 %s106, 1
      %p110 = scmp.eq.s32.totalorder %s25, 1
      %p111 = scmp.ne.s32.totalorder %s106, %s108
      %p112 = scmp.eq.s32.totalorder %s25, 0
      %p113 = por %p111, %p112
      %p114 = scmp.ne.s32.totalorder %s106, %s108
      %p115 = scmp.eq.s32.totalorder %s30, 1
      %p116 = por %p114, %p115
      %p117 = scmp.ne.s32.totalorder %s108, %s109
      %p118 = scmp.eq.s32.totalorder %s30, 0
      %p119 = por %p117, %p118
      %p120 = scmp.ne.s32.totalorder %s108, %s109
      %p121 = scmp.eq.s32.totalorder %s31, 1
      %p122 = por %p120, %p121
      %p124 = scmp.ne.s32.totalorder %s109, %s123
      %p125 = scmp.eq.s32.totalorder %s31, 0
      %p126 = por %p124, %p125
      %s128 = sadd.s32 %s127, 1
      %p131 = scmp.eq.s32.totalorder %s25, 1
      %p132 = scmp.ne.s32.totalorder %s127, %s129
      %p133 = scmp.eq.s32.totalorder %s25, 0
      %p134 = por %p132, %p133
      %p135 = scmp.ne.s32.totalorder %s127, %s129
      %p136 = scmp.eq.s32.totalorder %s30, 1
      %p137 = por %p135, %p136
      %p138 = scmp.ne.s32.totalorder %s129, %s130
      %p139 = scmp.eq.s32.totalorder %s30, 0
      %p140 = por %p138, %p139
      %p141 = scmp.ne.s32.totalorder %s129, %s130
      %p142 = scmp.eq.s32.totalorder %s31, 1
      %p143 = por %p141, %p142
      %p145 = scmp.ne.s32.totalorder %s130, %s144
      %p146 = scmp.eq.s32.totalorder %s31, 0
      %p147 = por %p145, %p146
      %s149 = sadd.s32 %s148, 1
      %p152 = scmp.eq.s32.totalorder %s25, 1
      %p153 = scmp.ne.s32.totalorder %s148, %s150
      %p154 = scmp.eq.s32.totalorder %s25, 0
      %p155 = por %p153, %p154
      %p156 = scmp.ne.s32.totalorder %s148, %s150
      %p157 = scmp.eq.s32.totalorder %s30, 1
      %p158 = por %p156, %p157
      %p159 = scmp.ne.s32.totalorder %s150, %s151
      %p160 = scmp.eq.s32.totalorder %s30, 0
      %p161 = por %p159, %p160
      %p162 = scmp.ne.s32.totalorder %s150, %s151
      %p163 = scmp.eq.s32.totalorder %s31, 1
      %p164 = por %p162, %p163
      %p166 = scmp.ne.s32.totalorder %s151, %s165
      %p167 = scmp.eq.s32.totalorder %s31, 0
      %p168 = por %p166, %p167
      %s170 = sadd.s32 %s169, 1
      %p173 = scmp.eq.s32.totalorder %s25, 1
      %p174 = scmp.ne.s32.totalorder %s169, %s171
      %p175 = scmp.eq.s32.totalorder %s25, 0
      %p176 = por %p174, %p175
      %p177 = scmp.ne.s32.totalorder %s169, %s171
      %p178 = scmp.eq.s32.totalorder %s30, 1
      %p179 = por %p177, %p178
      %p180 = scmp.ne.s32.totalorder %s171, %s172
      %p181 = scmp.eq.s32.totalorder %s30, 0
      %p182 = por %p180, %p181
      %p183 = scmp.ne.s32.totalorder %s171, %s172
      %p184 = scmp.eq.s32.totalorder %s31, 1
      %p185 = por %p183, %p184
      %p187 = scmp.ne.s32.totalorder %s172, %s186
      %p188 = scmp.eq.s32.totalorder %s31, 0
      %p189 = por %p187, %p188
      %s191 = sadd.s32 %s190, 1
      %p194 = scmp.eq.s32.totalorder %s25, 1
      %p195 = scmp.ne.s32.totalorder %s190, %s192
      %p196 = scmp.eq.s32.totalorder %s25, 0
      %p197 = por %p195, %p196
      %p198 = scmp.ne.s32.totalorder %s190, %s192
      %p199 = scmp.eq.s32.totalorder %s30, 1
      %p200 = por %p198, %p199
      %p201 = scmp.ne.s32.totalorder %s192, %s193
      %p202 = scmp.eq.s32.totalorder %s30, 0
      %p203 = por %p201, %p202
      %p204 = scmp.ne.s32.totalorder %s192, %s193
      %p205 = scmp.eq.s32.totalorder %s31, 1
      %p206 = por %p204, %p205
      %p208 = scmp.ne.s32.totalorder %s193, %s207
      %p209 = scmp.eq.s32.totalorder %s31, 0
      %p210 = por %p208, %p209
      %s212 = sadd.s32 %s211, 1
      %p215 = scmp.eq.s32.totalorder %s25, 1
      %p216 = scmp.ne.s32.totalorder %s211, %s213
      %p217 = scmp.eq.s32.totalorder %s25, 0
      %p218 = por %p216, %p217
      %p219 = scmp.ne.s32.totalorder %s211, %s213
      %p220 = scmp.eq.s32.totalorder %s30, 1
      %p221 = por %p219, %p220
      %p222 = scmp.ne.s32.totalorder %s213, %s214
      %p223 = scmp.eq.s32.totalorder %s30, 0
      %p224 = por %p222, %p223
      %p225 = scmp.ne.s32.totalorder %s213, %s214
      %p226 = scmp.eq.s32.totalorder %s31, 1
      %p227 = por %p225, %p226
      %p229 = scmp.ne.s32.totalorder %s214, %s228
      %p230 = scmp.eq.s32.totalorder %s31, 0
      %p231 = por %p229, %p230
      %s233 = sadd.s32 %s232, 1
      %p236 = scmp.eq.s32.totalorder %s25, 1
      %p237 = scmp.ne.s32.totalorder %s232, %s234
      %p238 = scmp.eq.s32.totalorder %s25, 0
      %p239 = por %p237, %p238
      %p240 = scmp.ne.s32.totalorder %s232, %s234
      %p241 = scmp.eq.s32.totalorder %s30, 1
      %p242 = por %p240, %p241
      %p243 = scmp.ne.s32.totalorder %s234, %s235
      %p244 = scmp.eq.s32.totalorder %s30, 0
      %p245 = por %p243, %p244
      %p246 = scmp.ne.s32.totalorder %s234, %s235
      %p247 = scmp.eq.s32.totalorder %s31, 1
      %p248 = por %p246, %p247
      %p250 = scmp.ne.s32.totalorder %s235, %s249
      %p251 = scmp.eq.s32.totalorder %s31, 0
      %p252 = por %p250, %p251
      %s254 = sadd.s32 %s253, 1
      %p257 = scmp.eq.s32.totalorder %s25, 1
      %p258 = scmp.ne.s32.totalorder %s253, %s255
      %p259 = scmp.eq.s32.totalorder %s25, 0
      %p260 = por %p258, %p259
      %p261 = scmp.ne.s32.totalorder %s253, %s255
      %p262 = scmp.eq.s32.totalorder %s30, 1
      %p263 = por %p261, %p262
      %p264 = scmp.ne.s32.totalorder %s255, %s256
      %p265 = scmp.eq.s32.totalorder %s30, 0
      %p266 = por %p264, %p265
      %p267 = scmp.ne.s32.totalorder %s255, %s256
      %p268 = scmp.eq.s32.totalorder %s31, 1
      %p269 = por %p267, %p268
      %p271 = scmp.ne.s32.totalorder %s256, %s270
      %p272 = scmp.eq.s32.totalorder %s31, 0
      %p273 = por %p271, %p272
      %s275 = sadd.s32 %s274, 1
      %p278 = scmp.eq.s32.totalorder %s25, 1
      %p279 = scmp.ne.s32.totalorder %s274, %s276
      %p280 = scmp.eq.s32.totalorder %s25, 0
      %p281 = por %p279, %p280
      %p282 = scmp.ne.s32.totalorder %s274, %s276
      %p283 = scmp.eq.s32.totalorder %s30, 1
      %p284 = por %p282, %p283
      %p285 = scmp.ne.s32.totalorder %s276, %s277
      %p286 = scmp.eq.s32.totalorder %s30, 0
      %p287 = por %p285, %p286
      %p288 = scmp.ne.s32.totalorder %s276, %s277
      %p289 = scmp.eq.s32.totalorder %s31, 1
      %p290 = por %p288, %p289
      %p292 = scmp.ne.s32.totalorder %s277, %s291
      %p293 = scmp.eq.s32.totalorder %s31, 0
      %p294 = por %p292, %p293
      %s296 = sadd.s32 %s295, 1
      %p299 = scmp.eq.s32.totalorder %s25, 1
      %p300 = scmp.ne.s32.totalorder %s295, %s297
      %p301 = scmp.eq.s32.totalorder %s25, 0
      %p302 = por %p300, %p301
      %p303 = scmp.ne.s32.totalorder %s295, %s297
      %p304 = scmp.eq.s32.totalorder %s30, 1
      %p305 = por %p303, %p304
      %p306 = scmp.ne.s32.totalorder %s297, %s298
      %p307 = scmp.eq.s32.totalorder %s30, 0
      %p308 = por %p306, %p307
      %p309 = scmp.ne.s32.totalorder %s297, %s298
      %p310 = scmp.eq.s32.totalorder %s31, 1
      %p311 = por %p309, %p310
      %p313 = scmp.ne.s32.totalorder %s298, %s312
      %p314 = scmp.eq.s32.totalorder %s31, 0
      %p315 = por %p313, %p314
      %s316 = ssub.s32 %s25, %s32
      %p317 = scmp.eq.s32.totalorder %s316, 0
      %s319 = sadd.s32 %s318, 1
      %s320 = scalar_select %p317, %s318, %s319
      %p323 = pneg %p317
      %p324 = scmp.eq.s32.totalorder %s25, 1
      %p325 = por %p323, %p324
      %p326 = scmp.ne.s32.totalorder %s318, %s321
      %p327 = scmp.eq.s32.totalorder %s25, 0
      %p328 = por %p326, %p327
      %p329 = scmp.ne.s32.totalorder %s318, %s321
      %p330 = scmp.eq.s32.totalorder %s30, 1
      %p331 = por %p329, %p330
      %p332 = scmp.ne.s32.totalorder %s321, %s322
      %p333 = scmp.eq.s32.totalorder %s30, 0
      %p334 = por %p332, %p333
      %p335 = scmp.ne.s32.totalorder %s321, %s322
      %p336 = scmp.eq.s32.totalorder %s31, 1
      %p337 = por %p335, %p336
      %p339 = scmp.ne.s32.totalorder %s322, %s338
      %p340 = scmp.eq.s32.totalorder %s31, 0
      %p341 = por %p339, %p340
      %p342 = scmp.le.s32.totalorder 1, %s25
      %p343 = scmp.lt.s32.totalorder %s25, 3
      %p344 = pnand %p342, %p343
      %p345 = pneg %p344
      // Predicated region
      $region9: #{tpu_custom_call.1} parent=5 // pred_check
        _
      $region10: #{tpu_custom_call.1} parent=5 // pred_check_branch
        %347 = sbr.rel (%p344) target = $region12
      $region11: #{tpu_custom_call.1} parent=5 // pred_region
        %s348 = ssub.s32 %s25, 1
        // Predicated region
        $region13: #{tpu_custom_call.1} parent=11 // pred_check
          %p349 = pneg %p98
        $region14: #{tpu_custom_call.1} parent=11 // pred_check_branch
          %351 = sbr.rel (%p349) target = $region16
        $region15: #{tpu_custom_call.1} parent=11 // pred_region
          %s353 = ssub.s32 128, 128
          %354 = vsyncadd [#allocation3], %s353
          %s356 = sshll.u32 [#allocation2], 4
          %s357 = int_to_ptr.vmem [resolvable:$true] %s356
          %359 = dma.hbm_to_vmem [thread:$0]  %s2, 128, %s357, [#allocation3]
        $region16: #{tpu_custom_call.1} parent=11 // pred_fallthru
          _
        // Predicated region
        $region17: #{tpu_custom_call.1} parent=11 // pred_check
          %p360 = pneg %p119
        $region18: #{tpu_custom_call.1} parent=11 // pred_check_branch
          %362 = sbr.rel (%p360) target = $region20
        $region19: #{tpu_custom_call.1} parent=11 // pred_region
          _
        $region20: #{tpu_custom_call.1} parent=11 // pred_fallthru
          _
        // Predicated region
        $region21: #{tpu_custom_call.1} parent=11 // pred_check
          %p363 = pneg %p140
        $region22: #{tpu_custom_call.1} parent=11 // pred_check_branch
          %365 = sbr.rel (%p363) target = $region24
        $region23: #{tpu_custom_call.1} parent=11 // pred_region
          _
        $region24: #{tpu_custom_call.1} parent=11 // pred_fallthru
          _
        // Predicated region
        $region25: #{tpu_custom_call.1} parent=11 // pred_check
          %p366 = pneg %p161
        $region26: #{tpu_custom_call.1} parent=11 // pred_check_branch
          %368 = sbr.rel (%p366) target = $region28
        $region27: #{tpu_custom_call.1} parent=11 // pred_region
          _
        $region28: #{tpu_custom_call.1} parent=11 // pred_fallthru
          _
        // Predicated region
        $region29: #{tpu_custom_call.1} parent=11 // pred_check
          %p369 = pneg %p182
        $region30: #{tpu_custom_call.1} parent=11 // pred_check_branch
          %371 = sbr.rel (%p369) target = $region32
        $region31: #{tpu_custom_call.1} parent=11 // pred_region
          %s373 = ssub.s32 2048, 2048
          %374 = vsyncadd [#allocation6], %s373
          %s375 = sshll.u32 [#allocation5], 4
          %s376 = int_to_ptr.vmem [resolvable:$true] %s375
          %381 = dma.hbm_to_vmem [thread:$0]  %s6, 2048, %s376, [#allocation6], 128, 128, 8
        $region32: #{tpu_custom_call.1} parent=11 // pred_fallthru
          _
        // Predicated region
        $region33: #{tpu_custom_call.1} parent=11 // pred_check
          %p382 = pneg %p203
        $region34: #{tpu_custom_call.1} parent=11 // pred_check_branch
          %384 = sbr.rel (%p382) target = $region36
        $region35: #{tpu_custom_call.1} parent=11 // pred_region
          _
        $region36: #{tpu_custom_call.1} parent=11 // pred_fallthru
          _
        // Predicated region
        $region37: #{tpu_custom_call.1} parent=11 // pred_check
          %p385 = pneg %p224
        $region38: #{tpu_custom_call.1} parent=11 // pred_check_branch
          %387 = sbr.rel (%p385) target = $region40
        $region39: #{tpu_custom_call.1} parent=11 // pred_region
          %s389 = ssub.s32 2048, 2048
          %390 = vsyncadd [#allocation6], %s389
          %s391 = sshll.u32 [#allocation7], 4
          %s392 = int_to_ptr.vmem [resolvable:$true] %s391
          %397 = dma.hbm_to_vmem [thread:$0]  %s8, 2048, %s392, [#allocation6], 128, 128, 8
        $region40: #{tpu_custom_call.1} parent=11 // pred_fallthru
          _
        // Predicated region
        $region41: #{tpu_custom_call.1} parent=11 // pred_check
          %p398 = pneg %p245
        $region42: #{tpu_custom_call.1} parent=11 // pred_check_branch
          %400 = sbr.rel (%p398) target = $region44
        $region43: #{tpu_custom_call.1} parent=11 // pred_region
          %s402 = ssub.s32 2048, 2048
          %403 = vsyncadd [#allocation9], %s402
          %s404 = sshll.u32 [#allocation8], 4
          %s405 = int_to_ptr.vmem [resolvable:$true] %s404
          %410 = dma.hbm_to_vmem [thread:$0]  %s9, 2048, %s405, [#allocation9], 128, 128, 8
        $region44: #{tpu_custom_call.1} parent=11 // pred_fallthru
          _
        // Predicated region
        $region45: #{tpu_custom_call.1} parent=11 // pred_check
          %p411 = pneg %p266
        $region46: #{tpu_custom_call.1} parent=11 // pred_check_branch
          %413 = sbr.rel (%p411) target = $region48
        $region47: #{tpu_custom_call.1} parent=11 // pred_region
          _
        $region48: #{tpu_custom_call.1} parent=11 // pred_fallthru
          _
        // Predicated region
        $region49: #{tpu_custom_call.1} parent=11 // pred_check
          %p414 = pneg %p287
        $region50: #{tpu_custom_call.1} parent=11 // pred_check_branch
          %416 = sbr.rel (%p414) target = $region52
        $region51: #{tpu_custom_call.1} parent=11 // pred_region
          _
        $region52: #{tpu_custom_call.1} parent=11 // pred_fallthru
          _
        // Predicated region
        $region53: #{tpu_custom_call.1} parent=11 // pred_check
          %p417 = pneg %p308
        $region54: #{tpu_custom_call.1} parent=11 // pred_check_branch
          %419 = sbr.rel (%p417) target = $region56
        $region55: #{tpu_custom_call.1} parent=11 // pred_region
          _
        $region56: #{tpu_custom_call.1} parent=11 // pred_fallthru
          _
      $region12: #{tpu_custom_call.1} parent=5 // pred_fallthru
        _
      %p420 = scmp.lt.s32.totalorder %s25, 2
      // Predicated region
      $region57: #{tpu_custom_call.1} parent=5 // pred_check
        %p421 = pneg %p420
      $region58: #{tpu_custom_call.1} parent=5 // pred_check_branch
        %423 = sbr.rel (%p421) target = $region60
      $region59: #{tpu_custom_call.1} parent=5 // pred_region
        // Predicated region
        $region61: #{tpu_custom_call.1} parent=59 // pred_check
          %p424 = pneg %p45
        $region62: #{tpu_custom_call.1} parent=59 // pred_check_branch
          %426 = sbr.rel (%p424) target = $region64
        $region63: #{tpu_custom_call.1} parent=59 // pred_region
          %s427 = smul.u32 32, %s25
          %p428 = scmp.lt.s32.totalorder %s427, 63
          %s429 = scalar_select %p428, %s427, 63
          %s430 = smul.addr %s429, 8
          %s431 = scalar_lea.vmem %s0, %s430
          %s432 = smul.u32 32, %s25
        $region64: #{tpu_custom_call.1} parent=59 // pred_fallthru
          _
        // Predicated region
        $region65: #{tpu_custom_call.1} parent=59 // pred_check
          %p433 = pneg %p71
        $region66: #{tpu_custom_call.1} parent=59 // pred_check_branch
          %435 = sbr.rel (%p433) target = $region68
        $region67: #{tpu_custom_call.1} parent=59 // pred_region
          %s436 = smul.u32 2, %s25
          %p437 = scmp.lt.s32.totalorder %s436, 3
          %s438 = scalar_select %p437, %s436, 3
          %s439 = smul.addr %s438, 8
          %s440 = scalar_lea.vmem %s1, %s439
          %s441 = smul.u32 2, %s25
        $region68: #{tpu_custom_call.1} parent=59 // pred_fallthru
          _
      $region60: #{tpu_custom_call.1} parent=5 // pred_fallthru
        _
      %p442 = scmp.le.s32.totalorder 1, %s25
      %p443 = scmp.lt.s32.totalorder %s25, 3
      %p444 = pnand %p442, %p443
      %p445 = pneg %p444
      // Predicated region
      $region69: #{tpu_custom_call.1} parent=5 // pred_check
        _
      $region70: #{tpu_custom_call.1} parent=5 // pred_check_branch
        %447 = sbr.rel (%p444) target = $region72
      $region71: #{tpu_custom_call.1} parent=5 // pred_region
        %s448 = ssub.s32 %s25, 1
        // Predicated region
        $region73: #{tpu_custom_call.1} parent=71 // pred_check
          %p449 = pneg %p98
        $region74: #{tpu_custom_call.1} parent=71 // pred_check_branch
          %451 = sbr.rel (%p449) target = $region76
        $region75: #{tpu_custom_call.1} parent=71 // pred_region
          %452 = dma.done [#allocation3], 128
        $region76: #{tpu_custom_call.1} parent=71 // pred_fallthru
          _
        // Predicated region
        $region77: #{tpu_custom_call.1} parent=71 // pred_check
          %p453 = pneg %p182
        $region78: #{tpu_custom_call.1} parent=71 // pred_check_branch
          %455 = sbr.rel (%p453) target = $region80
        $region79: #{tpu_custom_call.1} parent=71 // pred_region
          %456 = dma.done [#allocation6], 2048
        $region80: #{tpu_custom_call.1} parent=71 // pred_fallthru
          _
        // Predicated region
        $region81: #{tpu_custom_call.1} parent=71 // pred_check
          %p457 = pneg %p224
        $region82: #{tpu_custom_call.1} parent=71 // pred_check_branch
          %459 = sbr.rel (%p457) target = $region84
        $region83: #{tpu_custom_call.1} parent=71 // pred_region
          %460 = dma.done [#allocation6], 2048
        $region84: #{tpu_custom_call.1} parent=71 // pred_fallthru
          _
        // Predicated region
        $region85: #{tpu_custom_call.1} parent=71 // pred_check
          %p461 = pneg %p245
        $region86: #{tpu_custom_call.1} parent=71 // pred_check_branch
          %463 = sbr.rel (%p461) target = $region88
        $region87: #{tpu_custom_call.1} parent=71 // pred_region
          %464 = dma.done [#allocation9], 2048
        $region88: #{tpu_custom_call.1} parent=71 // pred_fallthru
          _
        %s465 = smul.u32 32, %s30
        %p466 = scmp.lt.s32.totalorder %s465, 63
        %s467 = scalar_select %p466, %s465, 63
        %s468 = smul.addr %s467, 8
        %s469 = scalar_lea.vmem %s0, %s468
        %p470 = pneg %p51
        %p471 = pneg %p48
        %s472 = smul.u32 2, %s30
        %p473 = scmp.lt.s32.totalorder %s472, 3
        %s474 = scalar_select %p473, %s472, 3
        %s475 = smul.addr %s474, 8
        %s476 = scalar_lea.vmem %s1, %s475
        %p477 = pneg %p77
        %p478 = pneg %p74
        %p479 = pneg %p98
        %p480 = pneg %p95
        %p481 = pneg %p119
        %p482 = pneg %p116
        %p483 = pneg %p140
        %p484 = pneg %p137
        %p485 = pneg %p161
        %p486 = pneg %p158
        %p487 = pneg %p182
        %p488 = pneg %p179
        %p489 = pneg %p203
        %p490 = pneg %p200
        %p491 = pneg %p224
        %p492 = pneg %p221
        %p493 = pneg %p245
        %p494 = pneg %p242
        %p495 = pneg %p266
        %p496 = pneg %p263
        %p497 = pneg %p287
        %p498 = pneg %p284
        %p499 = pneg %p308
        %p500 = pneg %p305
        %p501 = pneg %p334
        %p502 = pneg %p331
        %s503 = sand.u32 %s321, 1
        %s504 = scalar_lea.sflag [#allocation4], %s503
        %s505 = sand.u32 %s321, 1
        %s506 = smul.addr %s505, 32
        %s507 = scalar_lea.vmem [#allocation10], %s506
        %s508 = smul.u32 32, %s30
        %p509 = scmp.lt.s32.totalorder %s508, 63
        %s510 = scalar_select %p509, %s508, 63
        %s511 = smul.addr %s510, 8
        %s512 = scalar_lea.vmem %s0, %s511
        %s513 = smul.u32 32, %s30
        %s514 = smul.u32 2, %s30
        %p515 = scmp.lt.s32.totalorder %s514, 3
        %s516 = scalar_select %p515, %s514, 3
        %s517 = smul.addr %s516, 8
        %s518 = scalar_lea.vmem %s1, %s517
        %s519 = smul.u32 2, %s30
        %s520 = smul.u32 2, %s30
        %v521 = vld [vmem:[%s512] sm:$0xff]
        %v522 = vld [vmem:[%s512 + $0x8] sm:$0xff]
        %v523 = vld [vmem:[%s512 + $0x10] sm:$0xff]
        %v524 = vld [vmem:[%s512 + $0x18] sm:$0xff]
        %v525 = vld [vmem:[%s512 + $0x20] sm:$0xff]
        %v526 = vld [vmem:[%s512 + $0x28] sm:$0xff]
        %v527 = vld [vmem:[%s512 + $0x30] sm:$0xff]
        %v528 = vld [vmem:[%s512 + $0x38] sm:$0xff]
        %v529 = vld [vmem:[%s512 + $0x40] sm:$0xff]
        %v530 = vld [vmem:[%s512 + $0x48] sm:$0xff]
        %v531 = vld [vmem:[%s512 + $0x50] sm:$0xff]
        %v532 = vld [vmem:[%s512 + $0x58] sm:$0xff]
        %v533 = vld [vmem:[%s512 + $0x60] sm:$0xff]
        %v534 = vld [vmem:[%s512 + $0x68] sm:$0xff]
        %v535 = vld [vmem:[%s512 + $0x70] sm:$0xff]
        %v536 = vld [vmem:[%s512 + $0x78] sm:$0xff]
        %v537 = vld [vmem:[%s512 + $0x80] sm:$0xff]
        %v538 = vld [vmem:[%s512 + $0x88] sm:$0xff]
        %v539 = vld [vmem:[%s512 + $0x90] sm:$0xff]
        %v540 = vld [vmem:[%s512 + $0x98] sm:$0xff]
        %v541 = vld [vmem:[%s512 + $0xa0] sm:$0xff]
        %v542 = vld [vmem:[%s512 + $0xa8] sm:$0xff]
        %v543 = vld [vmem:[%s512 + $0xb0] sm:$0xff]
        %v544 = vld [vmem:[%s512 + $0xb8] sm:$0xff]
        %v545 = vld [vmem:[%s512 + $0xc0] sm:$0xff]
        %v546 = vld [vmem:[%s512 + $0xc8] sm:$0xff]
        %v547 = vld [vmem:[%s512 + $0xd0] sm:$0xff]
        %v548 = vld [vmem:[%s512 + $0xd8] sm:$0xff]
        %v549 = vld [vmem:[%s512 + $0xe0] sm:$0xff]
        %v550 = vld [vmem:[%s512 + $0xe8] sm:$0xff]
        %v551 = vld [vmem:[%s512 + $0xf0] sm:$0xff]
        %v552 = vld [vmem:[%s512 + $0xf8] sm:$0xff]
        %v553 = vld [vmem:[#allocation2] sm:$0xff]
        %vm554 = vcmask 64512
        %v556 = vsel %vm554, %v521, 0
        %v559 = vsel %vm554, %v522, 0
        %v562 = vsel %vm554, %v523, 0
        %v565 = vsel %vm554, %v524, 0
        %v568 = vsel %vm554, %v525, 0
        %v571 = vsel %vm554, %v526, 0
        %v574 = vsel %vm554, %v527, 0
        %v577 = vsel %vm554, %v528, 0
        %v580 = vsel %vm554, %v529, 0
        %v583 = vsel %vm554, %v530, 0
        %v586 = vsel %vm554, %v531, 0
        %v589 = vsel %vm554, %v532, 0
        %v592 = vsel %vm554, %v533, 0
        %v595 = vsel %vm554, %v534, 0
        %v598 = vsel %vm554, %v535, 0
        %v601 = vsel %vm554, %v536, 0
        %v604 = vsel %vm554, %v537, 0
        %v607 = vsel %vm554, %v538, 0
        %v610 = vsel %vm554, %v539, 0
        %v613 = vsel %vm554, %v540, 0
        %v616 = vsel %vm554, %v541, 0
        %v619 = vsel %vm554, %v542, 0
        %v622 = vsel %vm554, %v543, 0
        %v625 = vsel %vm554, %v544, 0
        %v628 = vsel %vm554, %v545, 0
        %v631 = vsel %vm554, %v546, 0
        %v634 = vsel %vm554, %v547, 0
        %v637 = vsel %vm554, %v548, 0
        %v640 = vsel %vm554, %v549, 0
        %v643 = vsel %vm554, %v550, 0
        %v646 = vsel %vm554, %v551, 0
        %v649 = vsel %vm554, %v552, 0
        %651 = vmatprep.subr.mxu0 0.0
        %652 = vmatpush1.msra.mxu0 %v553
        %653 = vmatprep.subr.mxu0 0.0
        %654 = vmatpush1.msra.mxu0 0.0
        %655 = vmatprep.subr.mxu0 0.0
        %656 = vmatpush1.msra.mxu0 0.0
        %657 = vmatprep.subr.mxu0 0.0
        %658 = vmatpush1.msra.mxu0 0.0
        %659 = vmatprep.subr.mxu0 0.0
        %660 = vmatpush1.msra.mxu0 0.0
        %661 = vmatprep.subr.mxu0 0.0
        %662 = vmatpush1.msra.mxu0 0.0
        %663 = vmatprep.subr.mxu0 0.0
        %664 = vmatpush1.msra.mxu0 0.0
        %665 = vmatprep.subr.mxu0 0.0
        %666 = vmatpush1.msra.mxu0 0.0
        %667 = vmatprep.subr.mxu0 0.0
        %668 = vmatpush1.msra.mxu0 0.0
        %669 = vmatprep.subr.mxu0 0.0
        %670 = vmatpush1.msra.mxu0 0.0
        %671 = vmatprep.subr.mxu0 0.0
        %672 = vmatpush1.msra.mxu0 0.0
        %673 = vmatprep.subr.mxu0 0.0
        %674 = vmatpush1.msra.mxu0 0.0
        %675 = vmatprep.subr.mxu0 0.0
        %676 = vmatpush1.msra.mxu0 0.0
        %677 = vmatprep.subr.mxu0 0.0
        %678 = vmatpush1.msra.mxu0 0.0
        %679 = vmatprep.subr.mxu0 0.0
        %680 = vmatpush1.msra.mxu0 0.0
        %681 = vmatprep.subr.mxu0 0.0
        %682 = vmatpush1.msra.mxu0 0.0
        %683 = vmatprep.subr.mxu0 0.0
        %684 = vmatpush1.msra.mxu0 0.0
        %685 = vmatprep.subr.mxu0 0.0
        %686 = vmatpush1.msra.mxu0 0.0
        %687 = vmatprep.subr.mxu0 0.0
        %688 = vmatpush1.msra.mxu0 0.0
        %689 = vmatprep.subr.mxu0 0.0
        %690 = vmatpush1.msra.mxu0 0.0
        %691 = vmatprep.subr.mxu0 0.0
        %692 = vmatpush1.msra.mxu0 0.0
        %693 = vmatprep.subr.mxu0 0.0
        %694 = vmatpush1.msra.mxu0 0.0
        %695 = vmatprep.subr.mxu0 0.0
        %696 = vmatpush1.msra.mxu0 0.0
        %697 = vmatprep.subr.mxu0 0.0
        %698 = vmatpush1.msra.mxu0 0.0
        %699 = vmatprep.subr.mxu0 0.0
        %700 = vmatpush1.msra.mxu0 0.0
        %701 = vmatprep.subr.mxu0 0.0
        %702 = vmatpush1.msra.mxu0 0.0
        %703 = vmatprep.subr.mxu0 0.0
        %704 = vmatpush1.msra.mxu0 0.0
        %705 = vmatprep.subr.mxu0 0.0
        %706 = vmatpush1.msra.mxu0 0.0
        %707 = vmatprep.subr.mxu0 0.0
        %708 = vmatpush1.msra.mxu0 0.0
        %709 = vmatprep.subr.mxu0 0.0
        %710 = vmatpush1.msra.mxu0 0.0
        %711 = vmatprep.subr.mxu0 0.0
        %712 = vmatpush1.msra.mxu0 0.0
        %713 = vmatprep.subr.mxu0 0.0
        %714 = vmatpush1.msra.mxu0 0.0
        %715 = vmatprep.mubr.f32.mxu0 0.0
        %716 = vmatmul.mubr.f32.gmra.mrb[0].mxu0 %v556
        %v717 = vpop.f32.mrb[0].mxu0
        %v718 = vadd.f32 0.0, %v717
        %v719 = vpop.f32.mrb[0].mxu0
        %720 = vmatprep.mubr.f32.mxu0 0.0
        %721 = vmatmul.mubr.f32.gmra.mrb[0].mxu0 %v559
        %v722 = vpop.f32.mrb[0].mxu0
        %v723 = vadd.f32 0.0, %v722
        %v724 = vpop.f32.mrb[0].mxu0
        %725 = vmatprep.mubr.f32.mxu0 0.0
        %726 = vmatmul.mubr.f32.gmra.mrb[0].mxu0 %v562
        %v727 = vpop.f32.mrb[0].mxu0
        %v728 = vadd.f32 0.0, %v727
        %v729 = vpop.f32.mrb[0].mxu0
        %730 = vmatprep.mubr.f32.mxu0 0.0
        %731 = vmatmul.mubr.f32.gmra.mrb[0].mxu0 %v565
        %v732 = vpop.f32.mrb[0].mxu0
        %v733 = vadd.f32 0.0, %v732
        %v734 = vpop.f32.mrb[0].mxu0
        %735 = vmatprep.mubr.f32.mxu0 0.0
        %736 = vmatmul.mubr.f32.gmra.mrb[0].mxu0 %v568
        %v737 = vpop.f32.mrb[0].mxu0
        %v738 = vadd.f32 0.0, %v737
        %v739 = vpop.f32.mrb[0].mxu0
        %740 = vmatprep.mubr.f32.mxu0 0.0
        %741 = vmatmul.mubr.f32.gmra.mrb[0].mxu0 %v571
        %v742 = vpop.f32.mrb[0].mxu0
        %v743 = vadd.f32 0.0, %v742
        %v744 = vpop.f32.mrb[0].mxu0
        %745 = vmatprep.mubr.f32.mxu0 0.0
        %746 = vmatmul.mubr.f32.gmra.mrb[0].mxu0 %v574
        %v747 = vpop.f32.mrb[0].mxu0
        %v748 = vadd.f32 0.0, %v747
        %v749 = vpop.f32.mrb[0].mxu0
        %750 = vmatprep.mubr.f32.mxu0 0.0
        %751 = vmatmul.mubr.f32.gmra.mrb[0].mxu0 %v577
        %v752 = vpop.f32.mrb[0].mxu0
        %v753 = vadd.f32 0.0, %v752
        %v754 = vpop.f32.mrb[0].mxu0
        %755 = vmatprep.mubr.f32.mxu0 0.0
        %756 = vmatmul.mubr.f32.gmra.mrb[0].mxu0 %v580
        %v757 = vpop.f32.mrb[0].mxu0
        %v758 = vadd.f32 0.0, %v757
        %v759 = vpop.f32.mrb[0].mxu0
        %760 = vmatprep.mubr.f32.mxu0 0.0
        %761 = vmatmul.mubr.f32.gmra.mrb[0].mxu0 %v583
        %v762 = vpop.f32.mrb[0].mxu0
        %v763 = vadd.f32 0.0, %v762
        %v764 = vpop.f32.mrb[0].mxu0
        %765 = vmatprep.mubr.f32.mxu0 0.0
        %766 = vmatmul.mubr.f32.gmra.mrb[0].mxu0 %v586
        %v767 = vpop.f32.mrb[0].mxu0
        %v768 = vadd.f32 0.0, %v767
        %v769 = vpop.f32.mrb[0].mxu0
        %770 = vmatprep.mubr.f32.mxu0 0.0
        %771 = vmatmul.mubr.f32.gmra.mrb[0].mxu0 %v589
        %v772 = vpop.f32.mrb[0].mxu0
        %v773 = vadd.f32 0.0, %v772
        %v774 = vpop.f32.mrb[0].mxu0
        %775 = vmatprep.mubr.f32.mxu0 0.0
        %776 = vmatmul.mubr.f32.gmra.mrb[0].mxu0 %v592
        %v777 = vpop.f32.mrb[0].mxu0
        %v778 = vadd.f32 0.0, %v777
        %v779 = vpop.f32.mrb[0].mxu0
        %780 = vmatprep.mubr.f32.mxu0 0.0
        %781 = vmatmul.mubr.f32.gmra.mrb[0].mxu0 %v595
        %v782 = vpop.f32.mrb[0].mxu0
        %v783 = vadd.f32 0.0, %v782
        %v784 = vpop.f32.mrb[0].mxu0
        %785 = vmatprep.mubr.f32.mxu0 0.0
        %786 = vmatmul.mubr.f32.gmra.mrb[0].mxu0 %v598
        %v787 = vpop.f32.mrb[0].mxu0
        %v788 = vadd.f32 0.0, %v787
        %v789 = vpop.f32.mrb[0].mxu0
        %790 = vmatprep.mubr.f32.mxu0 0.0
        %791 = vmatmul.mubr.f32.gmra.mrb[0].mxu0 %v601
        %v792 = vpop.f32.mrb[0].mxu0
        %v793 = vadd.f32 0.0, %v792
        %v794 = vpop.f32.mrb[0].mxu0
        %795 = vmatprep.mubr.f32.mxu0 0.0
        %796 = vmatmul.mubr.f32.gmra.mrb[0].mxu0 %v604
        %v797 = vpop.f32.mrb[0].mxu0
        %v798 = vadd.f32 0.0, %v797
        %v799 = vpop.f32.mrb[0].mxu0
        %800 = vmatprep.mubr.f32.mxu0 0.0
        %801 = vmatmul.mubr.f32.gmra.mrb[0].mxu0 %v607
        %v802 = vpop.f32.mrb[0].mxu0
        %v803 = vadd.f32 0.0, %v802
        %v804 = vpop.f32.mrb[0].mxu0
        %805 = vmatprep.mubr.f32.mxu0 0.0
        %806 = vmatmul.mubr.f32.gmra.mrb[0].mxu0 %v610
        %v807 = vpop.f32.mrb[0].mxu0
        %v808 = vadd.f32 0.0, %v807
        %v809 = vpop.f32.mrb[0].mxu0
        %810 = vmatprep.mubr.f32.mxu0 0.0
        %811 = vmatmul.mubr.f32.gmra.mrb[0].mxu0 %v613
        %v812 = vpop.f32.mrb[0].mxu0
        %v813 = vadd.f32 0.0, %v812
        %v814 = vpop.f32.mrb[0].mxu0
        %815 = vmatprep.mubr.f32.mxu0 0.0
        %816 = vmatmul.mubr.f32.gmra.mrb[0].mxu0 %v616
        %v817 = vpop.f32.mrb[0].mxu0
        %v818 = vadd.f32 0.0, %v817
        %v819 = vpop.f32.mrb[0].mxu0
        %820 = vmatprep.mubr.f32.mxu0 0.0
        %821 = vmatmul.mubr.f32.gmra.mrb[0].mxu0 %v619
        %v822 = vpop.f32.mrb[0].mxu0
        %v823 = vadd.f32 0.0, %v822
        %v824 = vpop.f32.mrb[0].mxu0
        %825 = vmatprep.mubr.f32.mxu0 0.0
        %826 = vmatmul.mubr.f32.gmra.mrb[0].mxu0 %v622
        %v827 = vpop.f32.mrb[0].mxu0
        %v828 = vadd.f32 0.0, %v827
        %v829 = vpop.f32.mrb[0].mxu0
        %830 = vmatprep.mubr.f32.mxu0 0.0
        %831 = vmatmul.mubr.f32.gmra.mrb[0].mxu0 %v625
        %v832 = vpop.f32.mrb[0].mxu0
        %v833 = vadd.f32 0.0, %v832
        %v834 = vpop.f32.mrb[0].mxu0
        %835 = vmatprep.mubr.f32.mxu0 0.0
        %836 = vmatmul.mubr.f32.gmra.mrb[0].mxu0 %v628
        %v837 = vpop.f32.mrb[0].mxu0
        %v838 = vadd.f32 0.0, %v837
        %v839 = vpop.f32.mrb[0].mxu0
        %840 = vmatprep.mubr.f32.mxu0 0.0
        %841 = vmatmul.mubr.f32.gmra.mrb[0].mxu0 %v631
        %v842 = vpop.f32.mrb[0].mxu0
        %v843 = vadd.f32 0.0, %v842
        %v844 = vpop.f32.mrb[0].mxu0
        %845 = vmatprep.mubr.f32.mxu0 0.0
        %846 = vmatmul.mubr.f32.gmra.mrb[0].mxu0 %v634
        %v847 = vpop.f32.mrb[0].mxu0
        %v848 = vadd.f32 0.0, %v847
        %v849 = vpop.f32.mrb[0].mxu0
        %850 = vmatprep.mubr.f32.mxu0 0.0
        %851 = vmatmul.mubr.f32.gmra.mrb[0].mxu0 %v637
        %v852 = vpop.f32.mrb[0].mxu0
        %v853 = vadd.f32 0.0, %v852
        %v854 = vpop.f32.mrb[0].mxu0
        %855 = vmatprep.mubr.f32.mxu0 0.0
        %856 = vmatmul.mubr.f32.gmra.mrb[0].mxu0 %v640
        %v857 = vpop.f32.mrb[0].mxu0
        %v858 = vadd.f32 0.0, %v857
        %v859 = vpop.f32.mrb[0].mxu0
        %860 = vmatprep.mubr.f32.mxu0 0.0
        %861 = vmatmul.mubr.f32.gmra.mrb[0].mxu0 %v643
        %v862 = vpop.f32.mrb[0].mxu0
        %v863 = vadd.f32 0.0, %v862
        %v864 = vpop.f32.mrb[0].mxu0
        %865 = vmatprep.mubr.f32.mxu0 0.0
        %866 = vmatmul.mubr.f32.gmra.mrb[0].mxu0 %v646
        %v867 = vpop.f32.mrb[0].mxu0
        %v868 = vadd.f32 0.0, %v867
        %v869 = vpop.f32.mrb[0].mxu0
        %870 = vmatprep.mubr.f32.mxu0 0.0
        %871 = vmatmul.mubr.f32.gmra.mrb[0].mxu0 %v649
        %v872 = vpop.f32.mrb[0].mxu0
        %v873 = vadd.f32 0.0, %v872
        %v874 = vpop.f32.mrb[0].mxu0
        %875 = vdwg.mxu0
        %v876 = vld [vmem:[%s518] sm:$0xff]
        %v877 = vld [vmem:[%s518 + $0x8] sm:$0xff]
        %v880 = vcombine.high %v876, %v876
        %v882 = vunpack.c.l.s4 1966171168
        %v883 = vunpack.c.0.s8 %v882
        %v884 = vlaneseq
        %v885 = vshrl.u32 %v884, 7
        %v886 = vsub.s32 %v883, %v885
        %v887 = vrot.slane %v876, %v886
        %v889 = vunpack.c.l.s4 1966171168
        %v890 = vunpack.c.0.s8 %v889
        %v891 = vlaneseq
        %v892 = vshrl.u32 %v891, 7
        %v893 = vsub.s32 %v890, %v892
        %v894 = vrot.slane %v880, %v893
        %v895 = vcombine.high %v887, %v887
        %v896 = vcombine.high %v894, %v894
        %v898 = vunpack.c.l.s4 1966171168
        %v899 = vunpack.c.0.s8 %v898
        %v900 = vlaneseq
        %v901 = vshrl.u32 %v900, 7
        %v902 = vsub.s32 %v899, %v901
        %v903 = vrot.slane %v887, %v902
        %v905 = vunpack.c.l.s4 1966171168
        %v906 = vunpack.c.0.s8 %v905
        %v907 = vlaneseq
        %v908 = vshrl.u32 %v907, 7
        %v909 = vsub.s32 %v906, %v908
        %v910 = vrot.slane %v894, %v909
        %v912 = vunpack.c.l.s4 1966171168
        %v913 = vunpack.c.0.s8 %v912
        %v914 = vlaneseq
        %v915 = vshrl.u32 %v914, 7
        %v916 = vsub.s32 %v913, %v915
        %v917 = vrot.slane %v895, %v916
        %v919 = vunpack.c.l.s4 1966171168
        %v920 = vunpack.c.0.s8 %v919
        %v921 = vlaneseq
        %v922 = vshrl.u32 %v921, 7
        %v923 = vsub.s32 %v920, %v922
        %v924 = vrot.slane %v896, %v923
        %v925 = vcombine.high %v903, %v903
        %v926 = vcombine.high %v910, %v910
        %v927 = vcombine.high %v917, %v917
        %v928 = vcombine.high %v924, %v924
        %v929 = vcombine.high %v877, %v877
        %v931 = vunpack.c.l.s4 1966171168
        %v932 = vunpack.c.0.s8 %v931
        %v933 = vlaneseq
        %v934 = vshrl.u32 %v933, 7
        %v935 = vsub.s32 %v932, %v934
        %v936 = vrot.slane %v877, %v935
        %v938 = vunpack.c.l.s4 1966171168
        %v939 = vunpack.c.0.s8 %v938
        %v940 = vlaneseq
        %v941 = vshrl.u32 %v940, 7
        %v942 = vsub.s32 %v939, %v941
        %v943 = vrot.slane %v929, %v942
        %v944 = vcombine.high %v936, %v936
        %v945 = vcombine.high %v943, %v943
        %v947 = vunpack.c.l.s4 1966171168
        %v948 = vunpack.c.0.s8 %v947
        %v949 = vlaneseq
        %v950 = vshrl.u32 %v949, 7
        %v951 = vsub.s32 %v948, %v950
        %v952 = vrot.slane %v936, %v951
        %v954 = vunpack.c.l.s4 1966171168
        %v955 = vunpack.c.0.s8 %v954
        %v956 = vlaneseq
        %v957 = vshrl.u32 %v956, 7
        %v958 = vsub.s32 %v955, %v957
        %v959 = vrot.slane %v943, %v958
        %v961 = vunpack.c.l.s4 1966171168
        %v962 = vunpack.c.0.s8 %v961
        %v963 = vlaneseq
        %v964 = vshrl.u32 %v963, 7
        %v965 = vsub.s32 %v962, %v964
        %v966 = vrot.slane %v944, %v965
        %v968 = vunpack.c.l.s4 1966171168
        %v969 = vunpack.c.0.s8 %v968
        %v970 = vlaneseq
        %v971 = vshrl.u32 %v970, 7
        %v972 = vsub.s32 %v969, %v971
        %v973 = vrot.slane %v945, %v972
        %v974 = vcombine.high %v952, %v952
        %v975 = vcombine.high %v959, %v959
        %v976 = vcombine.high %v966, %v966
        %v977 = vcombine.high %v973, %v973
        %v978 = vlaneseq
        %v979 = vshrl.u32 %v978, 7
        %v980 = vsub.s32 0, %v979
        %v981 = vrot.slane %v903, %v980
        %v982 = vlaneseq
        %v983 = vshrl.u32 %v982, 7
        %v984 = vsub.s32 0, %v983
        %v985 = vrot.slane %v917, %v984
        %v986 = vlaneseq
        %v987 = vshrl.u32 %v986, 7
        %v988 = vsub.s32 0, %v987
        %v989 = vrot.slane %v925, %v988
        %v990 = vlaneseq
        %v991 = vshrl.u32 %v990, 7
        %v992 = vsub.s32 0, %v991
        %v993 = vrot.slane %v927, %v992
        %v994 = vlaneseq
        %v995 = vshrl.u32 %v994, 7
        %v996 = vsub.s32 0, %v995
        %v997 = vrot.slane %v910, %v996
        %v998 = vlaneseq
        %v999 = vshrl.u32 %v998, 7
        %v1000 = vsub.s32 0, %v999
        %v1001 = vrot.slane %v924, %v1000
        %v1002 = vlaneseq
        %v1003 = vshrl.u32 %v1002, 7
        %v1004 = vsub.s32 0, %v1003
        %v1005 = vrot.slane %v926, %v1004
        %v1006 = vlaneseq
        %v1007 = vshrl.u32 %v1006, 7
        %v1008 = vsub.s32 0, %v1007
        %v1009 = vrot.slane %v928, %v1008
        %v1010 = vlaneseq
        %v1011 = vshrl.u32 %v1010, 7
        %v1012 = vsub.s32 0, %v1011
        %v1013 = vrot.slane %v952, %v1012
        %v1014 = vlaneseq
        %v1015 = vshrl.u32 %v1014, 7
        %v1016 = vsub.s32 0, %v1015
        %v1017 = vrot.slane %v966, %v1016
        %v1018 = vlaneseq
        %v1019 = vshrl.u32 %v1018, 7
        %v1020 = vsub.s32 0, %v1019
        %v1021 = vrot.slane %v974, %v1020
        %v1022 = vlaneseq
        %v1023 = vshrl.u32 %v1022, 7
        %v1024 = vsub.s32 0, %v1023
        %v1025 = vrot.slane %v976, %v1024
        %v1026 = vlaneseq
        %v1027 = vshrl.u32 %v1026, 7
        %v1028 = vsub.s32 0, %v1027
        %v1029 = vrot.slane %v959, %v1028
        %v1030 = vlaneseq
        %v1031 = vshrl.u32 %v1030, 7
        %v1032 = vsub.s32 0, %v1031
        %v1033 = vrot.slane %v973, %v1032
        %v1034 = vlaneseq
        %v1035 = vshrl.u32 %v1034, 7
        %v1036 = vsub.s32 0, %v1035
        %v1037 = vrot.slane %v975, %v1036
        %v1038 = vlaneseq
        %v1039 = vshrl.u32 %v1038, 7
        %v1040 = vsub.s32 0, %v1039
        %v1041 = vrot.slane %v977, %v1040
        %v1058 = vadd.f32 %v718, %v981
        %v1059 = vadd.f32 %v723, %v981
        %v1060 = vadd.f32 %v728, %v985
        %v1061 = vadd.f32 %v733, %v985
        %v1062 = vadd.f32 %v738, %v989
        %v1063 = vadd.f32 %v743, %v989
        %v1064 = vadd.f32 %v748, %v993
        %v1065 = vadd.f32 %v753, %v993
        %v1066 = vadd.f32 %v758, %v997
        %v1067 = vadd.f32 %v763, %v997
        %v1068 = vadd.f32 %v768, %v1001
        %v1069 = vadd.f32 %v773, %v1001
        %v1070 = vadd.f32 %v778, %v1005
        %v1071 = vadd.f32 %v783, %v1005
        %v1072 = vadd.f32 %v788, %v1009
        %v1073 = vadd.f32 %v793, %v1009
        %v1074 = vadd.f32 %v798, %v1013
        %v1075 = vadd.f32 %v803, %v1013
        %v1076 = vadd.f32 %v808, %v1017
        %v1077 = vadd.f32 %v813, %v1017
        %v1078 = vadd.f32 %v818, %v1021
        %v1079 = vadd.f32 %v823, %v1021
        %v1080 = vadd.f32 %v828, %v1025
        %v1081 = vadd.f32 %v833, %v1025
        %v1082 = vadd.f32 %v838, %v1029
        %v1083 = vadd.f32 %v843, %v1029
        %v1084 = vadd.f32 %v848, %v1033
        %v1085 = vadd.f32 %v853, %v1033
        %v1086 = vadd.f32 %v858, %v1037
        %v1087 = vadd.f32 %v863, %v1037
        %v1088 = vadd.f32 %v868, %v1041
        %v1089 = vadd.f32 %v873, %v1041
        %v1090 = vmax.f32 %v1058, 0.0
        %v1091 = vmax.f32 %v1059, 0.0
        %v1092 = vmax.f32 %v1060, 0.0
        %v1093 = vmax.f32 %v1061, 0.0
        %v1094 = vmax.f32 %v1062, 0.0
        %v1095 = vmax.f32 %v1063, 0.0
        %v1096 = vmax.f32 %v1064, 0.0
        %v1097 = vmax.f32 %v1065, 0.0
        %v1098 = vmax.f32 %v1066, 0.0
        %v1099 = vmax.f32 %v1067, 0.0
        %v1100 = vmax.f32 %v1068, 0.0
        %v1101 = vmax.f32 %v1069, 0.0
        %v1102 = vmax.f32 %v1070, 0.0
        %v1103 = vmax.f32 %v1071, 0.0
        %v1104 = vmax.f32 %v1072, 0.0
        %v1105 = vmax.f32 %v1073, 0.0
        %v1106 = vmax.f32 %v1074, 0.0
        %v1107 = vmax.f32 %v1075, 0.0
        %v1108 = vmax.f32 %v1076, 0.0
        %v1109 = vmax.f32 %v1077, 0.0
        %v1110 = vmax.f32 %v1078, 0.0
        %v1111 = vmax.f32 %v1079, 0.0
        %v1112 = vmax.f32 %v1080, 0.0
        %v1113 = vmax.f32 %v1081, 0.0
        %v1114 = vmax.f32 %v1082, 0.0
        %v1115 = vmax.f32 %v1083, 0.0
        %v1116 = vmax.f32 %v1084, 0.0
        %v1117 = vmax.f32 %v1085, 0.0
        %v1118 = vmax.f32 %v1086, 0.0
        %v1119 = vmax.f32 %v1087, 0.0
        %v1120 = vmax.f32 %v1088, 0.0
        %v1121 = vmax.f32 %v1089, 0.0
        %v1122 = vld [vmem:[%s3] sm:$0xff]
        %v1123 = vld [vmem:[%s3 + $0x8] sm:$0xff]
        %v1124 = vld [vmem:[%s3 + $0x10] sm:$0xff]
        %v1125 = vld [vmem:[%s3 + $0x18] sm:$0xff]
        %v1126 = vld [vmem:[%s3 + $0x20] sm:$0xff]
        %v1127 = vld [vmem:[%s3 + $0x28] sm:$0xff]
        %v1128 = vld [vmem:[%s3 + $0x30] sm:$0xff]
        %v1129 = vld [vmem:[%s3 + $0x38] sm:$0xff]
        %v1130 = vld [vmem:[%s3 + $0x40] sm:$0xff]
        %v1131 = vld [vmem:[%s3 + $0x48] sm:$0xff]
        %v1132 = vld [vmem:[%s3 + $0x50] sm:$0xff]
        %v1133 = vld [vmem:[%s3 + $0x58] sm:$0xff]
        %v1134 = vld [vmem:[%s3 + $0x60] sm:$0xff]
        %v1135 = vld [vmem:[%s3 + $0x68] sm:$0xff]
        %v1136 = vld [vmem:[%s3 + $0x70] sm:$0xff]
        %v1137 = vld [vmem:[%s3 + $0x78] sm:$0xff]
        %v1138 = vld [vmem:[%s4] sm:$0x1]
        %v1140 = vlaneseq
        %v1141 = vshrl.u32 %v1140, 7
        %v1142 = vsub.s32 0, %v1141
        %v1143 = vrot.slane %v1138, %v1142
        %1145 = vmatprep.subr.mxu0 0.0
        %1146 = vmatpush1.msra.mxu0 %v1122
        %1147 = vmatprep.subr.mxu0 0.0
        %1148 = vmatpush1.msra.mxu0 %v1123
        %1149 = vmatprep.subr.mxu0 0.0
        %1150 = vmatpush1.msra.mxu0 %v1124
        %1151 = vmatprep.subr.mxu0 0.0
        %1152 = vmatpush1.msra.mxu0 %v1125
        %1153 = vmatprep.subr.mxu0 0.0
        %1154 = vmatpush1.msra.mxu0 %v1126
        %1155 = vmatprep.subr.mxu0 0.0
        %1156 = vmatpush1.msra.mxu0 %v1127
        %1157 = vmatprep.subr.mxu0 0.0
        %1158 = vmatpush1.msra.mxu0 %v1128
        %1159 = vmatprep.subr.mxu0 0.0
        %1160 = vmatpush1.msra.mxu0 %v1129
        %1161 = vmatprep.subr.mxu0 0.0
        %1162 = vmatpush1.msra.mxu0 %v1130
        %1163 = vmatprep.subr.mxu0 0.0
        %1164 = vmatpush1.msra.mxu0 %v1131
        %1165 = vmatprep.subr.mxu0 0.0
        %1166 = vmatpush1.msra.mxu0 %v1132
        %1167 = vmatprep.subr.mxu0 0.0
        %1168 = vmatpush1.msra.mxu0 %v1133
        %1169 = vmatprep.subr.mxu0 0.0
        %1170 = vmatpush1.msra.mxu0 %v1134
        %1171 = vmatprep.subr.mxu0 0.0
        %1172 = vmatpush1.msra.mxu0 %v1135
        %1173 = vmatprep.subr.mxu0 0.0
        %1174 = vmatpush1.msra.mxu0 %v1136
        %1175 = vmatprep.subr.mxu0 0.0
        %1176 = vmatpush1.msra.mxu0 %v1137
        %1177 = vmatprep.subr.mxu0 0.0
        %1178 = vmatpush1.msra.mxu0 0.0
        %1179 = vmatprep.subr.mxu0 0.0
        %1180 = vmatpush1.msra.mxu0 0.0
        %1181 = vmatprep.subr.mxu0 0.0
        %1182 = vmatpush1.msra.mxu0 0.0
        %1183 = vmatprep.subr.mxu0 0.0
        %1184 = vmatpush1.msra.mxu0 0.0
        %1185 = vmatprep.subr.mxu0 0.0
        %1186 = vmatpush1.msra.mxu0 0.0
        %1187 = vmatprep.subr.mxu0 0.0
        %1188 = vmatpush1.msra.mxu0 0.0
        %1189 = vmatprep.subr.mxu0 0.0
        %1190 = vmatpush1.msra.mxu0 0.0
        %1191 = vmatprep.subr.mxu0 0.0
        %1192 = vmatpush1.msra.mxu0 0.0
        %1193 = vmatprep.subr.mxu0 0.0
        %1194 = vmatpush1.msra.mxu0 0.0
        %1195 = vmatprep.subr.mxu0 0.0
        %1196 = vmatpush1.msra.mxu0 0.0
        %1197 = vmatprep.subr.mxu0 0.0
        %1198 = vmatpush1.msra.mxu0 0.0
        %1199 = vmatprep.subr.mxu0 0.0
        %1200 = vmatpush1.msra.mxu0 0.0
        %1201 = vmatprep.subr.mxu0 0.0
        %1202 = vmatpush1.msra.mxu0 0.0
        %1203 = vmatprep.subr.mxu0 0.0
        %1204 = vmatpush1.msra.mxu0 0.0
        %1205 = vmatprep.subr.mxu0 0.0
        %1206 = vmatpush1.msra.mxu0 0.0
        %1207 = vmatprep.subr.mxu0 0.0
        %1208 = vmatpush1.msra.mxu0 0.0
        %1209 = vmatprep.mubr.f32.mxu0 0.0
        %1210 = vmatmul.mubr.f32.gmra.mrb[0].mxu0 %v1090
        %v1211 = vpop.f32.mrb[0].mxu0
        %v1212 = vadd.f32 %v1143, %v1211
        %v1213 = vpop.f32.mrb[0].mxu0
        %1214 = vmatprep.mubr.f32.mxu0 0.0
        %1215 = vmatmul.mubr.f32.gmra.mrb[0].mxu0 %v1091
        %v1216 = vpop.f32.mrb[0].mxu0
        %v1217 = vadd.f32 %v1143, %v1216
        %v1218 = vpop.f32.mrb[0].mxu0
        %1219 = vmatprep.mubr.f32.mxu0 0.0
        %1220 = vmatmul.mubr.f32.gmra.mrb[0].mxu0 %v1092
        %v1221 = vpop.f32.mrb[0].mxu0
        %v1222 = vadd.f32 %v1143, %v1221
        %v1223 = vpop.f32.mrb[0].mxu0
        %1224 = vmatprep.mubr.f32.mxu0 0.0
        %1225 = vmatmul.mubr.f32.gmra.mrb[0].mxu0 %v1093
        %v1226 = vpop.f32.mrb[0].mxu0
        %v1227 = vadd.f32 %v1143, %v1226
        %v1228 = vpop.f32.mrb[0].mxu0
        %1229 = vmatprep.mubr.f32.mxu0 0.0
        %1230 = vmatmul.mubr.f32.gmra.mrb[0].mxu0 %v1094
        %v1231 = vpop.f32.mrb[0].mxu0
        %v1232 = vadd.f32 %v1143, %v1231
        %v1233 = vpop.f32.mrb[0].mxu0
        %1234 = vmatprep.mubr.f32.mxu0 0.0
        %1235 = vmatmul.mubr.f32.gmra.mrb[0].mxu0 %v1095
        %v1236 = vpop.f32.mrb[0].mxu0
        %v1237 = vadd.f32 %v1143, %v1236
        %v1238 = vpop.f32.mrb[0].mxu0
        %1239 = vmatprep.mubr.f32.mxu0 0.0
        %1240 = vmatmul.mubr.f32.gmra.mrb[0].mxu0 %v1096
        %v1241 = vpop.f32.mrb[0].mxu0
        %v1242 = vadd.f32 %v1143, %v1241
        %v1243 = vpop.f32.mrb[0].mxu0
        %1244 = vmatprep.mubr.f32.mxu0 0.0
        %1245 = vmatmul.mubr.f32.gmra.mrb[0].mxu0 %v1097
        %v1246 = vpop.f32.mrb[0].mxu0
        %v1247 = vadd.f32 %v1143, %v1246
        %v1248 = vpop.f32.mrb[0].mxu0
        %1249 = vmatprep.mubr.f32.mxu0 0.0
        %1250 = vmatmul.mubr.f32.gmra.mrb[0].mxu0 %v1098
        %v1251 = vpop.f32.mrb[0].mxu0
        %v1252 = vadd.f32 %v1143, %v1251
        %v1253 = vpop.f32.mrb[0].mxu0
        %1254 = vmatprep.mubr.f32.mxu0 0.0
        %1255 = vmatmul.mubr.f32.gmra.mrb[0].mxu0 %v1099
        %v1256 = vpop.f32.mrb[0].mxu0
        %v1257 = vadd.f32 %v1143, %v1256
        %v1258 = vpop.f32.mrb[0].mxu0
        %1259 = vmatprep.mubr.f32.mxu0 0.0
        %1260 = vmatmul.mubr.f32.gmra.mrb[0].mxu0 %v1100
        %v1261 = vpop.f32.mrb[0].mxu0
        %v1262 = vadd.f32 %v1143, %v1261
        %v1263 = vpop.f32.mrb[0].mxu0
        %1264 = vmatprep.mubr.f32.mxu0 0.0
        %1265 = vmatmul.mubr.f32.gmra.mrb[0].mxu0 %v1101
        %v1266 = vpop.f32.mrb[0].mxu0
        %v1267 = vadd.f32 %v1143, %v1266
        %v1268 = vpop.f32.mrb[0].mxu0
        %1269 = vmatprep.mubr.f32.mxu0 0.0
        %1270 = vmatmul.mubr.f32.gmra.mrb[0].mxu0 %v1102
        %v1271 = vpop.f32.mrb[0].mxu0
        %v1272 = vadd.f32 %v1143, %v1271
        %v1273 = vpop.f32.mrb[0].mxu0
        %1274 = vmatprep.mubr.f32.mxu0 0.0
        %1275 = vmatmul.mubr.f32.gmra.mrb[0].mxu0 %v1103
        %v1276 = vpop.f32.mrb[0].mxu0
        %v1277 = vadd.f32 %v1143, %v1276
        %v1278 = vpop.f32.mrb[0].mxu0
        %1279 = vmatprep.mubr.f32.mxu0 0.0
        %1280 = vmatmul.mubr.f32.gmra.mrb[0].mxu0 %v1104
        %v1281 = vpop.f32.mrb[0].mxu0
        %v1282 = vadd.f32 %v1143, %v1281
        %v1283 = vpop.f32.mrb[0].mxu0
        %1284 = vmatprep.mubr.f32.mxu0 0.0
        %1285 = vmatmul.mubr.f32.gmra.mrb[0].mxu0 %v1105
        %v1286 = vpop.f32.mrb[0].mxu0
        %v1287 = vadd.f32 %v1143, %v1286
        %v1288 = vpop.f32.mrb[0].mxu0
        %1289 = vmatprep.mubr.f32.mxu0 0.0
        %1290 = vmatmul.mubr.f32.gmra.mrb[0].mxu0 %v1106
        %v1291 = vpop.f32.mrb[0].mxu0
        %v1292 = vadd.f32 %v1143, %v1291
        %v1293 = vpop.f32.mrb[0].mxu0
        %1294 = vmatprep.mubr.f32.mxu0 0.0
        %1295 = vmatmul.mubr.f32.gmra.mrb[0].mxu0 %v1107
        %v1296 = vpop.f32.mrb[0].mxu0
        %v1297 = vadd.f32 %v1143, %v1296
        %v1298 = vpop.f32.mrb[0].mxu0
        %1299 = vmatprep.mubr.f32.mxu0 0.0
        %1300 = vmatmul.mubr.f32.gmra.mrb[0].mxu0 %v1108
        %v1301 = vpop.f32.mrb[0].mxu0
        %v1302 = vadd.f32 %v1143, %v1301
        %v1303 = vpop.f32.mrb[0].mxu0
        %1304 = vmatprep.mubr.f32.mxu0 0.0
        %1305 = vmatmul.mubr.f32.gmra.mrb[0].mxu0 %v1109
        %v1306 = vpop.f32.mrb[0].mxu0
        %v1307 = vadd.f32 %v1143, %v1306
        %v1308 = vpop.f32.mrb[0].mxu0
        %1309 = vmatprep.mubr.f32.mxu0 0.0
        %1310 = vmatmul.mubr.f32.gmra.mrb[0].mxu0 %v1110
        %v1311 = vpop.f32.mrb[0].mxu0
        %v1312 = vadd.f32 %v1143, %v1311
        %v1313 = vpop.f32.mrb[0].mxu0
        %1314 = vmatprep.mubr.f32.mxu0 0.0
        %1315 = vmatmul.mubr.f32.gmra.mrb[0].mxu0 %v1111
        %v1316 = vpop.f32.mrb[0].mxu0
        %v1317 = vadd.f32 %v1143, %v1316
        %v1318 = vpop.f32.mrb[0].mxu0
        %1319 = vmatprep.mubr.f32.mxu0 0.0
        %1320 = vmatmul.mubr.f32.gmra.mrb[0].mxu0 %v1112
        %v1321 = vpop.f32.mrb[0].mxu0
        %v1322 = vadd.f32 %v1143, %v1321
        %v1323 = vpop.f32.mrb[0].mxu0
        %1324 = vmatprep.mubr.f32.mxu0 0.0
        %1325 = vmatmul.mubr.f32.gmra.mrb[0].mxu0 %v1113
        %v1326 = vpop.f32.mrb[0].mxu0
        %v1327 = vadd.f32 %v1143, %v1326
        %v1328 = vpop.f32.mrb[0].mxu0
        %1329 = vmatprep.mubr.f32.mxu0 0.0
        %1330 = vmatmul.mubr.f32.gmra.mrb[0].mxu0 %v1114
        %v1331 = vpop.f32.mrb[0].mxu0
        %v1332 = vadd.f32 %v1143, %v1331
        %v1333 = vpop.f32.mrb[0].mxu0
        %1334 = vmatprep.mubr.f32.mxu0 0.0
        %1335 = vmatmul.mubr.f32.gmra.mrb[0].mxu0 %v1115
        %v1336 = vpop.f32.mrb[0].mxu0
        %v1337 = vadd.f32 %v1143, %v1336
        %v1338 = vpop.f32.mrb[0].mxu0
        %1339 = vmatprep.mubr.f32.mxu0 0.0
        %1340 = vmatmul.mubr.f32.gmra.mrb[0].mxu0 %v1116
        %v1341 = vpop.f32.mrb[0].mxu0
        %v1342 = vadd.f32 %v1143, %v1341
        %v1343 = vpop.f32.mrb[0].mxu0
        %1344 = vmatprep.mubr.f32.mxu0 0.0
        %1345 = vmatmul.mubr.f32.gmra.mrb[0].mxu0 %v1117
        %v1346 = vpop.f32.mrb[0].mxu0
        %v1347 = vadd.f32 %v1143, %v1346
        %v1348 = vpop.f32.mrb[0].mxu0
        %1349 = vmatprep.mubr.f32.mxu0 0.0
        %1350 = vmatmul.mubr.f32.gmra.mrb[0].mxu0 %v1118
        %v1351 = vpop.f32.mrb[0].mxu0
        %v1352 = vadd.f32 %v1143, %v1351
        %v1353 = vpop.f32.mrb[0].mxu0
        %1354 = vmatprep.mubr.f32.mxu0 0.0
        %1355 = vmatmul.mubr.f32.gmra.mrb[0].mxu0 %v1119
        %v1356 = vpop.f32.mrb[0].mxu0
        %v1357 = vadd.f32 %v1143, %v1356
        %v1358 = vpop.f32.mrb[0].mxu0
        %1359 = vmatprep.mubr.f32.mxu0 0.0
        %1360 = vmatmul.mubr.f32.gmra.mrb[0].mxu0 %v1120
        %v1361 = vpop.f32.mrb[0].mxu0
        %v1362 = vadd.f32 %v1143, %v1361
        %v1363 = vpop.f32.mrb[0].mxu0
        %1364 = vmatprep.mubr.f32.mxu0 0.0
        %1365 = vmatmul.mubr.f32.gmra.mrb[0].mxu0 %v1121
        %v1366 = vpop.f32.mrb[0].mxu0
        %v1367 = vadd.f32 %v1143, %v1366
        %v1368 = vpop.f32.mrb[0].mxu0
        %1369 = vdwg.mxu0
        %v1370 = vmax.f32 %v1212, %v1217
        %v1371 = vrot.slane %v1370, 4
        %v1372 = vmax.f32 %v1370, %v1371
        %v1373 = vrot.slane %v1372, 2
        %v1374 = vmax.f32 %v1372, %v1373
        %v1375 = vrot.slane %v1374, 1
        %v1376 = vmax.f32 %v1374, %v1375
        %v1377 = vmax.f32 %v1222, %v1227
        %v1378 = vrot.slane %v1377, 4
        %v1379 = vmax.f32 %v1377, %v1378
        %v1380 = vrot.slane %v1379, 2
        %v1381 = vmax.f32 %v1379, %v1380
        %v1382 = vrot.slane %v1381, 1
        %v1383 = vmax.f32 %v1381, %v1382
        %v1384 = vmax.f32 %v1232, %v1237
        %v1385 = vrot.slane %v1384, 4
        %v1386 = vmax.f32 %v1384, %v1385
        %v1387 = vrot.slane %v1386, 2
        %v1388 = vmax.f32 %v1386, %v1387
        %v1389 = vrot.slane %v1388, 1
        %v1390 = vmax.f32 %v1388, %v1389
        %v1391 = vmax.f32 %v1242, %v1247
        %v1392 = vrot.slane %v1391, 4
        %v1393 = vmax.f32 %v1391, %v1392
        %v1394 = vrot.slane %v1393, 2
        %v1395 = vmax.f32 %v1393, %v1394
        %v1396 = vrot.slane %v1395, 1
        %v1397 = vmax.f32 %v1395, %v1396
        %v1398 = vmax.f32 %v1252, %v1257
        %v1399 = vrot.slane %v1398, 4
        %v1400 = vmax.f32 %v1398, %v1399
        %v1401 = vrot.slane %v1400, 2
        %v1402 = vmax.f32 %v1400, %v1401
        %v1403 = vrot.slane %v1402, 1
        %v1404 = vmax.f32 %v1402, %v1403
        %v1405 = vmax.f32 %v1262, %v1267
        %v1406 = vrot.slane %v1405, 4
        %v1407 = vmax.f32 %v1405, %v1406
        %v1408 = vrot.slane %v1407, 2
        %v1409 = vmax.f32 %v1407, %v1408
        %v1410 = vrot.slane %v1409, 1
        %v1411 = vmax.f32 %v1409, %v1410
        %v1412 = vmax.f32 %v1272, %v1277
        %v1413 = vrot.slane %v1412, 4
        %v1414 = vmax.f32 %v1412, %v1413
        %v1415 = vrot.slane %v1414, 2
        %v1416 = vmax.f32 %v1414, %v1415
        %v1417 = vrot.slane %v1416, 1
        %v1418 = vmax.f32 %v1416, %v1417
        %v1419 = vmax.f32 %v1282, %v1287
        %v1420 = vrot.slane %v1419, 4
        %v1421 = vmax.f32 %v1419, %v1420
        %v1422 = vrot.slane %v1421, 2
        %v1423 = vmax.f32 %v1421, %v1422
        %v1424 = vrot.slane %v1423, 1
        %v1425 = vmax.f32 %v1423, %v1424
        %v1426 = vmax.f32 %v1292, %v1297
        %v1427 = vrot.slane %v1426, 4
        %v1428 = vmax.f32 %v1426, %v1427
        %v1429 = vrot.slane %v1428, 2
        %v1430 = vmax.f32 %v1428, %v1429
        %v1431 = vrot.slane %v1430, 1
        %v1432 = vmax.f32 %v1430, %v1431
        %v1433 = vmax.f32 %v1302, %v1307
        %v1434 = vrot.slane %v1433, 4
        %v1435 = vmax.f32 %v1433, %v1434
        %v1436 = vrot.slane %v1435, 2
        %v1437 = vmax.f32 %v1435, %v1436
        %v1438 = vrot.slane %v1437, 1
        %v1439 = vmax.f32 %v1437, %v1438
        %v1440 = vmax.f32 %v1312, %v1317
        %v1441 = vrot.slane %v1440, 4
        %v1442 = vmax.f32 %v1440, %v1441
        %v1443 = vrot.slane %v1442, 2
        %v1444 = vmax.f32 %v1442, %v1443
        %v1445 = vrot.slane %v1444, 1
        %v1446 = vmax.f32 %v1444, %v1445
        %v1447 = vmax.f32 %v1322, %v1327
        %v1448 = vrot.slane %v1447, 4
        %v1449 = vmax.f32 %v1447, %v1448
        %v1450 = vrot.slane %v1449, 2
        %v1451 = vmax.f32 %v1449, %v1450
        %v1452 = vrot.slane %v1451, 1
        %v1453 = vmax.f32 %v1451, %v1452
        %v1454 = vmax.f32 %v1332, %v1337
        %v1455 = vrot.slane %v1454, 4
        %v1456 = vmax.f32 %v1454, %v1455
        %v1457 = vrot.slane %v1456, 2
        %v1458 = vmax.f32 %v1456, %v1457
        %v1459 = vrot.slane %v1458, 1
        %v1460 = vmax.f32 %v1458, %v1459
        %v1461 = vmax.f32 %v1342, %v1347
        %v1462 = vrot.slane %v1461, 4
        %v1463 = vmax.f32 %v1461, %v1462
        %v1464 = vrot.slane %v1463, 2
        %v1465 = vmax.f32 %v1463, %v1464
        %v1466 = vrot.slane %v1465, 1
        %v1467 = vmax.f32 %v1465, %v1466
        %v1468 = vmax.f32 %v1352, %v1357
        %v1469 = vrot.slane %v1468, 4
        %v1470 = vmax.f32 %v1468, %v1469
        %v1471 = vrot.slane %v1470, 2
        %v1472 = vmax.f32 %v1470, %v1471
        %v1473 = vrot.slane %v1472, 1
        %v1474 = vmax.f32 %v1472, %v1473
        %v1475 = vmax.f32 %v1362, %v1367
        %v1476 = vrot.slane %v1475, 4
        %v1477 = vmax.f32 %v1475, %v1476
        %v1478 = vrot.slane %v1477, 2
        %v1479 = vmax.f32 %v1477, %v1478
        %v1480 = vrot.slane %v1479, 1
        %v1481 = vmax.f32 %v1479, %v1480
        %v1482 = vmax.f32 %v1212, 0.0
        %v1483 = vmax.f32 %v1217, 0.0
        %v1484 = vmax.f32 %v1222, 0.0
        %v1485 = vmax.f32 %v1227, 0.0
        %v1486 = vmax.f32 %v1232, 0.0
        %v1487 = vmax.f32 %v1237, 0.0
        %v1488 = vmax.f32 %v1242, 0.0
        %v1489 = vmax.f32 %v1247, 0.0
        %v1490 = vmax.f32 %v1252, 0.0
        %v1491 = vmax.f32 %v1257, 0.0
        %v1492 = vmax.f32 %v1262, 0.0
        %v1493 = vmax.f32 %v1267, 0.0
        %v1494 = vmax.f32 %v1272, 0.0
        %v1495 = vmax.f32 %v1277, 0.0
        %v1496 = vmax.f32 %v1282, 0.0
        %v1497 = vmax.f32 %v1287, 0.0
        %v1498 = vmax.f32 %v1292, 0.0
        %v1499 = vmax.f32 %v1297, 0.0
        %v1500 = vmax.f32 %v1302, 0.0
        %v1501 = vmax.f32 %v1307, 0.0
        %v1502 = vmax.f32 %v1312, 0.0
        %v1503 = vmax.f32 %v1317, 0.0
        %v1504 = vmax.f32 %v1322, 0.0
        %v1505 = vmax.f32 %v1327, 0.0
        %v1506 = vmax.f32 %v1332, 0.0
        %v1507 = vmax.f32 %v1337, 0.0
        %v1508 = vmax.f32 %v1342, 0.0
        %v1509 = vmax.f32 %v1347, 0.0
        %v1510 = vmax.f32 %v1352, 0.0
        %v1511 = vmax.f32 %v1357, 0.0
        %v1512 = vmax.f32 %v1362, 0.0
        %v1513 = vmax.f32 %v1367, 0.0
        %v1514 = vmax.f32 %v1376, 0.0
        %v1515 = vmax.f32 %v1383, 0.0
        %v1516 = vmax.f32 %v1390, 0.0
        %v1517 = vmax.f32 %v1397, 0.0
        %v1518 = vmax.f32 %v1404, 0.0
        %v1519 = vmax.f32 %v1411, 0.0
        %v1520 = vmax.f32 %v1418, 0.0
        %v1521 = vmax.f32 %v1425, 0.0
        %v1522 = vmax.f32 %v1432, 0.0
        %v1523 = vmax.f32 %v1439, 0.0
        %v1524 = vmax.f32 %v1446, 0.0
        %v1525 = vmax.f32 %v1453, 0.0
        %v1526 = vmax.f32 %v1460, 0.0
        %v1527 = vmax.f32 %v1467, 0.0
        %v1528 = vmax.f32 %v1474, 0.0
        %v1529 = vmax.f32 %v1481, 0.0
        %v1530 = vld [vmem:[%s5] sm:$0xff]
        %v1531 = vld [vmem:[%s5 + $0x8] sm:$0xff]
        %v1532 = vld [vmem:[%s5 + $0x10] sm:$0xff]
        %v1533 = vld [vmem:[%s5 + $0x18] sm:$0xff]
        %v1534 = vld [vmem:[%s5 + $0x20] sm:$0xff]
        %v1535 = vld [vmem:[%s5 + $0x28] sm:$0xff]
        %v1536 = vld [vmem:[%s5 + $0x30] sm:$0xff]
        %v1537 = vld [vmem:[%s5 + $0x38] sm:$0xff]
        %v1538 = vld [vmem:[%s5 + $0x40] sm:$0xff]
        %v1539 = vld [vmem:[%s5 + $0x48] sm:$0xff]
        %v1540 = vld [vmem:[%s5 + $0x50] sm:$0xff]
        %v1541 = vld [vmem:[%s5 + $0x58] sm:$0xff]
        %v1542 = vld [vmem:[%s5 + $0x60] sm:$0xff]
        %v1543 = vld [vmem:[%s5 + $0x68] sm:$0xff]
        %v1544 = vld [vmem:[%s5 + $0x70] sm:$0xff]
        %v1545 = vld [vmem:[%s5 + $0x78] sm:$0xff]
        %1546 = vmatprep.subr.mxu0 0.0
        %1547 = vmatpush1.msra.mxu0 %v1530
        %1548 = vmatprep.subr.mxu0 0.0
        %1549 = vmatpush1.msra.mxu0 %v1531
        %1550 = vmatprep.subr.mxu0 0.0
        %1551 = vmatpush1.msra.mxu0 %v1532
        %1552 = vmatprep.subr.mxu0 0.0
        %1553 = vmatpush1.msra.mxu0 %v1533
        %1554 = vmatprep.subr.mxu0 0.0
        %1555 = vmatpush1.msra.mxu0 %v1534
        %1556 = vmatprep.subr.mxu0 0.0
        %1557 = vmatpush1.msra.mxu0 %v1535
        %1558 = vmatprep.subr.mxu0 0.0
        %1559 = vmatpush1.msra.mxu0 %v1536
        %1560 = vmatprep.subr.mxu0 0.0
        %1561 = vmatpush1.msra.mxu0 %v1537
        %1562 = vmatprep.subr.mxu0 0.0
        %1563 = vmatpush1.msra.mxu0 %v1538
        %1564 = vmatprep.subr.mxu0 0.0
        %1565 = vmatpush1.msra.mxu0 %v1539
        %1566 = vmatprep.subr.mxu0 0.0
        %1567 = vmatpush1.msra.mxu0 %v1540
        %1568 = vmatprep.subr.mxu0 0.0
        %1569 = vmatpush1.msra.mxu0 %v1541
        %1570 = vmatprep.subr.mxu0 0.0
        %1571 = vmatpush1.msra.mxu0 %v1542
        %1572 = vmatprep.subr.mxu0 0.0
        %1573 = vmatpush1.msra.mxu0 %v1543
        %1574 = vmatprep.subr.mxu0 0.0
        %1575 = vmatpush1.msra.mxu0 %v1544
        %1576 = vmatprep.subr.mxu0 0.0
        %1577 = vmatpush1.msra.mxu0 %v1545
        %1578 = vmatprep.subr.mxu0 0.0
        %1579 = vmatpush1.msra.mxu0 0.0
        %1580 = vmatprep.subr.mxu0 0.0
        %1581 = vmatpush1.msra.mxu0 0.0
        %1582 = vmatprep.subr.mxu0 0.0
        %1583 = vmatpush1.msra.mxu0 0.0
        %1584 = vmatprep.subr.mxu0 0.0
        %1585 = vmatpush1.msra.mxu0 0.0
        %1586 = vmatprep.subr.mxu0 0.0
        %1587 = vmatpush1.msra.mxu0 0.0
        %1588 = vmatprep.subr.mxu0 0.0
        %1589 = vmatpush1.msra.mxu0 0.0
        %1590 = vmatprep.subr.mxu0 0.0
        %1591 = vmatpush1.msra.mxu0 0.0
        %1592 = vmatprep.subr.mxu0 0.0
        %1593 = vmatpush1.msra.mxu0 0.0
        %1594 = vmatprep.subr.mxu0 0.0
        %1595 = vmatpush1.msra.mxu0 0.0
        %1596 = vmatprep.subr.mxu0 0.0
        %1597 = vmatpush1.msra.mxu0 0.0
        %1598 = vmatprep.subr.mxu0 0.0
        %1599 = vmatpush1.msra.mxu0 0.0
        %1600 = vmatprep.subr.mxu0 0.0
        %1601 = vmatpush1.msra.mxu0 0.0
        %1602 = vmatprep.subr.mxu0 0.0
        %1603 = vmatpush1.msra.mxu0 0.0
        %1604 = vmatprep.subr.mxu0 0.0
        %1605 = vmatpush1.msra.mxu0 0.0
        %1606 = vmatprep.subr.mxu0 0.0
        %1607 = vmatpush1.msra.mxu0 0.0
        %1608 = vmatprep.subr.mxu0 0.0
        %1609 = vmatpush1.msra.mxu0 0.0
        %1610 = vmatprep.mubr.f32.mxu0 0.0
        %1611 = vmatmul.mubr.f32.gmra.mrb[0].mxu0 %v1482
        %v1612 = vpop.f32.mrb[0].mxu0
        %v1613 = vadd.f32 0.0, %v1612
        %v1614 = vpop.f32.mrb[0].mxu0
        %1615 = vmatprep.mubr.f32.mxu0 0.0
        %1616 = vmatmul.mubr.f32.gmra.mrb[0].mxu0 %v1483
        %v1617 = vpop.f32.mrb[0].mxu0
        %v1618 = vadd.f32 0.0, %v1617
        %v1619 = vpop.f32.mrb[0].mxu0
        %1620 = vmatprep.mubr.f32.mxu0 0.0
        %1621 = vmatmul.mubr.f32.gmra.mrb[0].mxu0 %v1484
        %v1622 = vpop.f32.mrb[0].mxu0
        %v1623 = vadd.f32 0.0, %v1622
        %v1624 = vpop.f32.mrb[0].mxu0
        %1625 = vmatprep.mubr.f32.mxu0 0.0
        %1626 = vmatmul.mubr.f32.gmra.mrb[0].mxu0 %v1485
        %v1627 = vpop.f32.mrb[0].mxu0
        %v1628 = vadd.f32 0.0, %v1627
        %v1629 = vpop.f32.mrb[0].mxu0
        %1630 = vmatprep.mubr.f32.mxu0 0.0
        %1631 = vmatmul.mubr.f32.gmra.mrb[0].mxu0 %v1486
        %v1632 = vpop.f32.mrb[0].mxu0
        %v1633 = vadd.f32 0.0, %v1632
        %v1634 = vpop.f32.mrb[0].mxu0
        %1635 = vmatprep.mubr.f32.mxu0 0.0
        %1636 = vmatmul.mubr.f32.gmra.mrb[0].mxu0 %v1487
        %v1637 = vpop.f32.mrb[0].mxu0
        %v1638 = vadd.f32 0.0, %v1637
        %v1639 = vpop.f32.mrb[0].mxu0
        %1640 = vmatprep.mubr.f32.mxu0 0.0
        %1641 = vmatmul.mubr.f32.gmra.mrb[0].mxu0 %v1488
        %v1642 = vpop.f32.mrb[0].mxu0
        %v1643 = vadd.f32 0.0, %v1642
        %v1644 = vpop.f32.mrb[0].mxu0
        %1645 = vmatprep.mubr.f32.mxu0 0.0
        %1646 = vmatmul.mubr.f32.gmra.mrb[0].mxu0 %v1489
        %v1647 = vpop.f32.mrb[0].mxu0
        %v1648 = vadd.f32 0.0, %v1647
        %v1649 = vpop.f32.mrb[0].mxu0
        %1650 = vmatprep.mubr.f32.mxu0 0.0
        %1651 = vmatmul.mubr.f32.gmra.mrb[0].mxu0 %v1490
        %v1652 = vpop.f32.mrb[0].mxu0
        %v1653 = vadd.f32 0.0, %v1652
        %v1654 = vpop.f32.mrb[0].mxu0
        %1655 = vmatprep.mubr.f32.mxu0 0.0
        %1656 = vmatmul.mubr.f32.gmra.mrb[0].mxu0 %v1491
        %v1657 = vpop.f32.mrb[0].mxu0
        %v1658 = vadd.f32 0.0, %v1657
        %v1659 = vpop.f32.mrb[0].mxu0
        %1660 = vmatprep.mubr.f32.mxu0 0.0
        %1661 = vmatmul.mubr.f32.gmra.mrb[0].mxu0 %v1492
        %v1662 = vpop.f32.mrb[0].mxu0
        %v1663 = vadd.f32 0.0, %v1662
        %v1664 = vpop.f32.mrb[0].mxu0
        %1665 = vmatprep.mubr.f32.mxu0 0.0
        %1666 = vmatmul.mubr.f32.gmra.mrb[0].mxu0 %v1493
        %v1667 = vpop.f32.mrb[0].mxu0
        %v1668 = vadd.f32 0.0, %v1667
        %v1669 = vpop.f32.mrb[0].mxu0
        %1670 = vmatprep.mubr.f32.mxu0 0.0
        %1671 = vmatmul.mubr.f32.gmra.mrb[0].mxu0 %v1494
        %v1672 = vpop.f32.mrb[0].mxu0
        %v1673 = vadd.f32 0.0, %v1672
        %v1674 = vpop.f32.mrb[0].mxu0
        %1675 = vmatprep.mubr.f32.mxu0 0.0
        %1676 = vmatmul.mubr.f32.gmra.mrb[0].mxu0 %v1495
        %v1677 = vpop.f32.mrb[0].mxu0
        %v1678 = vadd.f32 0.0, %v1677
        %v1679 = vpop.f32.mrb[0].mxu0
        %1680 = vmatprep.mubr.f32.mxu0 0.0
        %1681 = vmatmul.mubr.f32.gmra.mrb[0].mxu0 %v1496
        %v1682 = vpop.f32.mrb[0].mxu0
        %v1683 = vadd.f32 0.0, %v1682
        %v1684 = vpop.f32.mrb[0].mxu0
        %1685 = vmatprep.mubr.f32.mxu0 0.0
        %1686 = vmatmul.mubr.f32.gmra.mrb[0].mxu0 %v1497
        %v1687 = vpop.f32.mrb[0].mxu0
        %v1688 = vadd.f32 0.0, %v1687
        %v1689 = vpop.f32.mrb[0].mxu0
        %1690 = vmatprep.mubr.f32.mxu0 0.0
        %1691 = vmatmul.mubr.f32.gmra.mrb[0].mxu0 %v1498
        %v1692 = vpop.f32.mrb[0].mxu0
        %v1693 = vadd.f32 0.0, %v1692
        %v1694 = vpop.f32.mrb[0].mxu0
        %1695 = vmatprep.mubr.f32.mxu0 0.0
        %1696 = vmatmul.mubr.f32.gmra.mrb[0].mxu0 %v1499
        %v1697 = vpop.f32.mrb[0].mxu0
        %v1698 = vadd.f32 0.0, %v1697
        %v1699 = vpop.f32.mrb[0].mxu0
        %1700 = vmatprep.mubr.f32.mxu0 0.0
        %1701 = vmatmul.mubr.f32.gmra.mrb[0].mxu0 %v1500
        %v1702 = vpop.f32.mrb[0].mxu0
        %v1703 = vadd.f32 0.0, %v1702
        %v1704 = vpop.f32.mrb[0].mxu0
        %1705 = vmatprep.mubr.f32.mxu0 0.0
        %1706 = vmatmul.mubr.f32.gmra.mrb[0].mxu0 %v1501
        %v1707 = vpop.f32.mrb[0].mxu0
        %v1708 = vadd.f32 0.0, %v1707
        %v1709 = vpop.f32.mrb[0].mxu0
        %1710 = vmatprep.mubr.f32.mxu0 0.0
        %1711 = vmatmul.mubr.f32.gmra.mrb[0].mxu0 %v1502
        %v1712 = vpop.f32.mrb[0].mxu0
        %v1713 = vadd.f32 0.0, %v1712
        %v1714 = vpop.f32.mrb[0].mxu0
        %1715 = vmatprep.mubr.f32.mxu0 0.0
        %1716 = vmatmul.mubr.f32.gmra.mrb[0].mxu0 %v1503
        %v1717 = vpop.f32.mrb[0].mxu0
        %v1718 = vadd.f32 0.0, %v1717
        %v1719 = vpop.f32.mrb[0].mxu0
        %1720 = vmatprep.mubr.f32.mxu0 0.0
        %1721 = vmatmul.mubr.f32.gmra.mrb[0].mxu0 %v1504
        %v1722 = vpop.f32.mrb[0].mxu0
        %v1723 = vadd.f32 0.0, %v1722
        %v1724 = vpop.f32.mrb[0].mxu0
        %1725 = vmatprep.mubr.f32.mxu0 0.0
        %1726 = vmatmul.mubr.f32.gmra.mrb[0].mxu0 %v1505
        %v1727 = vpop.f32.mrb[0].mxu0
        %v1728 = vadd.f32 0.0, %v1727
        %v1729 = vpop.f32.mrb[0].mxu0
        %1730 = vmatprep.mubr.f32.mxu0 0.0
        %1731 = vmatmul.mubr.f32.gmra.mrb[0].mxu0 %v1506
        %v1732 = vpop.f32.mrb[0].mxu0
        %v1733 = vadd.f32 0.0, %v1732
        %v1734 = vpop.f32.mrb[0].mxu0
        %1735 = vmatprep.mubr.f32.mxu0 0.0
        %1736 = vmatmul.mubr.f32.gmra.mrb[0].mxu0 %v1507
        %v1737 = vpop.f32.mrb[0].mxu0
        %v1738 = vadd.f32 0.0, %v1737
        %v1739 = vpop.f32.mrb[0].mxu0
        %1740 = vmatprep.mubr.f32.mxu0 0.0
        %1741 = vmatmul.mubr.f32.gmra.mrb[0].mxu0 %v1508
        %v1742 = vpop.f32.mrb[0].mxu0
        %v1743 = vadd.f32 0.0, %v1742
        %v1744 = vpop.f32.mrb[0].mxu0
        %1745 = vmatprep.mubr.f32.mxu0 0.0
        %1746 = vmatmul.mubr.f32.gmra.mrb[0].mxu0 %v1509
        %v1747 = vpop.f32.mrb[0].mxu0
        %v1748 = vadd.f32 0.0, %v1747
        %v1749 = vpop.f32.mrb[0].mxu0
        %1750 = vmatprep.mubr.f32.mxu0 0.0
        %1751 = vmatmul.mubr.f32.gmra.mrb[0].mxu0 %v1510
        %v1752 = vpop.f32.mrb[0].mxu0
        %v1753 = vadd.f32 0.0, %v1752
        %v1754 = vpop.f32.mrb[0].mxu0
        %1755 = vmatprep.mubr.f32.mxu0 0.0
        %1756 = vmatmul.mubr.f32.gmra.mrb[0].mxu0 %v1511
        %v1757 = vpop.f32.mrb[0].mxu0
        %v1758 = vadd.f32 0.0, %v1757
        %v1759 = vpop.f32.mrb[0].mxu0
        %1760 = vmatprep.mubr.f32.mxu0 0.0
        %1761 = vmatmul.mubr.f32.gmra.mrb[0].mxu0 %v1512
        %v1762 = vpop.f32.mrb[0].mxu0
        %v1763 = vadd.f32 0.0, %v1762
        %v1764 = vpop.f32.mrb[0].mxu0
        %1765 = vmatprep.mubr.f32.mxu0 0.0
        %1766 = vmatmul.mubr.f32.gmra.mrb[0].mxu0 %v1513
        %v1767 = vpop.f32.mrb[0].mxu0
        %v1768 = vadd.f32 0.0, %v1767
        %v1769 = vpop.f32.mrb[0].mxu0
        %1770 = vdwg.mxu0
        %v1771 = vld [vmem:[#allocation5] sm:$0xff]
        %v1772 = vld [vmem:[#allocation5 + $0x8] sm:$0xff]
        %v1773 = vld [vmem:[#allocation5 + $0x10] sm:$0xff]
        %v1774 = vld [vmem:[#allocation5 + $0x18] sm:$0xff]
        %v1775 = vld [vmem:[#allocation5 + $0x20] sm:$0xff]
        %v1776 = vld [vmem:[#allocation5 + $0x28] sm:$0xff]
        %v1777 = vld [vmem:[#allocation5 + $0x30] sm:$0xff]
        %v1778 = vld [vmem:[#allocation5 + $0x38] sm:$0xff]
        %v1779 = vld [vmem:[#allocation5 + $0x40] sm:$0xff]
        %v1780 = vld [vmem:[#allocation5 + $0x48] sm:$0xff]
        %v1781 = vld [vmem:[#allocation5 + $0x50] sm:$0xff]
        %v1782 = vld [vmem:[#allocation5 + $0x58] sm:$0xff]
        %v1783 = vld [vmem:[#allocation5 + $0x60] sm:$0xff]
        %v1784 = vld [vmem:[#allocation5 + $0x68] sm:$0xff]
        %v1785 = vld [vmem:[#allocation5 + $0x70] sm:$0xff]
        %v1786 = vld [vmem:[#allocation5 + $0x78] sm:$0xff]
        %vm1803 = vcmask 1041409
        %v1804 = vsel %vm1803, %v1515, %v1514
        %vm1805 = vcmask 1042434
        %v1806 = vsel %vm1805, %v1516, %v1804
        %vm1807 = vcmask 1043459
        %v1808 = vsel %vm1807, %v1517, %v1806
        %vm1809 = vcmask 1044484
        %v1810 = vsel %vm1809, %v1518, %v1808
        %vm1811 = vcmask 1045509
        %v1812 = vsel %vm1811, %v1519, %v1810
        %vm1813 = vcmask 1046534
        %v1814 = vsel %vm1813, %v1520, %v1812
        %vm1815 = vcmask 1047559
        %v1816 = vsel %vm1815, %v1521, %v1814
        %v1817 = vsel %vm1803, %v1523, %v1522
        %v1818 = vsel %vm1805, %v1524, %v1817
        %v1819 = vsel %vm1807, %v1525, %v1818
        %v1820 = vsel %vm1809, %v1526, %v1819
        %v1821 = vsel %vm1811, %v1527, %v1820
        %v1822 = vsel %vm1813, %v1528, %v1821
        %v1823 = vsel %vm1815, %v1529, %v1822
        %1826 = vmatprep.subr.mxu0 0.0
        %1827 = vmatpush1.msra.mxu0 %v1771
        %1828 = vmatprep.subr.mxu0 0.0
        %1829 = vmatpush1.msra.mxu0 %v1772
        %1830 = vmatprep.subr.mxu0 0.0
        %1831 = vmatpush1.msra.mxu0 %v1773
        %1832 = vmatprep.subr.mxu0 0.0
        %1833 = vmatpush1.msra.mxu0 %v1774
        %1834 = vmatprep.subr.mxu0 0.0
        %1835 = vmatpush1.msra.mxu0 %v1775
        %1836 = vmatprep.subr.mxu0 0.0
        %1837 = vmatpush1.msra.mxu0 %v1776
        %1838 = vmatprep.subr.mxu0 0.0
        %1839 = vmatpush1.msra.mxu0 %v1777
        %1840 = vmatprep.subr.mxu0 0.0
        %1841 = vmatpush1.msra.mxu0 %v1778
        %1842 = vmatprep.subr.mxu0 0.0
        %1843 = vmatpush1.msra.mxu0 %v1779
        %1844 = vmatprep.subr.mxu0 0.0
        %1845 = vmatpush1.msra.mxu0 %v1780
        %1846 = vmatprep.subr.mxu0 0.0
        %1847 = vmatpush1.msra.mxu0 %v1781
        %1848 = vmatprep.subr.mxu0 0.0
        %1849 = vmatpush1.msra.mxu0 %v1782
        %1850 = vmatprep.subr.mxu0 0.0
        %1851 = vmatpush1.msra.mxu0 %v1783
        %1852 = vmatprep.subr.mxu0 0.0
        %1853 = vmatpush1.msra.mxu0 %v1784
        %1854 = vmatprep.subr.mxu0 0.0
        %1855 = vmatpush1.msra.mxu0 %v1785
        %1856 = vmatprep.subr.mxu0 0.0
        %1857 = vmatpush1.msra.mxu0 %v1786
        %1858 = vmatprep.subr.mxu0 0.0
        %1859 = vmatpush1.msra.mxu0 0.0
        %1860 = vmatprep.subr.mxu0 0.0
        %1861 = vmatpush1.msra.mxu0 0.0
        %1862 = vmatprep.subr.mxu0 0.0
        %1863 = vmatpush1.msra.mxu0 0.0
        %1864 = vmatprep.subr.mxu0 0.0
        %1865 = vmatpush1.msra.mxu0 0.0
        %1866 = vmatprep.subr.mxu0 0.0
        %1867 = vmatpush1.msra.mxu0 0.0
        %1868 = vmatprep.subr.mxu0 0.0
        %1869 = vmatpush1.msra.mxu0 0.0
        %1870 = vmatprep.subr.mxu0 0.0
        %1871 = vmatpush1.msra.mxu0 0.0
        %1872 = vmatprep.subr.mxu0 0.0
        %1873 = vmatpush1.msra.mxu0 0.0
        %1874 = vmatprep.subr.mxu0 0.0
        %1875 = vmatpush1.msra.mxu0 0.0
        %1876 = vmatprep.subr.mxu0 0.0
        %1877 = vmatpush1.msra.mxu0 0.0
        %1878 = vmatprep.subr.mxu0 0.0
        %1879 = vmatpush1.msra.mxu0 0.0
        %1880 = vmatprep.subr.mxu0 0.0
        %1881 = vmatpush1.msra.mxu0 0.0
        %1882 = vmatprep.subr.mxu0 0.0
        %1883 = vmatpush1.msra.mxu0 0.0
        %1884 = vmatprep.subr.mxu0 0.0
        %1885 = vmatpush1.msra.mxu0 0.0
        %1886 = vmatprep.subr.mxu0 0.0
        %1887 = vmatpush1.msra.mxu0 0.0
        %1888 = vmatprep.subr.mxu0 0.0
        %1889 = vmatpush1.msra.mxu0 0.0
        %1890 = vmatprep.mubr.f32.mxu0 0.0
        %1891 = vmatmul.mubr.f32.gmra.mrb[0].mxu0 %v1816
        %v1892 = vpop.f32.mrb[0].mxu0
        %v1893 = vadd.f32 0.0, %v1892
        %v1894 = vpop.f32.mrb[0].mxu0
        %1895 = vmatprep.mubr.f32.mxu0 0.0
        %1896 = vmatmul.mubr.f32.gmra.mrb[0].mxu0 %v1823
        %v1897 = vpop.f32.mrb[0].mxu0
        %v1898 = vadd.f32 0.0, %v1897
        %v1899 = vpop.f32.mrb[0].mxu0
        %1900 = vdwg.mxu0
        %v1903 = vcombine.high %v1893, %v1893
        %v1905 = vunpack.c.l.s4 1966171168
        %v1906 = vunpack.c.0.s8 %v1905
        %v1907 = vlaneseq
        %v1908 = vshrl.u32 %v1907, 7
        %v1909 = vsub.s32 %v1906, %v1908
        %v1910 = vrot.slane %v1893, %v1909
        %v1912 = vunpack.c.l.s4 1966171168
        %v1913 = vunpack.c.0.s8 %v1912
        %v1914 = vlaneseq
        %v1915 = vshrl.u32 %v1914, 7
        %v1916 = vsub.s32 %v1913, %v1915
        %v1917 = vrot.slane %v1903, %v1916
        %v1918 = vcombine.high %v1910, %v1910
        %v1919 = vcombine.high %v1917, %v1917
        %v1921 = vunpack.c.l.s4 1966171168
        %v1922 = vunpack.c.0.s8 %v1921
        %v1923 = vlaneseq
        %v1924 = vshrl.u32 %v1923, 7
        %v1925 = vsub.s32 %v1922, %v1924
        %v1926 = vrot.slane %v1910, %v1925
        %v1928 = vunpack.c.l.s4 1966171168
        %v1929 = vunpack.c.0.s8 %v1928
        %v1930 = vlaneseq
        %v1931 = vshrl.u32 %v1930, 7
        %v1932 = vsub.s32 %v1929, %v1931
        %v1933 = vrot.slane %v1917, %v1932
        %v1935 = vunpack.c.l.s4 1966171168
        %v1936 = vunpack.c.0.s8 %v1935
        %v1937 = vlaneseq
        %v1938 = vshrl.u32 %v1937, 7
        %v1939 = vsub.s32 %v1936, %v1938
        %v1940 = vrot.slane %v1918, %v1939
        %v1942 = vunpack.c.l.s4 1966171168
        %v1943 = vunpack.c.0.s8 %v1942
        %v1944 = vlaneseq
        %v1945 = vshrl.u32 %v1944, 7
        %v1946 = vsub.s32 %v1943, %v1945
        %v1947 = vrot.slane %v1919, %v1946
        %v1948 = vcombine.high %v1926, %v1926
        %v1949 = vcombine.high %v1933, %v1933
        %v1950 = vcombine.high %v1940, %v1940
        %v1951 = vcombine.high %v1947, %v1947
        %v1952 = vcombine.high %v1898, %v1898
        %v1954 = vunpack.c.l.s4 1966171168
        %v1955 = vunpack.c.0.s8 %v1954
        %v1956 = vlaneseq
        %v1957 = vshrl.u32 %v1956, 7
        %v1958 = vsub.s32 %v1955, %v1957
        %v1959 = vrot.slane %v1898, %v1958
        %v1961 = vunpack.c.l.s4 1966171168
        %v1962 = vunpack.c.0.s8 %v1961
        %v1963 = vlaneseq
        %v1964 = vshrl.u32 %v1963, 7
        %v1965 = vsub.s32 %v1962, %v1964
        %v1966 = vrot.slane %v1952, %v1965
        %v1967 = vcombine.high %v1959, %v1959
        %v1968 = vcombine.high %v1966, %v1966
        %v1970 = vunpack.c.l.s4 1966171168
        %v1971 = vunpack.c.0.s8 %v1970
        %v1972 = vlaneseq
        %v1973 = vshrl.u32 %v1972, 7
        %v1974 = vsub.s32 %v1971, %v1973
        %v1975 = vrot.slane %v1959, %v1974
        %v1977 = vunpack.c.l.s4 1966171168
        %v1978 = vunpack.c.0.s8 %v1977
        %v1979 = vlaneseq
        %v1980 = vshrl.u32 %v1979, 7
        %v1981 = vsub.s32 %v1978, %v1980
        %v1982 = vrot.slane %v1966, %v1981
        %v1984 = vunpack.c.l.s4 1966171168
        %v1985 = vunpack.c.0.s8 %v1984
        %v1986 = vlaneseq
        %v1987 = vshrl.u32 %v1986, 7
        %v1988 = vsub.s32 %v1985, %v1987
        %v1989 = vrot.slane %v1967, %v1988
        %v1991 = vunpack.c.l.s4 1966171168
        %v1992 = vunpack.c.0.s8 %v1991
        %v1993 = vlaneseq
        %v1994 = vshrl.u32 %v1993, 7
        %v1995 = vsub.s32 %v1992, %v1994
        %v1996 = vrot.slane %v1968, %v1995
        %v1997 = vcombine.high %v1975, %v1975
        %v1998 = vcombine.high %v1982, %v1982
        %v1999 = vcombine.high %v1989, %v1989
        %v2000 = vcombine.high %v1996, %v1996
        %v2001 = vlaneseq
        %v2002 = vshrl.u32 %v2001, 7
        %v2003 = vsub.s32 0, %v2002
        %v2004 = vrot.slane %v1926, %v2003
        %v2005 = vlaneseq
        %v2006 = vshrl.u32 %v2005, 7
        %v2007 = vsub.s32 0, %v2006
        %v2008 = vrot.slane %v1940, %v2007
        %v2009 = vlaneseq
        %v2010 = vshrl.u32 %v2009, 7
        %v2011 = vsub.s32 0, %v2010
        %v2012 = vrot.slane %v1948, %v2011
        %v2013 = vlaneseq
        %v2014 = vshrl.u32 %v2013, 7
        %v2015 = vsub.s32 0, %v2014
        %v2016 = vrot.slane %v1950, %v2015
        %v2017 = vlaneseq
        %v2018 = vshrl.u32 %v2017, 7
        %v2019 = vsub.s32 0, %v2018
        %v2020 = vrot.slane %v1933, %v2019
        %v2021 = vlaneseq
        %v2022 = vshrl.u32 %v2021, 7
        %v2023 = vsub.s32 0, %v2022
        %v2024 = vrot.slane %v1947, %v2023
        %v2025 = vlaneseq
        %v2026 = vshrl.u32 %v2025, 7
        %v2027 = vsub.s32 0, %v2026
        %v2028 = vrot.slane %v1949, %v2027
        %v2029 = vlaneseq
        %v2030 = vshrl.u32 %v2029, 7
        %v2031 = vsub.s32 0, %v2030
        %v2032 = vrot.slane %v1951, %v2031
        %v2033 = vlaneseq
        %v2034 = vshrl.u32 %v2033, 7
        %v2035 = vsub.s32 0, %v2034
        %v2036 = vrot.slane %v1975, %v2035
        %v2037 = vlaneseq
        %v2038 = vshrl.u32 %v2037, 7
        %v2039 = vsub.s32 0, %v2038
        %v2040 = vrot.slane %v1989, %v2039
        %v2041 = vlaneseq
        %v2042 = vshrl.u32 %v2041, 7
        %v2043 = vsub.s32 0, %v2042
        %v2044 = vrot.slane %v1997, %v2043
        %v2045 = vlaneseq
        %v2046 = vshrl.u32 %v2045, 7
        %v2047 = vsub.s32 0, %v2046
        %v2048 = vrot.slane %v1999, %v2047
        %v2049 = vlaneseq
        %v2050 = vshrl.u32 %v2049, 7
        %v2051 = vsub.s32 0, %v2050
        %v2052 = vrot.slane %v1982, %v2051
        %v2053 = vlaneseq
        %v2054 = vshrl.u32 %v2053, 7
        %v2055 = vsub.s32 0, %v2054
        %v2056 = vrot.slane %v1996, %v2055
        %v2057 = vlaneseq
        %v2058 = vshrl.u32 %v2057, 7
        %v2059 = vsub.s32 0, %v2058
        %v2060 = vrot.slane %v1998, %v2059
        %v2061 = vlaneseq
        %v2062 = vshrl.u32 %v2061, 7
        %v2063 = vsub.s32 0, %v2062
        %v2064 = vrot.slane %v2000, %v2063
        %v2081 = vadd.f32 %v1613, %v2004
        %v2082 = vadd.f32 %v1618, %v2004
        %v2083 = vadd.f32 %v1623, %v2008
        %v2084 = vadd.f32 %v1628, %v2008
        %v2085 = vadd.f32 %v1633, %v2012
        %v2086 = vadd.f32 %v1638, %v2012
        %v2087 = vadd.f32 %v1643, %v2016
        %v2088 = vadd.f32 %v1648, %v2016
        %v2089 = vadd.f32 %v1653, %v2020
        %v2090 = vadd.f32 %v1658, %v2020
        %v2091 = vadd.f32 %v1663, %v2024
        %v2092 = vadd.f32 %v1668, %v2024
        %v2093 = vadd.f32 %v1673, %v2028
        %v2094 = vadd.f32 %v1678, %v2028
        %v2095 = vadd.f32 %v1683, %v2032
        %v2096 = vadd.f32 %v1688, %v2032
        %v2097 = vadd.f32 %v1693, %v2036
        %v2098 = vadd.f32 %v1698, %v2036
        %v2099 = vadd.f32 %v1703, %v2040
        %v2100 = vadd.f32 %v1708, %v2040
        %v2101 = vadd.f32 %v1713, %v2044
        %v2102 = vadd.f32 %v1718, %v2044
        %v2103 = vadd.f32 %v1723, %v2048
        %v2104 = vadd.f32 %v1728, %v2048
        %v2105 = vadd.f32 %v1733, %v2052
        %v2106 = vadd.f32 %v1738, %v2052
        %v2107 = vadd.f32 %v1743, %v2056
        %v2108 = vadd.f32 %v1748, %v2056
        %v2109 = vadd.f32 %v1753, %v2060
        %v2110 = vadd.f32 %v1758, %v2060
        %v2111 = vadd.f32 %v1763, %v2064
        %v2112 = vadd.f32 %v1768, %v2064
        %v2113 = vld [vmem:[%s7] sm:$0x1]
        %v2115 = vlaneseq
        %v2116 = vshrl.u32 %v2115, 7
        %v2117 = vsub.s32 0, %v2116
        %v2118 = vrot.slane %v2113, %v2117
        %v2120 = vadd.f32 %v2081, %v2118
        %v2121 = vadd.f32 %v2082, %v2118
        %v2122 = vadd.f32 %v2083, %v2118
        %v2123 = vadd.f32 %v2084, %v2118
        %v2124 = vadd.f32 %v2085, %v2118
        %v2125 = vadd.f32 %v2086, %v2118
        %v2126 = vadd.f32 %v2087, %v2118
        %v2127 = vadd.f32 %v2088, %v2118
        %v2128 = vadd.f32 %v2089, %v2118
        %v2129 = vadd.f32 %v2090, %v2118
        %v2130 = vadd.f32 %v2091, %v2118
        %v2131 = vadd.f32 %v2092, %v2118
        %v2132 = vadd.f32 %v2093, %v2118
        %v2133 = vadd.f32 %v2094, %v2118
        %v2134 = vadd.f32 %v2095, %v2118
        %v2135 = vadd.f32 %v2096, %v2118
        %v2136 = vadd.f32 %v2097, %v2118
        %v2137 = vadd.f32 %v2098, %v2118
        %v2138 = vadd.f32 %v2099, %v2118
        %v2139 = vadd.f32 %v2100, %v2118
        %v2140 = vadd.f32 %v2101, %v2118
        %v2141 = vadd.f32 %v2102, %v2118
        %v2142 = vadd.f32 %v2103, %v2118
        %v2143 = vadd.f32 %v2104, %v2118
        %v2144 = vadd.f32 %v2105, %v2118
        %v2145 = vadd.f32 %v2106, %v2118
        %v2146 = vadd.f32 %v2107, %v2118
        %v2147 = vadd.f32 %v2108, %v2118
        %v2148 = vadd.f32 %v2109, %v2118
        %v2149 = vadd.f32 %v2110, %v2118
        %v2150 = vadd.f32 %v2111, %v2118
        %v2151 = vadd.f32 %v2112, %v2118
        %v2152 = vmax.f32 %v2120, %v2121
        %v2153 = vrot.slane %v2152, 4
        %v2154 = vmax.f32 %v2152, %v2153
        %v2155 = vrot.slane %v2154, 2
        %v2156 = vmax.f32 %v2154, %v2155
        %v2157 = vrot.slane %v2156, 1
        %v2158 = vmax.f32 %v2156, %v2157
        %v2159 = vmax.f32 %v2122, %v2123
        %v2160 = vrot.slane %v2159, 4
        %v2161 = vmax.f32 %v2159, %v2160
        %v2162 = vrot.slane %v2161, 2
        %v2163 = vmax.f32 %v2161, %v2162
        %v2164 = vrot.slane %v2163, 1
        %v2165 = vmax.f32 %v2163, %v2164
        %v2166 = vmax.f32 %v2124, %v2125
        %v2167 = vrot.slane %v2166, 4
        %v2168 = vmax.f32 %v2166, %v2167
        %v2169 = vrot.slane %v2168, 2
        %v2170 = vmax.f32 %v2168, %v2169
        %v2171 = vrot.slane %v2170, 1
        %v2172 = vmax.f32 %v2170, %v2171
        %v2173 = vmax.f32 %v2126, %v2127
        %v2174 = vrot.slane %v2173, 4
        %v2175 = vmax.f32 %v2173, %v2174
        %v2176 = vrot.slane %v2175, 2
        %v2177 = vmax.f32 %v2175, %v2176
        %v2178 = vrot.slane %v2177, 1
        %v2179 = vmax.f32 %v2177, %v2178
        %v2180 = vmax.f32 %v2128, %v2129
        %v2181 = vrot.slane %v2180, 4
        %v2182 = vmax.f32 %v2180, %v2181
        %v2183 = vrot.slane %v2182, 2
        %v2184 = vmax.f32 %v2182, %v2183
        %v2185 = vrot.slane %v2184, 1
        %v2186 = vmax.f32 %v2184, %v2185
        %v2187 = vmax.f32 %v2130, %v2131
        %v2188 = vrot.slane %v2187, 4
        %v2189 = vmax.f32 %v2187, %v2188
        %v2190 = vrot.slane %v2189, 2
        %v2191 = vmax.f32 %v2189, %v2190
        %v2192 = vrot.slane %v2191, 1
        %v2193 = vmax.f32 %v2191, %v2192
        %v2194 = vmax.f32 %v2132, %v2133
        %v2195 = vrot.slane %v2194, 4
        %v2196 = vmax.f32 %v2194, %v2195
        %v2197 = vrot.slane %v2196, 2
        %v2198 = vmax.f32 %v2196, %v2197
        %v2199 = vrot.slane %v2198, 1
        %v2200 = vmax.f32 %v2198, %v2199
        %v2201 = vmax.f32 %v2134, %v2135
        %v2202 = vrot.slane %v2201, 4
        %v2203 = vmax.f32 %v2201, %v2202
        %v2204 = vrot.slane %v2203, 2
        %v2205 = vmax.f32 %v2203, %v2204
        %v2206 = vrot.slane %v2205, 1
        %v2207 = vmax.f32 %v2205, %v2206
        %v2208 = vmax.f32 %v2136, %v2137
        %v2209 = vrot.slane %v2208, 4
        %v2210 = vmax.f32 %v2208, %v2209
        %v2211 = vrot.slane %v2210, 2
        %v2212 = vmax.f32 %v2210, %v2211
        %v2213 = vrot.slane %v2212, 1
        %v2214 = vmax.f32 %v2212, %v2213
        %v2215 = vmax.f32 %v2138, %v2139
        %v2216 = vrot.slane %v2215, 4
        %v2217 = vmax.f32 %v2215, %v2216
        %v2218 = vrot.slane %v2217, 2
        %v2219 = vmax.f32 %v2217, %v2218
        %v2220 = vrot.slane %v2219, 1
        %v2221 = vmax.f32 %v2219, %v2220
        %v2222 = vmax.f32 %v2140, %v2141
        %v2223 = vrot.slane %v2222, 4
        %v2224 = vmax.f32 %v2222, %v2223
        %v2225 = vrot.slane %v2224, 2
        %v2226 = vmax.f32 %v2224, %v2225
        %v2227 = vrot.slane %v2226, 1
        %v2228 = vmax.f32 %v2226, %v2227
        %v2229 = vmax.f32 %v2142, %v2143
        %v2230 = vrot.slane %v2229, 4
        %v2231 = vmax.f32 %v2229, %v2230
        %v2232 = vrot.slane %v2231, 2
        %v2233 = vmax.f32 %v2231, %v2232
        %v2234 = vrot.slane %v2233, 1
        %v2235 = vmax.f32 %v2233, %v2234
        %v2236 = vmax.f32 %v2144, %v2145
        %v2237 = vrot.slane %v2236, 4
        %v2238 = vmax.f32 %v2236, %v2237
        %v2239 = vrot.slane %v2238, 2
        %v2240 = vmax.f32 %v2238, %v2239
        %v2241 = vrot.slane %v2240, 1
        %v2242 = vmax.f32 %v2240, %v2241
        %v2243 = vmax.f32 %v2146, %v2147
        %v2244 = vrot.slane %v2243, 4
        %v2245 = vmax.f32 %v2243, %v2244
        %v2246 = vrot.slane %v2245, 2
        %v2247 = vmax.f32 %v2245, %v2246
        %v2248 = vrot.slane %v2247, 1
        %v2249 = vmax.f32 %v2247, %v2248
        %v2250 = vmax.f32 %v2148, %v2149
        %v2251 = vrot.slane %v2250, 4
        %v2252 = vmax.f32 %v2250, %v2251
        %v2253 = vrot.slane %v2252, 2
        %v2254 = vmax.f32 %v2252, %v2253
        %v2255 = vrot.slane %v2254, 1
        %v2256 = vmax.f32 %v2254, %v2255
        %v2257 = vmax.f32 %v2150, %v2151
        %v2258 = vrot.slane %v2257, 4
        %v2259 = vmax.f32 %v2257, %v2258
        %v2260 = vrot.slane %v2259, 2
        %v2261 = vmax.f32 %v2259, %v2260
        %v2262 = vrot.slane %v2261, 1
        %v2263 = vmax.f32 %v2261, %v2262
        %v2264 = vmax.f32 %v2120, 0.0
        %v2265 = vmax.f32 %v2121, 0.0
        %v2266 = vmax.f32 %v2122, 0.0
        %v2267 = vmax.f32 %v2123, 0.0
        %v2268 = vmax.f32 %v2124, 0.0
        %v2269 = vmax.f32 %v2125, 0.0
        %v2270 = vmax.f32 %v2126, 0.0
        %v2271 = vmax.f32 %v2127, 0.0
        %v2272 = vmax.f32 %v2128, 0.0
        %v2273 = vmax.f32 %v2129, 0.0
        %v2274 = vmax.f32 %v2130, 0.0
        %v2275 = vmax.f32 %v2131, 0.0
        %v2276 = vmax.f32 %v2132, 0.0
        %v2277 = vmax.f32 %v2133, 0.0
        %v2278 = vmax.f32 %v2134, 0.0
        %v2279 = vmax.f32 %v2135, 0.0
        %v2280 = vmax.f32 %v2136, 0.0
        %v2281 = vmax.f32 %v2137, 0.0
        %v2282 = vmax.f32 %v2138, 0.0
        %v2283 = vmax.f32 %v2139, 0.0
        %v2284 = vmax.f32 %v2140, 0.0
        %v2285 = vmax.f32 %v2141, 0.0
        %v2286 = vmax.f32 %v2142, 0.0
        %v2287 = vmax.f32 %v2143, 0.0
        %v2288 = vmax.f32 %v2144, 0.0
        %v2289 = vmax.f32 %v2145, 0.0
        %v2290 = vmax.f32 %v2146, 0.0
        %v2291 = vmax.f32 %v2147, 0.0
        %v2292 = vmax.f32 %v2148, 0.0
        %v2293 = vmax.f32 %v2149, 0.0
        %v2294 = vmax.f32 %v2150, 0.0
        %v2295 = vmax.f32 %v2151, 0.0
        %v2296 = vmax.f32 %v2158, 0.0
        %v2297 = vmax.f32 %v2165, 0.0
        %v2298 = vmax.f32 %v2172, 0.0
        %v2299 = vmax.f32 %v2179, 0.0
        %v2300 = vmax.f32 %v2186, 0.0
        %v2301 = vmax.f32 %v2193, 0.0
        %v2302 = vmax.f32 %v2200, 0.0
        %v2303 = vmax.f32 %v2207, 0.0
        %v2304 = vmax.f32 %v2214, 0.0
        %v2305 = vmax.f32 %v2221, 0.0
        %v2306 = vmax.f32 %v2228, 0.0
        %v2307 = vmax.f32 %v2235, 0.0
        %v2308 = vmax.f32 %v2242, 0.0
        %v2309 = vmax.f32 %v2249, 0.0
        %v2310 = vmax.f32 %v2256, 0.0
        %v2311 = vmax.f32 %v2263, 0.0
        %v2312 = vld [vmem:[#allocation7] sm:$0xff]
        %v2313 = vld [vmem:[#allocation7 + $0x8] sm:$0xff]
        %v2314 = vld [vmem:[#allocation7 + $0x10] sm:$0xff]
        %v2315 = vld [vmem:[#allocation7 + $0x18] sm:$0xff]
        %v2316 = vld [vmem:[#allocation7 + $0x20] sm:$0xff]
        %v2317 = vld [vmem:[#allocation7 + $0x28] sm:$0xff]
        %v2318 = vld [vmem:[#allocation7 + $0x30] sm:$0xff]
        %v2319 = vld [vmem:[#allocation7 + $0x38] sm:$0xff]
        %v2320 = vld [vmem:[#allocation7 + $0x40] sm:$0xff]
        %v2321 = vld [vmem:[#allocation7 + $0x48] sm:$0xff]
        %v2322 = vld [vmem:[#allocation7 + $0x50] sm:$0xff]
        %v2323 = vld [vmem:[#allocation7 + $0x58] sm:$0xff]
        %v2324 = vld [vmem:[#allocation7 + $0x60] sm:$0xff]
        %v2325 = vld [vmem:[#allocation7 + $0x68] sm:$0xff]
        %v2326 = vld [vmem:[#allocation7 + $0x70] sm:$0xff]
        %v2327 = vld [vmem:[#allocation7 + $0x78] sm:$0xff]
        %2328 = vmatprep.subr.mxu0 0.0
        %2329 = vmatpush1.msra.mxu0 %v2312
        %2330 = vmatprep.subr.mxu0 0.0
        %2331 = vmatpush1.msra.mxu0 %v2313
        %2332 = vmatprep.subr.mxu0 0.0
        %2333 = vmatpush1.msra.mxu0 %v2314
        %2334 = vmatprep.subr.mxu0 0.0
        %2335 = vmatpush1.msra.mxu0 %v2315
        %2336 = vmatprep.subr.mxu0 0.0
        %2337 = vmatpush1.msra.mxu0 %v2316
        %2338 = vmatprep.subr.mxu0 0.0
        %2339 = vmatpush1.msra.mxu0 %v2317
        %2340 = vmatprep.subr.mxu0 0.0
        %2341 = vmatpush1.msra.mxu0 %v2318
        %2342 = vmatprep.subr.mxu0 0.0
        %2343 = vmatpush1.msra.mxu0 %v2319
        %2344 = vmatprep.subr.mxu0 0.0
        %2345 = vmatpush1.msra.mxu0 %v2320
        %2346 = vmatprep.subr.mxu0 0.0
        %2347 = vmatpush1.msra.mxu0 %v2321
        %2348 = vmatprep.subr.mxu0 0.0
        %2349 = vmatpush1.msra.mxu0 %v2322
        %2350 = vmatprep.subr.mxu0 0.0
        %2351 = vmatpush1.msra.mxu0 %v2323
        %2352 = vmatprep.subr.mxu0 0.0
        %2353 = vmatpush1.msra.mxu0 %v2324
        %2354 = vmatprep.subr.mxu0 0.0
        %2355 = vmatpush1.msra.mxu0 %v2325
        %2356 = vmatprep.subr.mxu0 0.0
        %2357 = vmatpush1.msra.mxu0 %v2326
        %2358 = vmatprep.subr.mxu0 0.0
        %2359 = vmatpush1.msra.mxu0 %v2327
        %2360 = vmatprep.subr.mxu0 0.0
        %2361 = vmatpush1.msra.mxu0 0.0
        %2362 = vmatprep.subr.mxu0 0.0
        %2363 = vmatpush1.msra.mxu0 0.0
        %2364 = vmatprep.subr.mxu0 0.0
        %2365 = vmatpush1.msra.mxu0 0.0
        %2366 = vmatprep.subr.mxu0 0.0
        %2367 = vmatpush1.msra.mxu0 0.0
        %2368 = vmatprep.subr.mxu0 0.0
        %2369 = vmatpush1.msra.mxu0 0.0
        %2370 = vmatprep.subr.mxu0 0.0
        %2371 = vmatpush1.msra.mxu0 0.0
        %2372 = vmatprep.subr.mxu0 0.0
        %2373 = vmatpush1.msra.mxu0 0.0
        %2374 = vmatprep.subr.mxu0 0.0
        %2375 = vmatpush1.msra.mxu0 0.0
        %2376 = vmatprep.subr.mxu0 0.0
        %2377 = vmatpush1.msra.mxu0 0.0
        %2378 = vmatprep.subr.mxu0 0.0
        %2379 = vmatpush1.msra.mxu0 0.0
        %2380 = vmatprep.subr.mxu0 0.0
        %2381 = vmatpush1.msra.mxu0 0.0
        %2382 = vmatprep.subr.mxu0 0.0
        %2383 = vmatpush1.msra.mxu0 0.0
        %2384 = vmatprep.subr.mxu0 0.0
        %2385 = vmatpush1.msra.mxu0 0.0
        %2386 = vmatprep.subr.mxu0 0.0
        %2387 = vmatpush1.msra.mxu0 0.0
        %2388 = vmatprep.subr.mxu0 0.0
        %2389 = vmatpush1.msra.mxu0 0.0
        %2390 = vmatprep.subr.mxu0 0.0
        %2391 = vmatpush1.msra.mxu0 0.0
        %2392 = vmatprep.mubr.f32.mxu0 0.0
        %2393 = vmatmul.mubr.f32.gmra.mrb[0].mxu0 %v2264
        %v2394 = vpop.f32.mrb[0].mxu0
        %v2395 = vadd.f32 0.0, %v2394
        %v2396 = vpop.f32.mrb[0].mxu0
        %2397 = vmatprep.mubr.f32.mxu0 0.0
        %2398 = vmatmul.mubr.f32.gmra.mrb[0].mxu0 %v2265
        %v2399 = vpop.f32.mrb[0].mxu0
        %v2400 = vadd.f32 0.0, %v2399
        %v2401 = vpop.f32.mrb[0].mxu0
        %2402 = vmatprep.mubr.f32.mxu0 0.0
        %2403 = vmatmul.mubr.f32.gmra.mrb[0].mxu0 %v2266
        %v2404 = vpop.f32.mrb[0].mxu0
        %v2405 = vadd.f32 0.0, %v2404
        %v2406 = vpop.f32.mrb[0].mxu0
        %2407 = vmatprep.mubr.f32.mxu0 0.0
        %2408 = vmatmul.mubr.f32.gmra.mrb[0].mxu0 %v2267
        %v2409 = vpop.f32.mrb[0].mxu0
        %v2410 = vadd.f32 0.0, %v2409
        %v2411 = vpop.f32.mrb[0].mxu0
        %2412 = vmatprep.mubr.f32.mxu0 0.0
        %2413 = vmatmul.mubr.f32.gmra.mrb[0].mxu0 %v2268
        %v2414 = vpop.f32.mrb[0].mxu0
        %v2415 = vadd.f32 0.0, %v2414
        %v2416 = vpop.f32.mrb[0].mxu0
        %2417 = vmatprep.mubr.f32.mxu0 0.0
        %2418 = vmatmul.mubr.f32.gmra.mrb[0].mxu0 %v2269
        %v2419 = vpop.f32.mrb[0].mxu0
        %v2420 = vadd.f32 0.0, %v2419
        %v2421 = vpop.f32.mrb[0].mxu0
        %2422 = vmatprep.mubr.f32.mxu0 0.0
        %2423 = vmatmul.mubr.f32.gmra.mrb[0].mxu0 %v2270
        %v2424 = vpop.f32.mrb[0].mxu0
        %v2425 = vadd.f32 0.0, %v2424
        %v2426 = vpop.f32.mrb[0].mxu0
        %2427 = vmatprep.mubr.f32.mxu0 0.0
        %2428 = vmatmul.mubr.f32.gmra.mrb[0].mxu0 %v2271
        %v2429 = vpop.f32.mrb[0].mxu0
        %v2430 = vadd.f32 0.0, %v2429
        %v2431 = vpop.f32.mrb[0].mxu0
        %2432 = vmatprep.mubr.f32.mxu0 0.0
        %2433 = vmatmul.mubr.f32.gmra.mrb[0].mxu0 %v2272
        %v2434 = vpop.f32.mrb[0].mxu0
        %v2435 = vadd.f32 0.0, %v2434
        %v2436 = vpop.f32.mrb[0].mxu0
        %2437 = vmatprep.mubr.f32.mxu0 0.0
        %2438 = vmatmul.mubr.f32.gmra.mrb[0].mxu0 %v2273
        %v2439 = vpop.f32.mrb[0].mxu0
        %v2440 = vadd.f32 0.0, %v2439
        %v2441 = vpop.f32.mrb[0].mxu0
        %2442 = vmatprep.mubr.f32.mxu0 0.0
        %2443 = vmatmul.mubr.f32.gmra.mrb[0].mxu0 %v2274
        %v2444 = vpop.f32.mrb[0].mxu0
        %v2445 = vadd.f32 0.0, %v2444
        %v2446 = vpop.f32.mrb[0].mxu0
        %2447 = vmatprep.mubr.f32.mxu0 0.0
        %2448 = vmatmul.mubr.f32.gmra.mrb[0].mxu0 %v2275
        %v2449 = vpop.f32.mrb[0].mxu0
        %v2450 = vadd.f32 0.0, %v2449
        %v2451 = vpop.f32.mrb[0].mxu0
        %2452 = vmatprep.mubr.f32.mxu0 0.0
        %2453 = vmatmul.mubr.f32.gmra.mrb[0].mxu0 %v2276
        %v2454 = vpop.f32.mrb[0].mxu0
        %v2455 = vadd.f32 0.0, %v2454
        %v2456 = vpop.f32.mrb[0].mxu0
        %2457 = vmatprep.mubr.f32.mxu0 0.0
        %2458 = vmatmul.mubr.f32.gmra.mrb[0].mxu0 %v2277
        %v2459 = vpop.f32.mrb[0].mxu0
        %v2460 = vadd.f32 0.0, %v2459
        %v2461 = vpop.f32.mrb[0].mxu0
        %2462 = vmatprep.mubr.f32.mxu0 0.0
        %2463 = vmatmul.mubr.f32.gmra.mrb[0].mxu0 %v2278
        %v2464 = vpop.f32.mrb[0].mxu0
        %v2465 = vadd.f32 0.0, %v2464
        %v2466 = vpop.f32.mrb[0].mxu0
        %2467 = vmatprep.mubr.f32.mxu0 0.0
        %2468 = vmatmul.mubr.f32.gmra.mrb[0].mxu0 %v2279
        %v2469 = vpop.f32.mrb[0].mxu0
        %v2470 = vadd.f32 0.0, %v2469
        %v2471 = vpop.f32.mrb[0].mxu0
        %2472 = vmatprep.mubr.f32.mxu0 0.0
        %2473 = vmatmul.mubr.f32.gmra.mrb[0].mxu0 %v2280
        %v2474 = vpop.f32.mrb[0].mxu0
        %v2475 = vadd.f32 0.0, %v2474
        %v2476 = vpop.f32.mrb[0].mxu0
        %2477 = vmatprep.mubr.f32.mxu0 0.0
        %2478 = vmatmul.mubr.f32.gmra.mrb[0].mxu0 %v2281
        %v2479 = vpop.f32.mrb[0].mxu0
        %v2480 = vadd.f32 0.0, %v2479
        %v2481 = vpop.f32.mrb[0].mxu0
        %2482 = vmatprep.mubr.f32.mxu0 0.0
        %2483 = vmatmul.mubr.f32.gmra.mrb[0].mxu0 %v2282
        %v2484 = vpop.f32.mrb[0].mxu0
        %v2485 = vadd.f32 0.0, %v2484
        %v2486 = vpop.f32.mrb[0].mxu0
        %2487 = vmatprep.mubr.f32.mxu0 0.0
        %2488 = vmatmul.mubr.f32.gmra.mrb[0].mxu0 %v2283
        %v2489 = vpop.f32.mrb[0].mxu0
        %v2490 = vadd.f32 0.0, %v2489
        %v2491 = vpop.f32.mrb[0].mxu0
        %2492 = vmatprep.mubr.f32.mxu0 0.0
        %2493 = vmatmul.mubr.f32.gmra.mrb[0].mxu0 %v2284
        %v2494 = vpop.f32.mrb[0].mxu0
        %v2495 = vadd.f32 0.0, %v2494
        %v2496 = vpop.f32.mrb[0].mxu0
        %2497 = vmatprep.mubr.f32.mxu0 0.0
        %2498 = vmatmul.mubr.f32.gmra.mrb[0].mxu0 %v2285
        %v2499 = vpop.f32.mrb[0].mxu0
        %v2500 = vadd.f32 0.0, %v2499
        %v2501 = vpop.f32.mrb[0].mxu0
        %2502 = vmatprep.mubr.f32.mxu0 0.0
        %2503 = vmatmul.mubr.f32.gmra.mrb[0].mxu0 %v2286
        %v2504 = vpop.f32.mrb[0].mxu0
        %v2505 = vadd.f32 0.0, %v2504
        %v2506 = vpop.f32.mrb[0].mxu0
        %2507 = vmatprep.mubr.f32.mxu0 0.0
        %2508 = vmatmul.mubr.f32.gmra.mrb[0].mxu0 %v2287
        %v2509 = vpop.f32.mrb[0].mxu0
        %v2510 = vadd.f32 0.0, %v2509
        %v2511 = vpop.f32.mrb[0].mxu0
        %2512 = vmatprep.mubr.f32.mxu0 0.0
        %2513 = vmatmul.mubr.f32.gmra.mrb[0].mxu0 %v2288
        %v2514 = vpop.f32.mrb[0].mxu0
        %v2515 = vadd.f32 0.0, %v2514
        %v2516 = vpop.f32.mrb[0].mxu0
        %2517 = vmatprep.mubr.f32.mxu0 0.0
        %2518 = vmatmul.mubr.f32.gmra.mrb[0].mxu0 %v2289
        %v2519 = vpop.f32.mrb[0].mxu0
        %v2520 = vadd.f32 0.0, %v2519
        %v2521 = vpop.f32.mrb[0].mxu0
        %2522 = vmatprep.mubr.f32.mxu0 0.0
        %2523 = vmatmul.mubr.f32.gmra.mrb[0].mxu0 %v2290
        %v2524 = vpop.f32.mrb[0].mxu0
        %v2525 = vadd.f32 0.0, %v2524
        %v2526 = vpop.f32.mrb[0].mxu0
        %2527 = vmatprep.mubr.f32.mxu0 0.0
        %2528 = vmatmul.mubr.f32.gmra.mrb[0].mxu0 %v2291
        %v2529 = vpop.f32.mrb[0].mxu0
        %v2530 = vadd.f32 0.0, %v2529
        %v2531 = vpop.f32.mrb[0].mxu0
        %2532 = vmatprep.mubr.f32.mxu0 0.0
        %2533 = vmatmul.mubr.f32.gmra.mrb[0].mxu0 %v2292
        %v2534 = vpop.f32.mrb[0].mxu0
        %v2535 = vadd.f32 0.0, %v2534
        %v2536 = vpop.f32.mrb[0].mxu0
        %2537 = vmatprep.mubr.f32.mxu0 0.0
        %2538 = vmatmul.mubr.f32.gmra.mrb[0].mxu0 %v2293
        %v2539 = vpop.f32.mrb[0].mxu0
        %v2540 = vadd.f32 0.0, %v2539
        %v2541 = vpop.f32.mrb[0].mxu0
        %2542 = vmatprep.mubr.f32.mxu0 0.0
        %2543 = vmatmul.mubr.f32.gmra.mrb[0].mxu0 %v2294
        %v2544 = vpop.f32.mrb[0].mxu0
        %v2545 = vadd.f32 0.0, %v2544
        %v2546 = vpop.f32.mrb[0].mxu0
        %2547 = vmatprep.mubr.f32.mxu0 0.0
        %2548 = vmatmul.mubr.f32.gmra.mrb[0].mxu0 %v2295
        %v2549 = vpop.f32.mrb[0].mxu0
        %v2550 = vadd.f32 0.0, %v2549
        %v2551 = vpop.f32.mrb[0].mxu0
        %2552 = vdwg.mxu0
        %v2553 = vld [vmem:[#allocation8] sm:$0xff]
        %v2554 = vld [vmem:[#allocation8 + $0x8] sm:$0xff]
        %v2555 = vld [vmem:[#allocation8 + $0x10] sm:$0xff]
        %v2556 = vld [vmem:[#allocation8 + $0x18] sm:$0xff]
        %v2557 = vld [vmem:[#allocation8 + $0x20] sm:$0xff]
        %v2558 = vld [vmem:[#allocation8 + $0x28] sm:$0xff]
        %v2559 = vld [vmem:[#allocation8 + $0x30] sm:$0xff]
        %v2560 = vld [vmem:[#allocation8 + $0x38] sm:$0xff]
        %v2561 = vld [vmem:[#allocation8 + $0x40] sm:$0xff]
        %v2562 = vld [vmem:[#allocation8 + $0x48] sm:$0xff]
        %v2563 = vld [vmem:[#allocation8 + $0x50] sm:$0xff]
        %v2564 = vld [vmem:[#allocation8 + $0x58] sm:$0xff]
        %v2565 = vld [vmem:[#allocation8 + $0x60] sm:$0xff]
        %v2566 = vld [vmem:[#allocation8 + $0x68] sm:$0xff]
        %v2567 = vld [vmem:[#allocation8 + $0x70] sm:$0xff]
        %v2568 = vld [vmem:[#allocation8 + $0x78] sm:$0xff]
        %v2585 = vsel %vm1803, %v2297, %v2296
        %v2586 = vsel %vm1805, %v2298, %v2585
        %v2587 = vsel %vm1807, %v2299, %v2586
        %v2588 = vsel %vm1809, %v2300, %v2587
        %v2589 = vsel %vm1811, %v2301, %v2588
        %v2590 = vsel %vm1813, %v2302, %v2589
        %v2591 = vsel %vm1815, %v2303, %v2590
        %v2592 = vsel %vm1803, %v2305, %v2304
        %v2593 = vsel %vm1805, %v2306, %v2592
        %v2594 = vsel %vm1807, %v2307, %v2593
        %v2595 = vsel %vm1809, %v2308, %v2594
        %v2596 = vsel %vm1811, %v2309, %v2595
        %v2597 = vsel %vm1813, %v2310, %v2596
        %v2598 = vsel %vm1815, %v2311, %v2597
        %2601 = vmatprep.subr.mxu0 0.0
        %2602 = vmatpush1.msra.mxu0 %v2553
        %2603 = vmatprep.subr.mxu0 0.0
        %2604 = vmatpush1.msra.mxu0 %v2554
        %2605 = vmatprep.subr.mxu0 0.0
        %2606 = vmatpush1.msra.mxu0 %v2555
        %2607 = vmatprep.subr.mxu0 0.0
        %2608 = vmatpush1.msra.mxu0 %v2556
        %2609 = vmatprep.subr.mxu0 0.0
        %2610 = vmatpush1.msra.mxu0 %v2557
        %2611 = vmatprep.subr.mxu0 0.0
        %2612 = vmatpush1.msra.mxu0 %v2558
        %2613 = vmatprep.subr.mxu0 0.0
        %2614 = vmatpush1.msra.mxu0 %v2559
        %2615 = vmatprep.subr.mxu0 0.0
        %2616 = vmatpush1.msra.mxu0 %v2560
        %2617 = vmatprep.subr.mxu0 0.0
        %2618 = vmatpush1.msra.mxu0 %v2561
        %2619 = vmatprep.subr.mxu0 0.0
        %2620 = vmatpush1.msra.mxu0 %v2562
        %2621 = vmatprep.subr.mxu0 0.0
        %2622 = vmatpush1.msra.mxu0 %v2563
        %2623 = vmatprep.subr.mxu0 0.0
        %2624 = vmatpush1.msra.mxu0 %v2564
        %2625 = vmatprep.subr.mxu0 0.0
        %2626 = vmatpush1.msra.mxu0 %v2565
        %2627 = vmatprep.subr.mxu0 0.0
        %2628 = vmatpush1.msra.mxu0 %v2566
        %2629 = vmatprep.subr.mxu0 0.0
        %2630 = vmatpush1.msra.mxu0 %v2567
        %2631 = vmatprep.subr.mxu0 0.0
        %2632 = vmatpush1.msra.mxu0 %v2568
        %2633 = vmatprep.subr.mxu0 0.0
        %2634 = vmatpush1.msra.mxu0 0.0
        %2635 = vmatprep.subr.mxu0 0.0
        %2636 = vmatpush1.msra.mxu0 0.0
        %2637 = vmatprep.subr.mxu0 0.0
        %2638 = vmatpush1.msra.mxu0 0.0
        %2639 = vmatprep.subr.mxu0 0.0
        %2640 = vmatpush1.msra.mxu0 0.0
        %2641 = vmatprep.subr.mxu0 0.0
        %2642 = vmatpush1.msra.mxu0 0.0
        %2643 = vmatprep.subr.mxu0 0.0
        %2644 = vmatpush1.msra.mxu0 0.0
        %2645 = vmatprep.subr.mxu0 0.0
        %2646 = vmatpush1.msra.mxu0 0.0
        %2647 = vmatprep.subr.mxu0 0.0
        %2648 = vmatpush1.msra.mxu0 0.0
        %2649 = vmatprep.subr.mxu0 0.0
        %2650 = vmatpush1.msra.mxu0 0.0
        %2651 = vmatprep.subr.mxu0 0.0
        %2652 = vmatpush1.msra.mxu0 0.0
        %2653 = vmatprep.subr.mxu0 0.0
        %2654 = vmatpush1.msra.mxu0 0.0
        %2655 = vmatprep.subr.mxu0 0.0
        %2656 = vmatpush1.msra.mxu0 0.0
        %2657 = vmatprep.subr.mxu0 0.0
        %2658 = vmatpush1.msra.mxu0 0.0
        %2659 = vmatprep.subr.mxu0 0.0
        %2660 = vmatpush1.msra.mxu0 0.0
        %2661 = vmatprep.subr.mxu0 0.0
        %2662 = vmatpush1.msra.mxu0 0.0
        %2663 = vmatprep.subr.mxu0 0.0
        %2664 = vmatpush1.msra.mxu0 0.0
        %2665 = vmatprep.mubr.f32.mxu0 0.0
        %2666 = vmatmul.mubr.f32.gmra.mrb[0].mxu0 %v2591
        %v2667 = vpop.f32.mrb[0].mxu0
        %v2668 = vadd.f32 0.0, %v2667
        %v2669 = vpop.f32.mrb[0].mxu0
        %2670 = vmatprep.mubr.f32.mxu0 0.0
        %2671 = vmatmul.mubr.f32.gmra.mrb[0].mxu0 %v2598
        %v2672 = vpop.f32.mrb[0].mxu0
        %v2673 = vadd.f32 0.0, %v2672
        %v2674 = vpop.f32.mrb[0].mxu0
        %2675 = vdwg.mxu0
        %v2678 = vcombine.high %v2668, %v2668
        %v2680 = vunpack.c.l.s4 1966171168
        %v2681 = vunpack.c.0.s8 %v2680
        %v2682 = vlaneseq
        %v2683 = vshrl.u32 %v2682, 7
        %v2684 = vsub.s32 %v2681, %v2683
        %v2685 = vrot.slane %v2668, %v2684
        %v2687 = vunpack.c.l.s4 1966171168
        %v2688 = vunpack.c.0.s8 %v2687
        %v2689 = vlaneseq
        %v2690 = vshrl.u32 %v2689, 7
        %v2691 = vsub.s32 %v2688, %v2690
        %v2692 = vrot.slane %v2678, %v2691
        %v2693 = vcombine.high %v2685, %v2685
        %v2694 = vcombine.high %v2692, %v2692
        %v2696 = vunpack.c.l.s4 1966171168
        %v2697 = vunpack.c.0.s8 %v2696
        %v2698 = vlaneseq
        %v2699 = vshrl.u32 %v2698, 7
        %v2700 = vsub.s32 %v2697, %v2699
        %v2701 = vrot.slane %v2685, %v2700
        %v2703 = vunpack.c.l.s4 1966171168
        %v2704 = vunpack.c.0.s8 %v2703
        %v2705 = vlaneseq
        %v2706 = vshrl.u32 %v2705, 7
        %v2707 = vsub.s32 %v2704, %v2706
        %v2708 = vrot.slane %v2692, %v2707
        %v2710 = vunpack.c.l.s4 1966171168
        %v2711 = vunpack.c.0.s8 %v2710
        %v2712 = vlaneseq
        %v2713 = vshrl.u32 %v2712, 7
        %v2714 = vsub.s32 %v2711, %v2713
        %v2715 = vrot.slane %v2693, %v2714
        %v2717 = vunpack.c.l.s4 1966171168
        %v2718 = vunpack.c.0.s8 %v2717
        %v2719 = vlaneseq
        %v2720 = vshrl.u32 %v2719, 7
        %v2721 = vsub.s32 %v2718, %v2720
        %v2722 = vrot.slane %v2694, %v2721
        %v2723 = vcombine.high %v2701, %v2701
        %v2724 = vcombine.high %v2708, %v2708
        %v2725 = vcombine.high %v2715, %v2715
        %v2726 = vcombine.high %v2722, %v2722
        %v2727 = vcombine.high %v2673, %v2673
        %v2729 = vunpack.c.l.s4 1966171168
        %v2730 = vunpack.c.0.s8 %v2729
        %v2731 = vlaneseq
        %v2732 = vshrl.u32 %v2731, 7
        %v2733 = vsub.s32 %v2730, %v2732
        %v2734 = vrot.slane %v2673, %v2733
        %v2736 = vunpack.c.l.s4 1966171168
        %v2737 = vunpack.c.0.s8 %v2736
        %v2738 = vlaneseq
        %v2739 = vshrl.u32 %v2738, 7
        %v2740 = vsub.s32 %v2737, %v2739
        %v2741 = vrot.slane %v2727, %v2740
        %v2742 = vcombine.high %v2734, %v2734
        %v2743 = vcombine.high %v2741, %v2741
        %v2745 = vunpack.c.l.s4 1966171168
        %v2746 = vunpack.c.0.s8 %v2745
        %v2747 = vlaneseq
        %v2748 = vshrl.u32 %v2747, 7
        %v2749 = vsub.s32 %v2746, %v2748
        %v2750 = vrot.slane %v2734, %v2749
        %v2752 = vunpack.c.l.s4 1966171168
        %v2753 = vunpack.c.0.s8 %v2752
        %v2754 = vlaneseq
        %v2755 = vshrl.u32 %v2754, 7
        %v2756 = vsub.s32 %v2753, %v2755
        %v2757 = vrot.slane %v2741, %v2756
        %v2759 = vunpack.c.l.s4 1966171168
        %v2760 = vunpack.c.0.s8 %v2759
        %v2761 = vlaneseq
        %v2762 = vshrl.u32 %v2761, 7
        %v2763 = vsub.s32 %v2760, %v2762
        %v2764 = vrot.slane %v2742, %v2763
        %v2766 = vunpack.c.l.s4 1966171168
        %v2767 = vunpack.c.0.s8 %v2766
        %v2768 = vlaneseq
        %v2769 = vshrl.u32 %v2768, 7
        %v2770 = vsub.s32 %v2767, %v2769
        %v2771 = vrot.slane %v2743, %v2770
        %v2772 = vcombine.high %v2750, %v2750
        %v2773 = vcombine.high %v2757, %v2757
        %v2774 = vcombine.high %v2764, %v2764
        %v2775 = vcombine.high %v2771, %v2771
        %v2776 = vlaneseq
        %v2777 = vshrl.u32 %v2776, 7
        %v2778 = vsub.s32 0, %v2777
        %v2779 = vrot.slane %v2701, %v2778
        %v2780 = vlaneseq
        %v2781 = vshrl.u32 %v2780, 7
        %v2782 = vsub.s32 0, %v2781
        %v2783 = vrot.slane %v2715, %v2782
        %v2784 = vlaneseq
        %v2785 = vshrl.u32 %v2784, 7
        %v2786 = vsub.s32 0, %v2785
        %v2787 = vrot.slane %v2723, %v2786
        %v2788 = vlaneseq
        %v2789 = vshrl.u32 %v2788, 7
        %v2790 = vsub.s32 0, %v2789
        %v2791 = vrot.slane %v2725, %v2790
        %v2792 = vlaneseq
        %v2793 = vshrl.u32 %v2792, 7
        %v2794 = vsub.s32 0, %v2793
        %v2795 = vrot.slane %v2708, %v2794
        %v2796 = vlaneseq
        %v2797 = vshrl.u32 %v2796, 7
        %v2798 = vsub.s32 0, %v2797
        %v2799 = vrot.slane %v2722, %v2798
        %v2800 = vlaneseq
        %v2801 = vshrl.u32 %v2800, 7
        %v2802 = vsub.s32 0, %v2801
        %v2803 = vrot.slane %v2724, %v2802
        %v2804 = vlaneseq
        %v2805 = vshrl.u32 %v2804, 7
        %v2806 = vsub.s32 0, %v2805
        %v2807 = vrot.slane %v2726, %v2806
        %v2808 = vlaneseq
        %v2809 = vshrl.u32 %v2808, 7
        %v2810 = vsub.s32 0, %v2809
        %v2811 = vrot.slane %v2750, %v2810
        %v2812 = vlaneseq
        %v2813 = vshrl.u32 %v2812, 7
        %v2814 = vsub.s32 0, %v2813
        %v2815 = vrot.slane %v2764, %v2814
        %v2816 = vlaneseq
        %v2817 = vshrl.u32 %v2816, 7
        %v2818 = vsub.s32 0, %v2817
        %v2819 = vrot.slane %v2772, %v2818
        %v2820 = vlaneseq
        %v2821 = vshrl.u32 %v2820, 7
        %v2822 = vsub.s32 0, %v2821
        %v2823 = vrot.slane %v2774, %v2822
        %v2824 = vlaneseq
        %v2825 = vshrl.u32 %v2824, 7
        %v2826 = vsub.s32 0, %v2825
        %v2827 = vrot.slane %v2757, %v2826
        %v2828 = vlaneseq
        %v2829 = vshrl.u32 %v2828, 7
        %v2830 = vsub.s32 0, %v2829
        %v2831 = vrot.slane %v2771, %v2830
        %v2832 = vlaneseq
        %v2833 = vshrl.u32 %v2832, 7
        %v2834 = vsub.s32 0, %v2833
        %v2835 = vrot.slane %v2773, %v2834
        %v2836 = vlaneseq
        %v2837 = vshrl.u32 %v2836, 7
        %v2838 = vsub.s32 0, %v2837
        %v2839 = vrot.slane %v2775, %v2838
        %v2856 = vadd.f32 %v2395, %v2779
        %v2857 = vadd.f32 %v2400, %v2779
        %v2858 = vadd.f32 %v2405, %v2783
        %v2859 = vadd.f32 %v2410, %v2783
        %v2860 = vadd.f32 %v2415, %v2787
        %v2861 = vadd.f32 %v2420, %v2787
        %v2862 = vadd.f32 %v2425, %v2791
        %v2863 = vadd.f32 %v2430, %v2791
        %v2864 = vadd.f32 %v2435, %v2795
        %v2865 = vadd.f32 %v2440, %v2795
        %v2866 = vadd.f32 %v2445, %v2799
        %v2867 = vadd.f32 %v2450, %v2799
        %v2868 = vadd.f32 %v2455, %v2803
        %v2869 = vadd.f32 %v2460, %v2803
        %v2870 = vadd.f32 %v2465, %v2807
        %v2871 = vadd.f32 %v2470, %v2807
        %v2872 = vadd.f32 %v2475, %v2811
        %v2873 = vadd.f32 %v2480, %v2811
        %v2874 = vadd.f32 %v2485, %v2815
        %v2875 = vadd.f32 %v2490, %v2815
        %v2876 = vadd.f32 %v2495, %v2819
        %v2877 = vadd.f32 %v2500, %v2819
        %v2878 = vadd.f32 %v2505, %v2823
        %v2879 = vadd.f32 %v2510, %v2823
        %v2880 = vadd.f32 %v2515, %v2827
        %v2881 = vadd.f32 %v2520, %v2827
        %v2882 = vadd.f32 %v2525, %v2831
        %v2883 = vadd.f32 %v2530, %v2831
        %v2884 = vadd.f32 %v2535, %v2835
        %v2885 = vadd.f32 %v2540, %v2835
        %v2886 = vadd.f32 %v2545, %v2839
        %v2887 = vadd.f32 %v2550, %v2839
        %v2888 = vld [vmem:[%s10] sm:$0x1]
        %v2890 = vlaneseq
        %v2891 = vshrl.u32 %v2890, 7
        %v2892 = vsub.s32 0, %v2891
        %v2893 = vrot.slane %v2888, %v2892
        %v2895 = vadd.f32 %v2856, %v2893
        %v2896 = vadd.f32 %v2857, %v2893
        %v2897 = vadd.f32 %v2858, %v2893
        %v2898 = vadd.f32 %v2859, %v2893
        %v2899 = vadd.f32 %v2860, %v2893
        %v2900 = vadd.f32 %v2861, %v2893
        %v2901 = vadd.f32 %v2862, %v2893
        %v2902 = vadd.f32 %v2863, %v2893
        %v2903 = vadd.f32 %v2864, %v2893
        %v2904 = vadd.f32 %v2865, %v2893
        %v2905 = vadd.f32 %v2866, %v2893
        %v2906 = vadd.f32 %v2867, %v2893
        %v2907 = vadd.f32 %v2868, %v2893
        %v2908 = vadd.f32 %v2869, %v2893
        %v2909 = vadd.f32 %v2870, %v2893
        %v2910 = vadd.f32 %v2871, %v2893
        %v2911 = vadd.f32 %v2872, %v2893
        %v2912 = vadd.f32 %v2873, %v2893
        %v2913 = vadd.f32 %v2874, %v2893
        %v2914 = vadd.f32 %v2875, %v2893
        %v2915 = vadd.f32 %v2876, %v2893
        %v2916 = vadd.f32 %v2877, %v2893
        %v2917 = vadd.f32 %v2878, %v2893
        %v2918 = vadd.f32 %v2879, %v2893
        %v2919 = vadd.f32 %v2880, %v2893
        %v2920 = vadd.f32 %v2881, %v2893
        %v2921 = vadd.f32 %v2882, %v2893
        %v2922 = vadd.f32 %v2883, %v2893
        %v2923 = vadd.f32 %v2884, %v2893
        %v2924 = vadd.f32 %v2885, %v2893
        %v2925 = vadd.f32 %v2886, %v2893
        %v2926 = vadd.f32 %v2887, %v2893
        %v2927 = vmax.f32 %v2895, %v2896
        %v2928 = vrot.slane %v2927, 4
        %v2929 = vmax.f32 %v2927, %v2928
        %v2930 = vrot.slane %v2929, 2
        %v2931 = vmax.f32 %v2929, %v2930
        %v2932 = vrot.slane %v2931, 1
        %v2933 = vmax.f32 %v2931, %v2932
        %v2934 = vmax.f32 %v2897, %v2898
        %v2935 = vrot.slane %v2934, 4
        %v2936 = vmax.f32 %v2934, %v2935
        %v2937 = vrot.slane %v2936, 2
        %v2938 = vmax.f32 %v2936, %v2937
        %v2939 = vrot.slane %v2938, 1
        %v2940 = vmax.f32 %v2938, %v2939
        %v2941 = vmax.f32 %v2899, %v2900
        %v2942 = vrot.slane %v2941, 4
        %v2943 = vmax.f32 %v2941, %v2942
        %v2944 = vrot.slane %v2943, 2
        %v2945 = vmax.f32 %v2943, %v2944
        %v2946 = vrot.slane %v2945, 1
        %v2947 = vmax.f32 %v2945, %v2946
        %v2948 = vmax.f32 %v2901, %v2902
        %v2949 = vrot.slane %v2948, 4
        %v2950 = vmax.f32 %v2948, %v2949
        %v2951 = vrot.slane %v2950, 2
        %v2952 = vmax.f32 %v2950, %v2951
        %v2953 = vrot.slane %v2952, 1
        %v2954 = vmax.f32 %v2952, %v2953
        %v2955 = vmax.f32 %v2903, %v2904
        %v2956 = vrot.slane %v2955, 4
        %v2957 = vmax.f32 %v2955, %v2956
        %v2958 = vrot.slane %v2957, 2
        %v2959 = vmax.f32 %v2957, %v2958
        %v2960 = vrot.slane %v2959, 1
        %v2961 = vmax.f32 %v2959, %v2960
        %v2962 = vmax.f32 %v2905, %v2906
        %v2963 = vrot.slane %v2962, 4
        %v2964 = vmax.f32 %v2962, %v2963
        %v2965 = vrot.slane %v2964, 2
        %v2966 = vmax.f32 %v2964, %v2965
        %v2967 = vrot.slane %v2966, 1
        %v2968 = vmax.f32 %v2966, %v2967
        %v2969 = vmax.f32 %v2907, %v2908
        %v2970 = vrot.slane %v2969, 4
        %v2971 = vmax.f32 %v2969, %v2970
        %v2972 = vrot.slane %v2971, 2
        %v2973 = vmax.f32 %v2971, %v2972
        %v2974 = vrot.slane %v2973, 1
        %v2975 = vmax.f32 %v2973, %v2974
        %v2976 = vmax.f32 %v2909, %v2910
        %v2977 = vrot.slane %v2976, 4
        %v2978 = vmax.f32 %v2976, %v2977
        %v2979 = vrot.slane %v2978, 2
        %v2980 = vmax.f32 %v2978, %v2979
        %v2981 = vrot.slane %v2980, 1
        %v2982 = vmax.f32 %v2980, %v2981
        %v2983 = vmax.f32 %v2911, %v2912
        %v2984 = vrot.slane %v2983, 4
        %v2985 = vmax.f32 %v2983, %v2984
        %v2986 = vrot.slane %v2985, 2
        %v2987 = vmax.f32 %v2985, %v2986
        %v2988 = vrot.slane %v2987, 1
        %v2989 = vmax.f32 %v2987, %v2988
        %v2990 = vmax.f32 %v2913, %v2914
        %v2991 = vrot.slane %v2990, 4
        %v2992 = vmax.f32 %v2990, %v2991
        %v2993 = vrot.slane %v2992, 2
        %v2994 = vmax.f32 %v2992, %v2993
        %v2995 = vrot.slane %v2994, 1
        %v2996 = vmax.f32 %v2994, %v2995
        %v2997 = vmax.f32 %v2915, %v2916
        %v2998 = vrot.slane %v2997, 4
        %v2999 = vmax.f32 %v2997, %v2998
        %v3000 = vrot.slane %v2999, 2
        %v3001 = vmax.f32 %v2999, %v3000
        %v3002 = vrot.slane %v3001, 1
        %v3003 = vmax.f32 %v3001, %v3002
        %v3004 = vmax.f32 %v2917, %v2918
        %v3005 = vrot.slane %v3004, 4
        %v3006 = vmax.f32 %v3004, %v3005
        %v3007 = vrot.slane %v3006, 2
        %v3008 = vmax.f32 %v3006, %v3007
        %v3009 = vrot.slane %v3008, 1
        %v3010 = vmax.f32 %v3008, %v3009
        %v3011 = vmax.f32 %v2919, %v2920
        %v3012 = vrot.slane %v3011, 4
        %v3013 = vmax.f32 %v3011, %v3012
        %v3014 = vrot.slane %v3013, 2
        %v3015 = vmax.f32 %v3013, %v3014
        %v3016 = vrot.slane %v3015, 1
        %v3017 = vmax.f32 %v3015, %v3016
        %v3018 = vmax.f32 %v2921, %v2922
        %v3019 = vrot.slane %v3018, 4
        %v3020 = vmax.f32 %v3018, %v3019
        %v3021 = vrot.slane %v3020, 2
        %v3022 = vmax.f32 %v3020, %v3021
        %v3023 = vrot.slane %v3022, 1
        %v3024 = vmax.f32 %v3022, %v3023
        %v3025 = vmax.f32 %v2923, %v2924
        %v3026 = vrot.slane %v3025, 4
        %v3027 = vmax.f32 %v3025, %v3026
        %v3028 = vrot.slane %v3027, 2
        %v3029 = vmax.f32 %v3027, %v3028
        %v3030 = vrot.slane %v3029, 1
        %v3031 = vmax.f32 %v3029, %v3030
        %v3032 = vmax.f32 %v2925, %v2926
        %v3033 = vrot.slane %v3032, 4
        %v3034 = vmax.f32 %v3032, %v3033
        %v3035 = vrot.slane %v3034, 2
        %v3036 = vmax.f32 %v3034, %v3035
        %v3037 = vrot.slane %v3036, 1
        %v3038 = vmax.f32 %v3036, %v3037
        %v3039 = vld [vmem:[%s11] sm:$0xff]
        %v3040 = vld [vmem:[%s11 + $0x8] sm:$0xff]
        %v3041 = vld [vmem:[%s11 + $0x10] sm:$0xff]
        %v3042 = vld [vmem:[%s11 + $0x18] sm:$0xff]
        %v3043 = vld [vmem:[%s11 + $0x20] sm:$0xff]
        %v3044 = vld [vmem:[%s11 + $0x28] sm:$0xff]
        %v3045 = vld [vmem:[%s11 + $0x30] sm:$0xff]
        %v3046 = vld [vmem:[%s11 + $0x38] sm:$0xff]
        %v3047 = vld [vmem:[%s11 + $0x40] sm:$0xff]
        %v3048 = vld [vmem:[%s11 + $0x48] sm:$0xff]
        %v3049 = vld [vmem:[%s11 + $0x50] sm:$0xff]
        %v3050 = vld [vmem:[%s11 + $0x58] sm:$0xff]
        %v3051 = vld [vmem:[%s11 + $0x60] sm:$0xff]
        %v3052 = vld [vmem:[%s11 + $0x68] sm:$0xff]
        %v3053 = vld [vmem:[%s11 + $0x70] sm:$0xff]
        %v3054 = vld [vmem:[%s11 + $0x78] sm:$0xff]
        %v3055 = vld [vmem:[%s11 + $0x80] sm:$0xff]
        %v3056 = vld [vmem:[%s11 + $0x88] sm:$0xff]
        %v3057 = vld [vmem:[%s11 + $0x90] sm:$0xff]
        %v3058 = vld [vmem:[%s11 + $0x98] sm:$0xff]
        %v3059 = vld [vmem:[%s11 + $0xa0] sm:$0xff]
        %v3060 = vld [vmem:[%s11 + $0xa8] sm:$0xff]
        %v3061 = vld [vmem:[%s11 + $0xb0] sm:$0xff]
        %v3062 = vld [vmem:[%s11 + $0xb8] sm:$0xff]
        %v3063 = vld [vmem:[%s11 + $0xc0] sm:$0xff]
        %v3064 = vld [vmem:[%s11 + $0xc8] sm:$0xff]
        %v3065 = vld [vmem:[%s11 + $0xd0] sm:$0xff]
        %v3066 = vld [vmem:[%s11 + $0xd8] sm:$0xff]
        %v3067 = vld [vmem:[%s11 + $0xe0] sm:$0xff]
        %v3068 = vld [vmem:[%s11 + $0xe8] sm:$0xff]
        %v3069 = vld [vmem:[%s11 + $0xf0] sm:$0xff]
        %v3070 = vld [vmem:[%s11 + $0xf8] sm:$0xff]
        %v3071 = vld [vmem:[%s12] sm:$0x3]
        %v3073 = vlaneseq
        %v3074 = vshrl.u32 %v3073, 7
        %v3075 = vsub.s32 0, %v3074
        %v3076 = vrot.slane %v3071, %v3075
        %v3077 = vlaneseq
        %v3078 = vshrl.u32 %v3077, 7
        %v3079 = vsub.s32 1, %v3078
        %v3080 = vrot.slane %v3071, %v3079
        %v3099 = vsel %vm1803, %v2940, %v2933
        %v3100 = vsel %vm1805, %v2947, %v3099
        %v3101 = vsel %vm1807, %v2954, %v3100
        %v3102 = vsel %vm1809, %v2961, %v3101
        %v3103 = vsel %vm1811, %v2968, %v3102
        %v3104 = vsel %vm1813, %v2975, %v3103
        %v3105 = vsel %vm1815, %v2982, %v3104
        %v3106 = vsel %vm1803, %v2996, %v2989
        %v3107 = vsel %vm1805, %v3003, %v3106
        %v3108 = vsel %vm1807, %v3010, %v3107
        %v3109 = vsel %vm1809, %v3017, %v3108
        %v3110 = vsel %vm1811, %v3024, %v3109
        %v3111 = vsel %vm1813, %v3031, %v3110
        %v3112 = vsel %vm1815, %v3038, %v3111
        %3115 = vmatprep.subr.mxu0 %v3040
        %3116 = vmatpush1.msra.mxu0 %v3039
        %3117 = vmatprep.subr.mxu0 %v3042
        %3118 = vmatpush1.msra.mxu0 %v3041
        %3119 = vmatprep.subr.mxu0 %v3044
        %3120 = vmatpush1.msra.mxu0 %v3043
        %3121 = vmatprep.subr.mxu0 %v3046
        %3122 = vmatpush1.msra.mxu0 %v3045
        %3123 = vmatprep.subr.mxu0 %v3048
        %3124 = vmatpush1.msra.mxu0 %v3047
        %3125 = vmatprep.subr.mxu0 %v3050
        %3126 = vmatpush1.msra.mxu0 %v3049
        %3127 = vmatprep.subr.mxu0 %v3052
        %3128 = vmatpush1.msra.mxu0 %v3051
        %3129 = vmatprep.subr.mxu0 %v3054
        %3130 = vmatpush1.msra.mxu0 %v3053
        %3131 = vmatprep.subr.mxu0 %v3056
        %3132 = vmatpush1.msra.mxu0 %v3055
        %3133 = vmatprep.subr.mxu0 %v3058
        %3134 = vmatpush1.msra.mxu0 %v3057
        %3135 = vmatprep.subr.mxu0 %v3060
        %3136 = vmatpush1.msra.mxu0 %v3059
        %3137 = vmatprep.subr.mxu0 %v3062
        %3138 = vmatpush1.msra.mxu0 %v3061
        %3139 = vmatprep.subr.mxu0 %v3064
        %3140 = vmatpush1.msra.mxu0 %v3063
        %3141 = vmatprep.subr.mxu0 %v3066
        %3142 = vmatpush1.msra.mxu0 %v3065
        %3143 = vmatprep.subr.mxu0 %v3068
        %3144 = vmatpush1.msra.mxu0 %v3067
        %3145 = vmatprep.subr.mxu0 %v3070
        %3146 = vmatpush1.msra.mxu0 %v3069
        %3147 = vmatprep.subr.mxu0 0.0
        %3148 = vmatpush1.msra.mxu0 0.0
        %3149 = vmatprep.subr.mxu0 0.0
        %3150 = vmatpush1.msra.mxu0 0.0
        %3151 = vmatprep.subr.mxu0 0.0
        %3152 = vmatpush1.msra.mxu0 0.0
        %3153 = vmatprep.subr.mxu0 0.0
        %3154 = vmatpush1.msra.mxu0 0.0
        %3155 = vmatprep.subr.mxu0 0.0
        %3156 = vmatpush1.msra.mxu0 0.0
        %3157 = vmatprep.subr.mxu0 0.0
        %3158 = vmatpush1.msra.mxu0 0.0
        %3159 = vmatprep.subr.mxu0 0.0
        %3160 = vmatpush1.msra.mxu0 0.0
        %3161 = vmatprep.subr.mxu0 0.0
        %3162 = vmatpush1.msra.mxu0 0.0
        %3163 = vmatprep.subr.mxu0 0.0
        %3164 = vmatpush1.msra.mxu0 0.0
        %3165 = vmatprep.subr.mxu0 0.0
        %3166 = vmatpush1.msra.mxu0 0.0
        %3167 = vmatprep.subr.mxu0 0.0
        %3168 = vmatpush1.msra.mxu0 0.0
        %3169 = vmatprep.subr.mxu0 0.0
        %3170 = vmatpush1.msra.mxu0 0.0
        %3171 = vmatprep.subr.mxu0 0.0
        %3172 = vmatpush1.msra.mxu0 0.0
        %3173 = vmatprep.subr.mxu0 0.0
        %3174 = vmatpush1.msra.mxu0 0.0
        %3175 = vmatprep.subr.mxu0 0.0
        %3176 = vmatpush1.msra.mxu0 0.0
        %3177 = vmatprep.subr.mxu0 0.0
        %3178 = vmatpush1.msra.mxu0 0.0
        %3179 = vmatprep.mubr.f32.mxu0 0.0
        %3180 = vmatmul.mubr.f32.gmra.mrb[0].mxu0 %v3105
        %v3181 = vpop.f32.mrb[0].mxu0
        %v3182 = vadd.f32 %v3076, %v3181
        %v3183 = vpop.f32.mrb[0].mxu0
        %v3184 = vadd.f32 %v3080, %v3183
        %3185 = vmatprep.mubr.f32.mxu0 0.0
        %3186 = vmatmul.mubr.f32.gmra.mrb[0].mxu0 %v3112
        %v3187 = vpop.f32.mrb[0].mxu0
        %v3188 = vadd.f32 %v3076, %v3187
        %v3189 = vpop.f32.mrb[0].mxu0
        %v3190 = vadd.f32 %v3080, %v3189
        %3191 = vdwg.mxu0
        %3192 = vst [vmem:[%s507] sm:$0xff] %v3182
        %3193 = vst [vmem:[%s507 + $0x8] sm:$0xff] %v3184
        %3194 = vst [vmem:[%s507 + $0x10] sm:$0xff] %v3188
        %3195 = vst [vmem:[%s507 + $0x18] sm:$0xff] %v3190
        %s3196 = sand.u32 %s321, 1
        %s3197 = scalar_lea.sflag [#allocation4], %s3196
        %s3198 = sand.u32 %s321, 1
        %s3199 = smul.addr %s3198, 32
        %s3200 = scalar_lea.vmem [#allocation10], %s3199
        // Predicated region
        $region89: #{tpu_custom_call.1} parent=71 // pred_check
          %p3201 = pneg %p331
        $region90: #{tpu_custom_call.1} parent=71 // pred_check_branch
          %3203 = sbr.rel (%p3201) target = $region92
        $region91: #{tpu_custom_call.1} parent=71 // pred_region
          %s3204 = smul.u32 2, %s30
          %s3206 = ssub.s32 512, 512
          %3207 = vsyncadd %s3197, %s3206
          %s3208 = smul.addr %s3204, 2
          %s3209 = smul.addr %s3208, 128
          %s3210 = scalar_lea.hbm %s13, %s3209
          %s3211 = sshll.u32 %s3200, 4
          %s3212 = int_to_ptr.vmem [resolvable:$true] %s3211
          %3217 = dma.vmem_to_hbm [thread:$0]  %s3212, 512, %s3210, %s3197, 256, 256, 16
        $region92: #{tpu_custom_call.1} parent=71 // pred_fallthru
          _
      $region72: #{tpu_custom_call.1} parent=5 // pred_fallthru
        _
      %p3218 = scmp.le.s32.totalorder 2, %s25
      // Predicated region
      $region93: #{tpu_custom_call.1} parent=5 // pred_check
        %p3219 = pneg %p3218
      $region94: #{tpu_custom_call.1} parent=5 // pred_check_branch
        %3221 = sbr.rel (%p3219) target = $region96
      $region95: #{tpu_custom_call.1} parent=5 // pred_region
        %s3222 = ssub.s32 %s25, 2
        // Predicated region
        $region97: #{tpu_custom_call.1} parent=95 // pred_check
          %p3223 = pneg %p337
        $region98: #{tpu_custom_call.1} parent=95 // pred_check_branch
          %3225 = sbr.rel (%p3223) target = $region100
        $region99: #{tpu_custom_call.1} parent=95 // pred_region
          %s3226 = sand.u32 %s322, 1
          %s3227 = scalar_lea.sflag [#allocation4], %s3226
          %s3228 = sand.u32 %s322, 1
          %s3229 = smul.addr %s3228, 32
          %s3230 = scalar_lea.vmem [#allocation10], %s3229
          %3231 = dma.done %s3227, 512
        $region100: #{tpu_custom_call.1} parent=95 // pred_fallthru
          _
      $region96: #{tpu_custom_call.1} parent=5 // pred_fallthru
        _
    $region6: #{tpu_custom_call.1} parent=1 // loop_footer
      %s29 = sadd.s32 1, %s25
    $region7: #{tpu_custom_call.1} parent=1 // loop_footer_branch
      %24 = sbr.rel target = $region3
    $region8: #{tpu_custom_call.1} parent=1 // loop_exit
      _
    %3232 = vsyncpa [#allocation3], 1
    %s3233 = scalar_lea.sflag [#allocation3], 1
    %3234 = vsyncpa %s3233, 1
    %3235 = vsyncpa [#allocation6], 1
    %3236 = vsyncpa [#allocation9], 1
    %3237 = vsyncpa [#allocation4], 1
    %s3238 = scalar_lea.sflag [#allocation4], 1
    %3239 = vsyncpa %s3238, 1

</llo_original>
